<compile_context>
chip_gen: v5e
topology: v5e:2x2
jax: 0.10.0
libtpu: 0.0.40
codegen_flags: <defaults>
</compile_context>

<pallas_src>
import functools
import math

import jax
import jax.numpy as jnp
from jax import lax
from jax.experimental import pallas as pl
from jax.experimental.pallas import tpu as pltpu


# ----------------------------- in-kernel helpers -----------------------------
def _l2_normalize(f, eps=1e-9):
    # matches calculate_l1_norm (despite its name it is L2 normalization)
    nrm = jnp.sqrt(jnp.sum(f * f, axis=-1, keepdims=True))
    return f / (nrm + eps)


def _softmax_axis0(s):
    s = s - jnp.max(s, axis=0, keepdims=True)
    e = jnp.exp(s)
    return e / jnp.sum(e, axis=0, keepdims=True)


def _softmax_last(s):
    s = s - jnp.max(s, axis=-1, keepdims=True)
    e = jnp.exp(s)
    return e / jnp.sum(e, axis=-1, keepdims=True)


def _prediction(feat, norms_feat, norm_ac, norm_fg, scale):
    """PredictionModule for one batch element. norm_ac/norm_fg are pre-normalized."""
    frm_scr = jnp.einsum('td,cd->tc', norms_feat, norm_ac,
                         preferred_element_type=jnp.float32) * scale          # (t, C1)
    frm_fb = jnp.sum(norms_feat * norm_fg, axis=-1, keepdims=True) * scale    # (t, 1)

    att = jax.nn.sigmoid(frm_fb)                     # == weight_fg_scr_base  # (t, 1)
    w_scr = jax.nn.sigmoid(frm_scr)
    w_scr = w_scr / (jnp.sum(w_scr, axis=0, keepdims=True) + 1e-5)            # norm over t
    w_fg = att / (jnp.sum(att, axis=0, keepdims=True) + 1e-5)

    ca_vid = jnp.sum(feat * w_fg, axis=0, keepdims=True)                      # (1, d)
    cw_vid = jnp.einsum('tc,td->cd', w_scr, feat,
                        preferred_element_type=jnp.float32)                   # (C1, d)

    n_ca = _l2_normalize(ca_vid)
    n_cw = _l2_normalize(cw_vid)
    ca_scr = jnp.einsum('kd,cd->kc', n_ca, norm_ac,
                        preferred_element_type=jnp.float32) * scale           # (1, C1)
    cw_scr = jnp.sum(n_cw * norm_ac, axis=-1, keepdims=True) * scale          # (C1, 1)

    ca_pred = _softmax_last(ca_scr)                                           # (1, C1)
    cw_pred = _softmax_axis0(cw_scr)                                          # (C1, 1)
    return ca_pred, cw_pred, att, frm_scr


# ------------------------ kernel 1: embed + EM + RW + pred -------------------
def _wstal_main_kernel(x_ref, wT_ref, b_ref, mu_ref, nac_ref, nfg_ref,
                       xemb_ref, mu_out_ref, mupred_ref, imb_ref, y2x_ref,
                       oca_ref, ocw_ref, oatt_ref, ofrm_ref,
                       *, em_iter, w, scale):
    norm_ac = nac_ref[...]                          # (C1, d)  pre-normalized
    norm_fg = nfg_ref[...]                          # (1, d)   pre-normalized

    # --- feature embedding: Linear (pre-transposed weight) + ReLU ---
    x = jnp.maximum(
        jnp.dot(x_ref[0], wT_ref[...], preferred_element_type=jnp.float32) + b_ref[...],
        0.0)                                        # (t, d)
    xemb_ref[0] = x
    # TODO(synk): nn.Dropout treated as identity (eval-mode inference semantics).

    norm_x = _l2_normalize(x)                       # reused by EM, RW and prediction

    # --- EM iterations (small static unroll) ---
    mu = mu_ref[...]                                # (k, d)
    for _ in range(em_iter):
        norm_mu = _l2_normalize(mu)
        z = _softmax_axis0(
            jnp.einsum('kd,td->kt', norm_mu, norm_x,
                       preferred_element_type=jnp.float32) * 5.0)             # (k, t)
        norm_z = z / (jnp.sum(z, axis=-1, keepdims=True) + 1e-9)
        mu = jnp.einsum('kt,td->kd', norm_z, x,
                        preferred_element_type=jnp.float32)
    mu_out_ref[0] = mu
    # note: the EM relative-error tensor is never used by forward() outputs -> skipped.

    # --- random-walk affinity / y2x (mu stays resident) ---
    y_norm = _l2_normalize(mu)
    z = _softmax_axis0(
        jnp.einsum('kd,td->kt', y_norm, norm_x,
                   preferred_element_type=jnp.float32) * 5.0)                 # (k, t)
    norm_z = z / (jnp.sum(z, axis=-1, keepdims=True) + 1e-9)
    aff = jnp.einsum('kt,ks->ts', z, norm_z,
                     preferred_element_type=jnp.float32)                      # (t, t)
    t = aff.shape[0]
    rows = lax.broadcasted_iota(jnp.int32, (t, t), 0)
    cols = lax.broadcasted_iota(jnp.int32, (t, t), 1)
    eye = jnp.where(rows == cols, 1.0, 0.0)
    imb_ref[0] = eye - (w * w) * aff                # I - w^2 * affinity (fed to inverse)
    # (1 - w) refine scale folded in here so the refine kernel is a single matmul.
    y2x_ref[0] = (1.0 - w) * (w * jnp.einsum('kt,kd->td', z, mu,
                                             preferred_element_type=jnp.float32) + x)

    # --- mu -> class scores softmax (reuses y_norm, resident norm_ac) ---
    mupred_ref[0] = _softmax_last(
        jnp.einsum('kd,cd->kc', y_norm, norm_ac,
                   preferred_element_type=jnp.float32) * scale)               # (k, C1)

    # --- PredictionModule on x_emb (reuses norm_x) ---
    ca, cw, att, frm = _prediction(x, norm_x, norm_ac, norm_fg, scale)
    oca_ref[0] = ca
    ocw_ref[0] = cw
    oatt_ref[0] = att
    ofrm_ref[0] = frm


# ------------------- kernel 2: refine matmul + prediction --------------------
def _wstal_refine_kernel(inv_ref, y2x_ref, nac_ref, nfg_ref,
                         rx_ref, mca_ref, mcw_ref, matt_ref, mfrm_ref,
                         *, scale):
    # y2x already carries the (1 - w) scale.
    rx = jnp.dot(inv_ref[0], y2x_ref[0], preferred_element_type=jnp.float32)  # (t, d)
    rx_ref[0] = rx
    ca, cw, att, frm = _prediction(rx, _l2_normalize(rx),
                                   nac_ref[...], nfg_ref[...], scale)
    mca_ref[0] = ca
    mcw_ref[0] = cw
    matt_ref[0] = att
    mfrm_ref[0] = frm


# --------------------------------- forward ----------------------------------
def wstal_forward(params, x, *, w, scale_factor, em_iter):
    n, t, n_in = x.shape
    fe_w = params['fe_w']                            # (n_out, n_in) PyTorch convention
    d = fe_w.shape[0]
    ac = params['ac_center']                         # (C1, d)
    fg = params['fg_center']                         # (1, d)
    mu_p = params['mu']                              # (k, d)
    c1 = ac.shape[0]
    k = mu_p.shape[0]

    # ---- hoisted, once-per-call parameter preprocessing (not per grid step) ----
    fe_wT = jnp.transpose(fe_w)                                      # (n_in, d)
    fe_b = params['fe_b'].reshape(1, d)
    norm_ac = ac / (jnp.linalg.norm(ac, axis=-1, keepdims=True) + 1e-9)
    norm_fg = fg / (jnp.linalg.norm(fg, axis=-1, keepdims=True) + 1e-9)

    const2d = lambda i: (0, 0)
    per_n3d = lambda i: (i, 0, 0)
    mosaic = pltpu.CompilerParams(dimension_semantics=("parallel",))

    # ---------------- kernel 1: embed + EM + RW affinity + pred(x) ----------------
    main_kernel = functools.partial(_wstal_main_kernel,
                                    em_iter=em_iter, w=w, scale=scale_factor)
    (x_emb, mu, mu_pred, imb, y2x,
     o_ca, o_cw, o_att, o_frm) = pl.pallas_call(
        main_kernel,
        out_shape=(
            jax.ShapeDtypeStruct((n, t, d), jnp.float32),
            jax.ShapeDtypeStruct((n, k, d), jnp.float32),
            jax.ShapeDtypeStruct((n, k, c1), jnp.float32),
            jax.ShapeDtypeStruct((n, t, t), jnp.float32),
            jax.ShapeDtypeStruct((n, t, d), jnp.float32),
            jax.ShapeDtypeStruct((n, 1, c1), jnp.float32),
            jax.ShapeDtypeStruct((n, c1, 1), jnp.float32),
            jax.ShapeDtypeStruct((n, t, 1), jnp.float32),
            jax.ShapeDtypeStruct((n, t, c1), jnp.float32),
        ),
        grid=(n,),
        in_specs=[
            pl.BlockSpec((1, t, n_in), per_n3d),
            pl.BlockSpec((n_in, d), const2d),
            pl.BlockSpec((1, d), const2d),
            pl.BlockSpec((k, d), const2d),
            pl.BlockSpec((c1, d), const2d),
            pl.BlockSpec((1, d), const2d),
        ],
        out_specs=(
            pl.BlockSpec((1, t, d), per_n3d),
            pl.BlockSpec((1, k, d), per_n3d),
            pl.BlockSpec((1, k, c1), per_n3d),
            pl.BlockSpec((1, t, t), per_n3d),
            pl.BlockSpec((1, t, d), per_n3d),
            pl.BlockSpec((1, 1, c1), per_n3d),
            pl.BlockSpec((1, c1, 1), per_n3d),
            pl.BlockSpec((1, t, 1), per_n3d),
            pl.BlockSpec((1, t, c1), per_n3d),
        ),
        compiler_params=mosaic,
    )(x, fe_wT, fe_b, mu_p, norm_ac, norm_fg)

    # TODO(synk): batched (t x t) matrix inverse has no clean Pallas equivalent; done in XLA.
    mat_inv = jnp.linalg.inv(imb)

    # ---------------- kernel 2: refine matmul + pred(reallocated_x) ----------------
    refine_kernel = functools.partial(_wstal_refine_kernel, scale=scale_factor)
    (reallocated_x, m_ca, m_cw, m_att, m_frm) = pl.pallas_call(
        refine_kernel,
        out_shape=(
            jax.ShapeDtypeStruct((n, t, d), jnp.float32),
            jax.ShapeDtypeStruct((n, 1, c1), jnp.float32),
            jax.ShapeDtypeStruct((n, c1, 1), jnp.float32),
            jax.ShapeDtypeStruct((n, t, 1), jnp.float32),
            jax.ShapeDtypeStruct((n, t, c1), jnp.float32),
        ),
        grid=(n,),
        in_specs=[
            pl.BlockSpec((1, t, t), per_n3d),
            pl.BlockSpec((1, t, d), per_n3d),
            pl.BlockSpec((c1, d), const2d),
            pl.BlockSpec((1, d), const2d),
        ],
        out_specs=(
            pl.BlockSpec((1, t, d), per_n3d),
            pl.BlockSpec((1, 1, c1), per_n3d),
            pl.BlockSpec((1, c1, 1), per_n3d),
            pl.BlockSpec((1, t, 1), per_n3d),
            pl.BlockSpec((1, t, c1), per_n3d),
        ),
        compiler_params=mosaic,
    )(mat_inv, y2x, norm_ac, norm_fg)

    reallocated_x_drop = reallocated_x  # dropout = identity (eval mode)

    return ([o_ca[:, 0, :], o_cw[:, :, 0], o_att[:, :, 0], o_frm],
            [m_ca[:, 0, :], m_cw[:, :, 0], m_att[:, :, 0], m_frm],
            [x_emb, mu, mu_pred, reallocated_x, reallocated_x_drop])


# --------------------------- pure-JAX reference ------------------------------
def _ref_forward(params, x, *, w, scale_factor, em_iter):
    hp = lax.Precision.HIGHEST

    def l2n(f):
        return f / (jnp.linalg.norm(f, axis=-1, keepdims=True) + 1e-9)

    n, t, _ = x.shape
    xe = jnp.maximum(
        jnp.einsum('nti,oi->nto', x, params['fe_w'], precision=hp) + params['fe_b'], 0.0)
    mu = jnp.broadcast_to(params['mu'][None], (n,) + params['mu'].shape)
    nx = l2n(xe)
    for _ in range(em_iter):
        nmu = l2n(mu)
        z = jax.nn.softmax(jnp.einsum('nkd,ntd->nkt', nmu, nx, precision=hp) * 5.0, axis=1)
        nz = z / (jnp.sum(z, -1, keepdims=True) + 1e-9)
        mu = jnp.einsum('nkt,ntd->nkd', nz, xe, precision=hp)

    ynorm = l2n(mu)
    z = jax.nn.softmax(jnp.einsum('nkd,ntd->nkt', ynorm, nx, precision=hp) * 5.0, axis=1)
    nz = z / (jnp.sum(z, -1, keepdims=True) + 1e-9)
    aff = jnp.einsum('nkt,nks->nts', z, nz, precision=hp)
    eye = jnp.eye(t, dtype=jnp.float32)
    minv = jnp.linalg.inv(eye[None] - (w ** 2) * aff)
    y2x = w * jnp.einsum('nkt,nkd->ntd', z, mu, precision=hp) + xe
    rx = (1.0 - w) * jnp.einsum('ntk,nkd->ntd', minv, y2x, precision=hp)

    nac = l2n(params['ac_center'])
    nfg = l2n(params['fg_center'])

    def pred(feat):
        nf = l2n(feat)
        frm = jnp.einsum('ntd,cd->ntc', nf, nac, precision=hp) * scale_factor
        fb = jnp.einsum('ntd,kd->ntk', nf, nfg, precision=hp)[..., 0] * scale_factor
        att = jax.nn.sigmoid(fb)
        ws = jax.nn.sigmoid(frm)
        wf = jax.nn.sigmoid(fb)
        ws = ws / (jnp.sum(ws, 1, keepdims=True) + 1e-5)
        wf = wf / (jnp.sum(wf, 1, keepdims=True) + 1e-5)
        cav = jnp.einsum('ntd,nt->nd', feat, wf, precision=hp)
        cwv = jnp.einsum('ntd,ntc->ncd', feat, ws, precision=hp)
        cas = jnp.einsum('nd,cd->nc', l2n(cav), nac, precision=hp) * scale_factor
        cws = jnp.einsum('ncd,cd->nc', l2n(cwv), nac, precision=hp) * scale_factor
        return (jax.nn.softmax(cas, -1), jax.nn.softmax(cws, -1), att, frm)

    o = pred(xe)
    m = pred(rx)
    mup = jax.nn.softmax(
        jnp.einsum('nkd,cd->nkc', l2n(mu), nac, precision=hp) * scale_factor, -1)
    return o, m, (xe, mu, mup, rx)


# ----------------------------------- main ------------------------------------
def _xavier_uniform(key, shape):
    fan_out, fan_in = shape
    limit = math.sqrt(6.0 / (fan_in + fan_out))
    return jax.random.uniform(key, shape, jnp.float32, -limit, limit)


if __name__ == "__main__":
    # small config consistent with the module's __init__
    n, t = 2, 8
    n_in, n_out = 32, 32
    n_mu = 8
    n_class = 4          # -> ac_center has n_class + 1 = 5 rows
    em_iter = 2
    w = 0.5
    scale_factor = 20.0

    key = jax.random.PRNGKey(0)
    k_mu, k_ac, k_fe, k_x = jax.random.split(key, 4)

    ac_center = _xavier_uniform(k_ac, (n_class + 1, n_out))
    params = {
        'mu': _xavier_uniform(k_mu, (n_mu, n_out)),
        'ac_center': ac_center,
        'fg_center': -1.0 * ac_center[-1:, :],          # (1, n_out)
        'fe_w': _xavier_uniform(k_fe, (n_out, n_in)),   # Linear weight (out, in)
        'fe_b': jnp.zeros((n_out,), jnp.float32),       # bias filled with 0
    }

    x = jax.random.normal(k_x, (n, t, n_in), jnp.float32)

    fwd = jax.jit(functools.partial(wstal_forward, w=w,
                                    scale_factor=scale_factor, em_iter=em_iter))
    outs = fwd(params, x)
    jax.block_until_ready(jax.tree_util.tree_leaves(outs))

    (o_out, m_out, aux) = outs
    o_ca, o_cw, o_att, o_frm = o_out
    m_ca, m_cw, m_att, m_frm = m_out
    x_emb, mu, mu_pred, reallocated_x, _ = aux

    # quick sanity: softmax outputs sum to 1
    assert o_ca.shape == (n, n_class + 1)
    assert jnp.allclose(jnp.sum(o_ca, -1), 1.0, atol=1e-4)
    assert jnp.allclose(jnp.sum(m_ca, -1), 1.0, atol=1e-4)
    assert jnp.allclose(jnp.sum(mu_pred, -1), 1.0, atol=1e-4)

    # numerical check against a pure-JAX reference of the PyTorch module
    ro, rm, raux = _ref_forward(params, x, w=w, scale_factor=scale_factor, em_iter=em_iter)

    def _close(a, b, name):
        assert jnp.allclose(a, b, rtol=5e-3, atol=5e-3), f"mismatch: {name}"

    _close(x_emb, raux[0], "x_emb")
    _close(mu, raux[1], "mu")
    _close(mu_pred, raux[2], "mu_pred")
    _close(reallocated_x, raux[3], "reallocated_x")
    _close(o_ca, ro[0], "o_ca"); _close(o_cw, ro[1], "o_cw")
    _close(o_att, ro[2], "o_att"); _close(o_frm, ro[3], "o_frm")
    _close(m_ca, rm[0], "m_ca"); _close(m_cw, rm[1], "m_cw")
    _close(m_att, rm[2], "m_att"); _close(m_frm, rm[3], "m_frm")

    print("KERNEL_OK")
</pallas_src>

<mosaic_0001>
module attributes {stable_mosaic.version = 11 : i64} {
  func.func @_wstal_main_kernel(%arg0: i32, %arg1: memref<1x8x32xf32, #tpu.memory_space<vmem>>, %arg2: memref<32x32xf32, #tpu.memory_space<vmem>>, %arg3: memref<1x32xf32, #tpu.memory_space<vmem>>, %arg4: memref<8x32xf32, #tpu.memory_space<vmem>>, %arg5: memref<5x32xf32, #tpu.memory_space<vmem>>, %arg6: memref<1x32xf32, #tpu.memory_space<vmem>>, %arg7: memref<1x8x32xf32, #tpu.memory_space<vmem>>, %arg8: memref<1x8x32xf32, #tpu.memory_space<vmem>>, %arg9: memref<1x8x5xf32, #tpu.memory_space<vmem>>, %arg10: memref<1x8x8xf32, #tpu.memory_space<vmem>>, %arg11: memref<1x8x32xf32, #tpu.memory_space<vmem>>, %arg12: memref<1x1x5xf32, #tpu.memory_space<vmem>>, %arg13: memref<1x5x1xf32, #tpu.memory_space<vmem>>, %arg14: memref<1x8x1xf32, #tpu.memory_space<vmem>>, %arg15: memref<1x8x5xf32, #tpu.memory_space<vmem>>) attributes {dimension_semantics = [#tpu.dimension_semantics<parallel>], iteration_bounds = array<i64: 2>, scalar_prefetch = 0 : i64, scratch_operands = 0 : i64, tpu.core_type = #tpu.core_type<tc>, window_params = [{transform_indices = @transform_0, window_bounds = array<i64: 1, 8, 32>}, {pipeline_mode = #tpu.pipeline_mode<synchronous>, transform_indices = @transform_1, window_bounds = array<i64: 32, 32>}, {pipeline_mode = #tpu.pipeline_mode<synchronous>, transform_indices = @transform_2, window_bounds = array<i64: 1, 32>}, {pipeline_mode = #tpu.pipeline_mode<synchronous>, transform_indices = @transform_3, window_bounds = array<i64: 8, 32>}, {pipeline_mode = #tpu.pipeline_mode<synchronous>, transform_indices = @transform_4, window_bounds = array<i64: 5, 32>}, {pipeline_mode = #tpu.pipeline_mode<synchronous>, transform_indices = @transform_5, window_bounds = array<i64: 1, 32>}, {transform_indices = @transform_6, window_bounds = array<i64: 1, 8, 32>}, {transform_indices = @transform_7, window_bounds = array<i64: 1, 8, 32>}, {transform_indices = @transform_8, window_bounds = array<i64: 1, 8, 5>}, {transform_indices = @transform_9, window_bounds = array<i64: 1, 8, 8>}, {transform_indices = @transform_10, window_bounds = array<i64: 1, 8, 32>}, {transform_indices = @transform_11, window_bounds = array<i64: 1, 1, 5>}, {transform_indices = @transform_12, window_bounds = array<i64: 1, 5, 1>}, {transform_indices = @transform_13, window_bounds = array<i64: 1, 8, 1>}, {transform_indices = @transform_14, window_bounds = array<i64: 1, 8, 5>}]} {
    %c0 = arith.constant 0 : index
    %c0_0 = arith.constant 0 : index
    %0 = vector.load %arg5[%c0, %c0_0] : memref<5x32xf32, #tpu.memory_space<vmem>>, vector<5x32xf32>
    %c0_1 = arith.constant 0 : index
    %c0_2 = arith.constant 0 : index
    %1 = vector.load %arg6[%c0_1, %c0_2] : memref<1x32xf32, #tpu.memory_space<vmem>>, vector<1x32xf32>
    %c0_3 = arith.constant 0 : index
    %c0_4 = arith.constant 0 : index
    %c0_5 = arith.constant 0 : index
    %2 = vector.load %arg1[%c0_3, %c0_4, %c0_5] : memref<1x8x32xf32, #tpu.memory_space<vmem>>, vector<1x8x32xf32>
    %3 = vector.shape_cast %2 : vector<1x8x32xf32> to vector<8x32xf32>
    %c0_6 = arith.constant 0 : index
    %c0_7 = arith.constant 0 : index
    %4 = vector.load %arg2[%c0_6, %c0_7] : memref<32x32xf32, #tpu.memory_space<vmem>>, vector<32x32xf32>
    %cst = arith.constant dense<0.000000e+00> : vector<8x32xf32>
    %5 = tpu.matmul %3, %4, %cst {dimension_numbers = #tpu.dot_dimension_numbers<[1], [0], [0], [1], [0, 0, 1, 1], [], []>} : vector<8x32xf32>, vector<32x32xf32>, vector<8x32xf32> -> vector<8x32xf32>
    %c0_8 = arith.constant 0 : index
    %c0_9 = arith.constant 0 : index
    %6 = vector.load %arg3[%c0_8, %c0_9] : memref<1x32xf32, #tpu.memory_space<vmem>>, vector<1x32xf32>
    %7 = vector.broadcast %6 : vector<1x32xf32> to vector<8x32xf32>
    %8 = arith.addf %5, %7 : vector<8x32xf32>
    %cst_10 = arith.constant 0.000000e+00 : f32
    %9 = vector.broadcast %cst_10 : f32 to vector<8x32xf32>
    %10 = arith.maximumf %8, %9 : vector<8x32xf32>
    %c0_11 = arith.constant 0 : index
    %c0_12 = arith.constant 0 : index
    %c0_13 = arith.constant 0 : index
    %11 = vector.load %arg7[%c0_11, %c0_12, %c0_13] : memref<1x8x32xf32, #tpu.memory_space<vmem>>, vector<1x8x32xf32>
    %12 = vector.shape_cast %11 : vector<1x8x32xf32> to vector<8x32xf32>
    %13 = vector.shape_cast %10 : vector<8x32xf32> to vector<1x8x32xf32>
    tpu.vector_store %arg7[%c0_11, %c0_12, %c0_13], %13 {strides = array<i32>} : memref<1x8x32xf32, #tpu.memory_space<vmem>>, vector<1x8x32xf32>,
    %14 = arith.mulf %10, %10 : vector<8x32xf32>
    %cst_14 = arith.constant dense<0.000000e+00> : vector<8xf32>
    %15 = vector.multi_reduction <add>, %14, %cst_14 [1] : vector<8x32xf32> to vector<8xf32>
    %16 = vector.shape_cast %15 : vector<8xf32> to vector<8x1xf32>
    %17 = math.sqrt %16 : vector<8x1xf32>
    %cst_15 = arith.constant 9.99999971E-10 : f32
    %18 = vector.broadcast %cst_15 : f32 to vector<8x1xf32>
    %19 = arith.addf %17, %18 : vector<8x1xf32>
    %20 = vector.broadcast %19 : vector<8x1xf32> to vector<8x32xf32>
    %21 = arith.divf %10, %20 : vector<8x32xf32>
    %c0_16 = arith.constant 0 : index
    %c0_17 = arith.constant 0 : index
    %22 = vector.load %arg4[%c0_16, %c0_17] : memref<8x32xf32, #tpu.memory_space<vmem>>, vector<8x32xf32>
    %23 = arith.mulf %22, %22 : vector<8x32xf32>
    %cst_18 = arith.constant dense<0.000000e+00> : vector<8xf32>
    %24 = vector.multi_reduction <add>, %23, %cst_18 [1] : vector<8x32xf32> to vector<8xf32>
    %25 = vector.shape_cast %24 : vector<8xf32> to vector<8x1xf32>
    %26 = math.sqrt %25 : vector<8x1xf32>
    %cst_19 = arith.constant 9.99999971E-10 : f32
    %27 = vector.broadcast %cst_19 : f32 to vector<8x1xf32>
    %28 = arith.addf %26, %27 : vector<8x1xf32>
    %29 = vector.broadcast %28 : vector<8x1xf32> to vector<8x32xf32>
    %30 = arith.divf %22, %29 : vector<8x32xf32>
    "tpu.trace_start"() <{level = 10 : i32, message = "kd,td->kt"}> : () -> ()
    %cst_20 = arith.constant dense<0.000000e+00> : vector<8x8xf32>
    %31 = tpu.matmul %30, %21, %cst_20 {dimension_numbers = #tpu.dot_dimension_numbers<[1], [1], [0], [0], [0, 0, 1, 0], [], []>} : vector<8x32xf32>, vector<8x32xf32>, vector<8x8xf32> -> vector<8x8xf32>
    "tpu.trace_stop"() : () -> ()
    %cst_21 = arith.constant 5.000000e+00 : f32
    %32 = vector.broadcast %cst_21 : f32 to vector<8x8xf32>
    %33 = arith.mulf %31, %32 : vector<8x8xf32>
    %cst_22 = arith.constant dense<0xFF800000> : vector<8xf32>
    %34 = vector.multi_reduction <maximumf>, %33, %cst_22 [0] : vector<8x8xf32> to vector<8xf32>
    %35 = vector.shape_cast %34 : vector<8xf32> to vector<1x8xf32>
    %36 = vector.broadcast %35 : vector<1x8xf32> to vector<8x8xf32>
    %37 = arith.subf %33, %36 : vector<8x8xf32>
    %38 = math.exp %37 : vector<8x8xf32>
    %cst_23 = arith.constant dense<0.000000e+00> : vector<8xf32>
    %39 = vector.multi_reduction <add>, %38, %cst_23 [0] : vector<8x8xf32> to vector<8xf32>
    %40 = vector.shape_cast %39 : vector<8xf32> to vector<1x8xf32>
    %41 = vector.broadcast %40 : vector<1x8xf32> to vector<8x8xf32>
    %42 = arith.divf %38, %41 : vector<8x8xf32>
    %cst_24 = arith.constant dense<0.000000e+00> : vector<8xf32>
    %43 = vector.multi_reduction <add>, %42, %cst_24 [1] : vector<8x8xf32> to vector<8xf32>
    %44 = vector.shape_cast %43 : vector<8xf32> to vector<8x1xf32>
    %cst_25 = arith.constant 9.99999971E-10 : f32
    %45 = vector.broadcast %cst_25 : f32 to vector<8x1xf32>
    %46 = arith.addf %44, %45 : vector<8x1xf32>
    %47 = vector.broadcast %46 : vector<8x1xf32> to vector<8x8xf32>
    %48 = arith.divf %42, %47 : vector<8x8xf32>
    "tpu.trace_start"() <{level = 10 : i32, message = "kt,td->kd"}> : () -> ()
    %cst_26 = arith.constant dense<0.000000e+00> : vector<8x32xf32>
    %49 = tpu.matmul %48, %10, %cst_26 {dimension_numbers = #tpu.dot_dimension_numbers<[1], [0], [0], [1], [0, 0, 1, 1], [], []>} : vector<8x8xf32>, vector<8x32xf32>, vector<8x32xf32> -> vector<8x32xf32>
    "tpu.trace_stop"() : () -> ()
    %50 = arith.mulf %49, %49 : vector<8x32xf32>
    %cst_27 = arith.constant dense<0.000000e+00> : vector<8xf32>
    %51 = vector.multi_reduction <add>, %50, %cst_27 [1] : vector<8x32xf32> to vector<8xf32>
    %52 = vector.shape_cast %51 : vector<8xf32> to vector<8x1xf32>
    %53 = math.sqrt %52 : vector<8x1xf32>
    %cst_28 = arith.constant 9.99999971E-10 : f32
    %54 = vector.broadcast %cst_28 : f32 to vector<8x1xf32>
    %55 = arith.addf %53, %54 : vector<8x1xf32>
    %56 = vector.broadcast %55 : vector<8x1xf32> to vector<8x32xf32>
    %57 = arith.divf %49, %56 : vector<8x32xf32>
    "tpu.trace_start"() <{level = 10 : i32, message = "kd,td->kt"}> : () -> ()
    %cst_29 = arith.constant dense<0.000000e+00> : vector<8x8xf32>
    %58 = tpu.matmul %57, %21, %cst_29 {dimension_numbers = #tpu.dot_dimension_numbers<[1], [1], [0], [0], [0, 0, 1, 0], [], []>} : vector<8x32xf32>, vector<8x32xf32>, vector<8x8xf32> -> vector<8x8xf32>
    "tpu.trace_stop"() : () -> ()
    %cst_30 = arith.constant 5.000000e+00 : f32
    %59 = vector.broadcast %cst_30 : f32 to vector<8x8xf32>
    %60 = arith.mulf %58, %59 : vector<8x8xf32>
    %cst_31 = arith.constant dense<0xFF800000> : vector<8xf32>
    %61 = vector.multi_reduction <maximumf>, %60, %cst_31 [0] : vector<8x8xf32> to vector<8xf32>
    %62 = vector.shape_cast %61 : vector<8xf32> to vector<1x8xf32>
    %63 = vector.broadcast %62 : vector<1x8xf32> to vector<8x8xf32>
    %64 = arith.subf %60, %63 : vector<8x8xf32>
    %65 = math.exp %64 : vector<8x8xf32>
    %cst_32 = arith.constant dense<0.000000e+00> : vector<8xf32>
    %66 = vector.multi_reduction <add>, %65, %cst_32 [0] : vector<8x8xf32> to vector<8xf32>
    %67 = vector.shape_cast %66 : vector<8xf32> to vector<1x8xf32>
    %68 = vector.broadcast %67 : vector<1x8xf32> to vector<8x8xf32>
    %69 = arith.divf %65, %68 : vector<8x8xf32>
    %cst_33 = arith.constant dense<0.000000e+00> : vector<8xf32>
    %70 = vector.multi_reduction <add>, %69, %cst_33 [1] : vector<8x8xf32> to vector<8xf32>
    %71 = vector.shape_cast %70 : vector<8xf32> to vector<8x1xf32>
    %cst_34 = arith.constant 9.99999971E-10 : f32
    %72 = vector.broadcast %cst_34 : f32 to vector<8x1xf32>
    %73 = arith.addf %71, %72 : vector<8x1xf32>
    %74 = vector.broadcast %73 : vector<8x1xf32> to vector<8x8xf32>
    %75 = arith.divf %69, %74 : vector<8x8xf32>
    "tpu.trace_start"() <{level = 10 : i32, message = "kt,td->kd"}> : () -> ()
    %cst_35 = arith.constant dense<0.000000e+00> : vector<8x32xf32>
    %76 = tpu.matmul %75, %10, %cst_35 {dimension_numbers = #tpu.dot_dimension_numbers<[1], [0], [0], [1], [0, 0, 1, 1], [], []>} : vector<8x8xf32>, vector<8x32xf32>, vector<8x32xf32> -> vector<8x32xf32>
    "tpu.trace_stop"() : () -> ()
    %c0_36 = arith.constant 0 : index
    %c0_37 = arith.constant 0 : index
    %c0_38 = arith.constant 0 : index
    %77 = vector.load %arg8[%c0_36, %c0_37, %c0_38] : memref<1x8x32xf32, #tpu.memory_space<vmem>>, vector<1x8x32xf32>
    %78 = vector.shape_cast %77 : vector<1x8x32xf32> to vector<8x32xf32>
    %79 = vector.shape_cast %76 : vector<8x32xf32> to vector<1x8x32xf32>
    tpu.vector_store %arg8[%c0_36, %c0_37, %c0_38], %79 {strides = array<i32>} : memref<1x8x32xf32, #tpu.memory_space<vmem>>, vector<1x8x32xf32>,
    %80 = arith.mulf %76, %76 : vector<8x32xf32>
    %cst_39 = arith.constant dense<0.000000e+00> : vector<8xf32>
    %81 = vector.multi_reduction <add>, %80, %cst_39 [1] : vector<8x32xf32> to vector<8xf32>
    %82 = vector.shape_cast %81 : vector<8xf32> to vector<8x1xf32>
    %83 = math.sqrt %82 : vector<8x1xf32>
    %cst_40 = arith.constant 9.99999971E-10 : f32
    %84 = vector.broadcast %cst_40 : f32 to vector<8x1xf32>
    %85 = arith.addf %83, %84 : vector<8x1xf32>
    %86 = vector.broadcast %85 : vector<8x1xf32> to vector<8x32xf32>
    %87 = arith.divf %76, %86 : vector<8x32xf32>
    "tpu.trace_start"() <{level = 10 : i32, message = "kd,td->kt"}> : () -> ()
    %cst_41 = arith.constant dense<0.000000e+00> : vector<8x8xf32>
    %88 = tpu.matmul %87, %21, %cst_41 {dimension_numbers = #tpu.dot_dimension_numbers<[1], [1], [0], [0], [0, 0, 1, 0], [], []>} : vector<8x32xf32>, vector<8x32xf32>, vector<8x8xf32> -> vector<8x8xf32>
    "tpu.trace_stop"() : () -> ()
    %cst_42 = arith.constant 5.000000e+00 : f32
    %89 = vector.broadcast %cst_42 : f32 to vector<8x8xf32>
    %90 = arith.mulf %88, %89 : vector<8x8xf32>
    %cst_43 = arith.constant dense<0xFF800000> : vector<8xf32>
    %91 = vector.multi_reduction <maximumf>, %90, %cst_43 [0] : vector<8x8xf32> to vector<8xf32>
    %92 = vector.shape_cast %91 : vector<8xf32> to vector<1x8xf32>
    %93 = vector.broadcast %92 : vector<1x8xf32> to vector<8x8xf32>
    %94 = arith.subf %90, %93 : vector<8x8xf32>
    %95 = math.exp %94 : vector<8x8xf32>
    %cst_44 = arith.constant dense<0.000000e+00> : vector<8xf32>
    %96 = vector.multi_reduction <add>, %95, %cst_44 [0] : vector<8x8xf32> to vector<8xf32>
    %97 = vector.shape_cast %96 : vector<8xf32> to vector<1x8xf32>
    %98 = vector.broadcast %97 : vector<1x8xf32> to vector<8x8xf32>
    %99 = arith.divf %95, %98 : vector<8x8xf32>
    %cst_45 = arith.constant dense<0.000000e+00> : vector<8xf32>
    %100 = vector.multi_reduction <add>, %99, %cst_45 [1] : vector<8x8xf32> to vector<8xf32>
    %101 = vector.shape_cast %100 : vector<8xf32> to vector<8x1xf32>
    %cst_46 = arith.constant 9.99999971E-10 : f32
    %102 = vector.broadcast %cst_46 : f32 to vector<8x1xf32>
    %103 = arith.addf %101, %102 : vector<8x1xf32>
    %104 = vector.broadcast %103 : vector<8x1xf32> to vector<8x8xf32>
    %105 = arith.divf %99, %104 : vector<8x8xf32>
    "tpu.trace_start"() <{level = 10 : i32, message = "kt,ks->ts"}> : () -> ()
    %cst_47 = arith.constant dense<0.000000e+00> : vector<8x8xf32>
    %106 = tpu.matmul %99, %105, %cst_47 {dimension_numbers = #tpu.dot_dimension_numbers<[0], [0], [1], [1], [0, 1, 1, 1], [], []>} : vector<8x8xf32>, vector<8x8xf32>, vector<8x8xf32> -> vector<8x8xf32>
    "tpu.trace_stop"() : () -> ()
    %107 = tpu.iota {dimensions = array<i32: 0>} : vector<8x8xi32>
    %108 = tpu.iota {dimensions = array<i32: 1>} : vector<8x8xi32>
    %109 = arith.cmpi eq, %107, %108 : vector<8x8xi32>
    %cst_48 = arith.constant 1.000000e+00 : f32
    %cst_49 = arith.constant 0.000000e+00 : f32
    %110 = vector.broadcast %cst_48 : f32 to vector<8x8xf32>
    %111 = vector.broadcast %cst_49 : f32 to vector<8x8xf32>
    %112 = arith.select %109, %110, %111 : vector<8x8xi1>, vector<8x8xf32>
    %cst_50 = arith.constant 2.500000e-01 : f32
    %113 = vector.broadcast %cst_50 : f32 to vector<8x8xf32>
    %114 = arith.mulf %113, %106 : vector<8x8xf32>
    %115 = arith.subf %112, %114 : vector<8x8xf32>
    %c0_51 = arith.constant 0 : index
    %c0_52 = arith.constant 0 : index
    %c0_53 = arith.constant 0 : index
    %116 = vector.load %arg10[%c0_51, %c0_52, %c0_53] : memref<1x8x8xf32, #tpu.memory_space<vmem>>, vector<1x8x8xf32>
    %117 = vector.shape_cast %116 : vector<1x8x8xf32> to vector<8x8xf32>
    %118 = vector.shape_cast %115 : vector<8x8xf32> to vector<1x8x8xf32>
    tpu.vector_store %arg10[%c0_51, %c0_52, %c0_53], %118 {strides = array<i32>} : memref<1x8x8xf32, #tpu.memory_space<vmem>>, vector<1x8x8xf32>,
    "tpu.trace_start"() <{level = 10 : i32, message = "kt,kd->td"}> : () -> ()
    %cst_54 = arith.constant dense<0.000000e+00> : vector<8x32xf32>
    %119 = tpu.matmul %99, %76, %cst_54 {dimension_numbers = #tpu.dot_dimension_numbers<[0], [0], [1], [1], [0, 1, 1, 1], [], []>} : vector<8x8xf32>, vector<8x32xf32>, vector<8x32xf32> -> vector<8x32xf32>
    "tpu.trace_stop"() : () -> ()
    %cst_55 = arith.constant 5.000000e-01 : f32
    %120 = vector.broadcast %cst_55 : f32 to vector<8x32xf32>
    %121 = arith.mulf %120, %119 : vector<8x32xf32>
    %122 = arith.addf %121, %10 : vector<8x32xf32>
    %cst_56 = arith.constant 5.000000e-01 : f32
    %123 = vector.broadcast %cst_56 : f32 to vector<8x32xf32>
    %124 = arith.mulf %123, %122 : vector<8x32xf32>
    %c0_57 = arith.constant 0 : index
    %c0_58 = arith.constant 0 : index
    %c0_59 = arith.constant 0 : index
    %125 = vector.load %arg11[%c0_57, %c0_58, %c0_59] : memref<1x8x32xf32, #tpu.memory_space<vmem>>, vector<1x8x32xf32>
    %126 = vector.shape_cast %125 : vector<1x8x32xf32> to vector<8x32xf32>
    %127 = vector.shape_cast %124 : vector<8x32xf32> to vector<1x8x32xf32>
    tpu.vector_store %arg11[%c0_57, %c0_58, %c0_59], %127 {strides = array<i32>} : memref<1x8x32xf32, #tpu.memory_space<vmem>>, vector<1x8x32xf32>,
    "tpu.trace_start"() <{level = 10 : i32, message = "kd,cd->kc"}> : () -> ()
    %cst_60 = arith.constant dense<0.000000e+00> : vector<8x5xf32>
    %128 = tpu.matmul %87, %0, %cst_60 {dimension_numbers = #tpu.dot_dimension_numbers<[1], [1], [0], [0], [0, 0, 1, 0], [], []>} : vector<8x32xf32>, vector<5x32xf32>, vector<8x5xf32> -> vector<8x5xf32>
    "tpu.trace_stop"() : () -> ()
    %cst_61 = arith.constant 2.000000e+01 : f32
    %129 = vector.broadcast %cst_61 : f32 to vector<8x5xf32>
    %130 = arith.mulf %128, %129 : vector<8x5xf32>
    %cst_62 = arith.constant dense<0xFF800000> : vector<8xf32>
    %131 = vector.multi_reduction <maximumf>, %130, %cst_62 [1] : vector<8x5xf32> to vector<8xf32>
    %132 = vector.shape_cast %131 : vector<8xf32> to vector<8x1xf32>
    %133 = vector.broadcast %132 : vector<8x1xf32> to vector<8x5xf32>
    %134 = arith.subf %130, %133 : vector<8x5xf32>
    %135 = math.exp %134 : vector<8x5xf32>
    %cst_63 = arith.constant dense<0.000000e+00> : vector<8xf32>
    %136 = vector.multi_reduction <add>, %135, %cst_63 [1] : vector<8x5xf32> to vector<8xf32>
    %137 = vector.shape_cast %136 : vector<8xf32> to vector<8x1xf32>
    %138 = vector.broadcast %137 : vector<8x1xf32> to vector<8x5xf32>
    %139 = arith.divf %135, %138 : vector<8x5xf32>
    %c0_64 = arith.constant 0 : index
    %c0_65 = arith.constant 0 : index
    %c0_66 = arith.constant 0 : index
    %140 = vector.load %arg9[%c0_64, %c0_65, %c0_66] : memref<1x8x5xf32, #tpu.memory_space<vmem>>, vector<1x8x5xf32>
    %141 = vector.shape_cast %140 : vector<1x8x5xf32> to vector<8x5xf32>
    %142 = vector.shape_cast %139 : vector<8x5xf32> to vector<1x8x5xf32>
    tpu.vector_store %arg9[%c0_64, %c0_65, %c0_66], %142 {strides = array<i32>} : memref<1x8x5xf32, #tpu.memory_space<vmem>>, vector<1x8x5xf32>,
    "tpu.trace_start"() <{level = 10 : i32, message = "td,cd->tc"}> : () -> ()
    %cst_67 = arith.constant dense<0.000000e+00> : vector<8x5xf32>
    %143 = tpu.matmul %21, %0, %cst_67 {dimension_numbers = #tpu.dot_dimension_numbers<[1], [1], [0], [0], [0, 0, 1, 0], [], []>} : vector<8x32xf32>, vector<5x32xf32>, vector<8x5xf32> -> vector<8x5xf32>
    "tpu.trace_stop"() : () -> ()
    %cst_68 = arith.constant 2.000000e+01 : f32
    %144 = vector.broadcast %cst_68 : f32 to vector<8x5xf32>
    %145 = arith.mulf %143, %144 : vector<8x5xf32>
    %146 = vector.broadcast %1 : vector<1x32xf32> to vector<8x32xf32>
    %147 = arith.mulf %21, %146 : vector<8x32xf32>
    %cst_69 = arith.constant dense<0.000000e+00> : vector<8xf32>
    %148 = vector.multi_reduction <add>, %147, %cst_69 [1] : vector<8x32xf32> to vector<8xf32>
    %149 = vector.shape_cast %148 : vector<8xf32> to vector<8x1xf32>
    %cst_70 = arith.constant 2.000000e+01 : f32
    %150 = vector.broadcast %cst_70 : f32 to vector<8x1xf32>
    %151 = arith.mulf %149, %150 : vector<8x1xf32>
    %152 = arith.negf %151 : vector<8x1xf32>
    %153 = math.exp %152 : vector<8x1xf32>
    %cst_71 = arith.constant 1.000000e+00 : f32
    %154 = vector.broadcast %cst_71 : f32 to vector<8x1xf32>
    %155 = arith.addf %154, %153 : vector<8x1xf32>
    %156 = arith.divf %154, %155 : vector<8x1xf32>
    %157 = arith.negf %145 : vector<8x5xf32>
    %158 = math.exp %157 : vector<8x5xf32>
    %cst_72 = arith.constant 1.000000e+00 : f32
    %159 = vector.broadcast %cst_72 : f32 to vector<8x5xf32>
    %160 = arith.addf %159, %158 : vector<8x5xf32>
    %161 = arith.divf %159, %160 : vector<8x5xf32>
    %cst_73 = arith.constant dense<0.000000e+00> : vector<5xf32>
    %162 = vector.multi_reduction <add>, %161, %cst_73 [0] : vector<8x5xf32> to vector<5xf32>
    %163 = vector.shape_cast %162 : vector<5xf32> to vector<1x5xf32>
    %cst_74 = arith.constant 9.99999974E-6 : f32
    %164 = vector.broadcast %cst_74 : f32 to vector<1x5xf32>
    %165 = arith.addf %163, %164 : vector<1x5xf32>
    %166 = vector.broadcast %165 : vector<1x5xf32> to vector<8x5xf32>
    %167 = arith.divf %161, %166 : vector<8x5xf32>
    %cst_75 = arith.constant dense<0.000000e+00> : vector<1xf32>
    %168 = vector.multi_reduction <add>, %156, %cst_75 [0] : vector<8x1xf32> to vector<1xf32>
    %169 = vector.shape_cast %168 : vector<1xf32> to vector<1x1xf32>
    %cst_76 = arith.constant 9.99999974E-6 : f32
    %170 = vector.broadcast %cst_76 : f32 to vector<1x1xf32>
    %171 = arith.addf %169, %170 : vector<1x1xf32>
    %172 = vector.broadcast %171 : vector<1x1xf32> to vector<8x1xf32>
    %173 = arith.divf %156, %172 : vector<8x1xf32>
    %174 = vector.broadcast %173 : vector<8x1xf32> to vector<8x32xf32>
    %175 = arith.mulf %10, %174 : vector<8x32xf32>
    %cst_77 = arith.constant dense<0.000000e+00> : vector<32xf32>
    %176 = vector.multi_reduction <add>, %175, %cst_77 [0] : vector<8x32xf32> to vector<32xf32>
    %177 = vector.shape_cast %176 : vector<32xf32> to vector<1x32xf32>
    "tpu.trace_start"() <{level = 10 : i32, message = "tc,td->cd"}> : () -> ()
    %cst_78 = arith.constant dense<0.000000e+00> : vector<5x32xf32>
    %178 = tpu.matmul %167, %10, %cst_78 {dimension_numbers = #tpu.dot_dimension_numbers<[0], [0], [1], [1], [0, 1, 1, 1], [], []>} : vector<8x5xf32>, vector<8x32xf32>, vector<5x32xf32> -> vector<5x32xf32>
    "tpu.trace_stop"() : () -> ()
    %179 = arith.mulf %177, %177 : vector<1x32xf32>
    %cst_79 = arith.constant dense<0.000000e+00> : vector<1xf32>
    %180 = vector.multi_reduction <add>, %179, %cst_79 [1] : vector<1x32xf32> to vector<1xf32>
    %181 = vector.shape_cast %180 : vector<1xf32> to vector<1x1xf32>
    %182 = math.sqrt %181 : vector<1x1xf32>
    %cst_80 = arith.constant 9.99999971E-10 : f32
    %183 = vector.broadcast %cst_80 : f32 to vector<1x1xf32>
    %184 = arith.addf %182, %183 : vector<1x1xf32>
    %185 = vector.broadcast %184 : vector<1x1xf32> to vector<1x32xf32>
    %186 = arith.divf %177, %185 : vector<1x32xf32>
    %187 = arith.mulf %178, %178 : vector<5x32xf32>
    %cst_81 = arith.constant dense<0.000000e+00> : vector<5xf32>
    %188 = vector.multi_reduction <add>, %187, %cst_81 [1] : vector<5x32xf32> to vector<5xf32>
    %189 = vector.shape_cast %188 : vector<5xf32> to vector<5x1xf32>
    %190 = math.sqrt %189 : vector<5x1xf32>
    %cst_82 = arith.constant 9.99999971E-10 : f32
    %191 = vector.broadcast %cst_82 : f32 to vector<5x1xf32>
    %192 = arith.addf %190, %191 : vector<5x1xf32>
    %193 = vector.broadcast %192 : vector<5x1xf32> to vector<5x32xf32>
    %194 = arith.divf %178, %193 : vector<5x32xf32>
    "tpu.trace_start"() <{level = 10 : i32, message = "kd,cd->kc"}> : () -> ()
    %cst_83 = arith.constant dense<0.000000e+00> : vector<1x5xf32>
    %195 = tpu.matmul %186, %0, %cst_83 {dimension_numbers = #tpu.dot_dimension_numbers<[1], [1], [0], [0], [0, 0, 1, 0], [], []>} : vector<1x32xf32>, vector<5x32xf32>, vector<1x5xf32> -> vector<1x5xf32>
    "tpu.trace_stop"() : () -> ()
    %cst_84 = arith.constant 2.000000e+01 : f32
    %196 = vector.broadcast %cst_84 : f32 to vector<1x5xf32>
    %197 = arith.mulf %195, %196 : vector<1x5xf32>
    %198 = arith.mulf %194, %0 : vector<5x32xf32>
    %cst_85 = arith.constant dense<0.000000e+00> : vector<5xf32>
    %199 = vector.multi_reduction <add>, %198, %cst_85 [1] : vector<5x32xf32> to vector<5xf32>
    %200 = vector.shape_cast %199 : vector<5xf32> to vector<5x1xf32>
    %cst_86 = arith.constant 2.000000e+01 : f32
    %201 = vector.broadcast %cst_86 : f32 to vector<5x1xf32>
    %202 = arith.mulf %200, %201 : vector<5x1xf32>
    %cst_87 = arith.constant dense<0xFF800000> : vector<1xf32>
    %203 = vector.multi_reduction <maximumf>, %197, %cst_87 [1] : vector<1x5xf32> to vector<1xf32>
    %204 = vector.shape_cast %203 : vector<1xf32> to vector<1x1xf32>
    %205 = vector.broadcast %204 : vector<1x1xf32> to vector<1x5xf32>
    %206 = arith.subf %197, %205 : vector<1x5xf32>
    %207 = math.exp %206 : vector<1x5xf32>
    %cst_88 = arith.constant dense<0.000000e+00> : vector<1xf32>
    %208 = vector.multi_reduction <add>, %207, %cst_88 [1] : vector<1x5xf32> to vector<1xf32>
    %209 = vector.shape_cast %208 : vector<1xf32> to vector<1x1xf32>
    %210 = vector.broadcast %209 : vector<1x1xf32> to vector<1x5xf32>
    %211 = arith.divf %207, %210 : vector<1x5xf32>
    %cst_89 = arith.constant dense<0xFF800000> : vector<1xf32>
    %212 = vector.multi_reduction <maximumf>, %202, %cst_89 [0] : vector<5x1xf32> to vector<1xf32>
    %213 = vector.shape_cast %212 : vector<1xf32> to vector<1x1xf32>
    %214 = vector.broadcast %213 : vector<1x1xf32> to vector<5x1xf32>
    %215 = arith.subf %202, %214 : vector<5x1xf32>
    %216 = math.exp %215 : vector<5x1xf32>
    %cst_90 = arith.constant dense<0.000000e+00> : vector<1xf32>
    %217 = vector.multi_reduction <add>, %216, %cst_90 [0] : vector<5x1xf32> to vector<1xf32>
    %218 = vector.shape_cast %217 : vector<1xf32> to vector<1x1xf32>
    %219 = vector.broadcast %218 : vector<1x1xf32> to vector<5x1xf32>
    %220 = arith.divf %216, %219 : vector<5x1xf32>
    %c0_91 = arith.constant 0 : index
    %c0_92 = arith.constant 0 : index
    %c0_93 = arith.constant 0 : index
    %221 = vector.load %arg12[%c0_91, %c0_92, %c0_93] : memref<1x1x5xf32, #tpu.memory_space<vmem>>, vector<1x1x5xf32>
    %222 = vector.shape_cast %221 : vector<1x1x5xf32> to vector<1x5xf32>
    %223 = vector.shape_cast %211 : vector<1x5xf32> to vector<1x1x5xf32>
    tpu.vector_store %arg12[%c0_91, %c0_92, %c0_93], %223 {strides = array<i32>} : memref<1x1x5xf32, #tpu.memory_space<vmem>>, vector<1x1x5xf32>,
    %c0_94 = arith.constant 0 : index
    %c0_95 = arith.constant 0 : index
    %c0_96 = arith.constant 0 : index
    %224 = vector.load %arg13[%c0_94, %c0_95, %c0_96] : memref<1x5x1xf32, #tpu.memory_space<vmem>>, vector<1x5x1xf32>
    %225 = vector.shape_cast %224 : vector<1x5x1xf32> to vector<5x1xf32>
    %226 = vector.shape_cast %220 : vector<5x1xf32> to vector<1x5x1xf32>
    tpu.vector_store %arg13[%c0_94, %c0_95, %c0_96], %226 {strides = array<i32>} : memref<1x5x1xf32, #tpu.memory_space<vmem>>, vector<1x5x1xf32>,
    %c0_97 = arith.constant 0 : index
    %c0_98 = arith.constant 0 : index
    %c0_99 = arith.constant 0 : index
    %227 = vector.load %arg14[%c0_97, %c0_98, %c0_99] : memref<1x8x1xf32, #tpu.memory_space<vmem>>, vector<1x8x1xf32>
    %228 = vector.shape_cast %227 : vector<1x8x1xf32> to vector<8x1xf32>
    %229 = vector.shape_cast %156 : vector<8x1xf32> to vector<1x8x1xf32>
    tpu.vector_store %arg14[%c0_97, %c0_98, %c0_99], %229 {strides = array<i32>} : memref<1x8x1xf32, #tpu.memory_space<vmem>>, vector<1x8x1xf32>,
    %c0_100 = arith.constant 0 : index
    %c0_101 = arith.constant 0 : index
    %c0_102 = arith.constant 0 : index
    %230 = vector.load %arg15[%c0_100, %c0_101, %c0_102] : memref<1x8x5xf32, #tpu.memory_space<vmem>>, vector<1x8x5xf32>
    %231 = vector.shape_cast %230 : vector<1x8x5xf32> to vector<8x5xf32>
    %232 = vector.shape_cast %145 : vector<8x5xf32> to vector<1x8x5xf32>
    tpu.vector_store %arg15[%c0_100, %c0_101, %c0_102], %232 {strides = array<i32>} : memref<1x8x5xf32, #tpu.memory_space<vmem>>, vector<1x8x5xf32>,
    return
  }
  func.func @transform_0(%arg0: i32) -> (i32, i32, i32) {
    %c0_i32 = arith.constant 0 : i32
    %c0_i32_0 = arith.constant 0 : i32
    %c0_i32_1 = arith.constant 0 : i32
    return %arg0, %c0_i32, %c0_i32_0 : i32, i32, i32
  }
  func.func @transform_1(%arg0: i32) -> (i32, i32) {
    %c0_i32 = arith.constant 0 : i32
    %c0_i32_0 = arith.constant 0 : i32
    %c0_i32_1 = arith.constant 0 : i32
    return %c0_i32, %c0_i32_0 : i32, i32
  }
  func.func @transform_2(%arg0: i32) -> (i32, i32) {
    %c0_i32 = arith.constant 0 : i32
    %c0_i32_0 = arith.constant 0 : i32
    %c0_i32_1 = arith.constant 0 : i32
    return %c0_i32, %c0_i32_0 : i32, i32
  }
  func.func @transform_3(%arg0: i32) -> (i32, i32) {
    %c0_i32 = arith.constant 0 : i32
    %c0_i32_0 = arith.constant 0 : i32
    %c0_i32_1 = arith.constant 0 : i32
    return %c0_i32, %c0_i32_0 : i32, i32
  }
  func.func @transform_4(%arg0: i32) -> (i32, i32) {
    %c0_i32 = arith.constant 0 : i32
    %c0_i32_0 = arith.constant 0 : i32
    %c0_i32_1 = arith.constant 0 : i32
    return %c0_i32, %c0_i32_0 : i32, i32
  }
  func.func @transform_5(%arg0: i32) -> (i32, i32) {
    %c0_i32 = arith.constant 0 : i32
    %c0_i32_0 = arith.constant 0 : i32
    %c0_i32_1 = arith.constant 0 : i32
    return %c0_i32, %c0_i32_0 : i32, i32
  }
  func.func @transform_6(%arg0: i32) -> (i32, i32, i32) {
    %c0_i32 = arith.constant 0 : i32
    %c0_i32_0 = arith.constant 0 : i32
    %c0_i32_1 = arith.constant 0 : i32
    return %arg0, %c0_i32, %c0_i32_0 : i32, i32, i32
  }
  func.func @transform_7(%arg0: i32) -> (i32, i32, i32) {
    %c0_i32 = arith.constant 0 : i32
    %c0_i32_0 = arith.constant 0 : i32
    %c0_i32_1 = arith.constant 0 : i32
    return %arg0, %c0_i32, %c0_i32_0 : i32, i32, i32
  }
  func.func @transform_8(%arg0: i32) -> (i32, i32, i32) {
    %c0_i32 = arith.constant 0 : i32
    %c0_i32_0 = arith.constant 0 : i32
    %c0_i32_1 = arith.constant 0 : i32
    return %arg0, %c0_i32, %c0_i32_0 : i32, i32, i32
  }
  func.func @transform_9(%arg0: i32) -> (i32, i32, i32) {
    %c0_i32 = arith.constant 0 : i32
    %c0_i32_0 = arith.constant 0 : i32
    %c0_i32_1 = arith.constant 0 : i32
    return %arg0, %c0_i32, %c0_i32_0 : i32, i32, i32
  }
  func.func @transform_10(%arg0: i32) -> (i32, i32, i32) {
    %c0_i32 = arith.constant 0 : i32
    %c0_i32_0 = arith.constant 0 : i32
    %c0_i32_1 = arith.constant 0 : i32
    return %arg0, %c0_i32, %c0_i32_0 : i32, i32, i32
  }
  func.func @transform_11(%arg0: i32) -> (i32, i32, i32) {
    %c0_i32 = arith.constant 0 : i32
    %c0_i32_0 = arith.constant 0 : i32
    %c0_i32_1 = arith.constant 0 : i32
    return %arg0, %c0_i32, %c0_i32_0 : i32, i32, i32
  }
  func.func @transform_12(%arg0: i32) -> (i32, i32, i32) {
    %c0_i32 = arith.constant 0 : i32
    %c0_i32_0 = arith.constant 0 : i32
    %c0_i32_1 = arith.constant 0 : i32
    return %arg0, %c0_i32, %c0_i32_0 : i32, i32, i32
  }
  func.func @transform_13(%arg0: i32) -> (i32, i32, i32) {
    %c0_i32 = arith.constant 0 : i32
    %c0_i32_0 = arith.constant 0 : i32
    %c0_i32_1 = arith.constant 0 : i32
    return %arg0, %c0_i32, %c0_i32_0 : i32, i32, i32
  }
  func.func @transform_14(%arg0: i32) -> (i32, i32, i32) {
    %c0_i32 = arith.constant 0 : i32
    %c0_i32_0 = arith.constant 0 : i32
    %c0_i32_1 = arith.constant 0 : i32
    return %arg0, %c0_i32, %c0_i32_0 : i32, i32, i32
  }
}

module attributes {stable_mosaic.version = 11 : i64} {
  func.func @_wstal_refine_kernel(%arg0: i32, %arg1: memref<1x8x8xf32, #tpu.memory_space<vmem>>, %arg2: memref<1x8x32xf32, #tpu.memory_space<vmem>>, %arg3: memref<5x32xf32, #tpu.memory_space<vmem>>, %arg4: memref<1x32xf32, #tpu.memory_space<vmem>>, %arg5: memref<1x8x32xf32, #tpu.memory_space<vmem>>, %arg6: memref<1x1x5xf32, #tpu.memory_space<vmem>>, %arg7: memref<1x5x1xf32, #tpu.memory_space<vmem>>, %arg8: memref<1x8x1xf32, #tpu.memory_space<vmem>>, %arg9: memref<1x8x5xf32, #tpu.memory_space<vmem>>) attributes {dimension_semantics = [#tpu.dimension_semantics<parallel>], iteration_bounds = array<i64: 2>, scalar_prefetch = 0 : i64, scratch_operands = 0 : i64, tpu.core_type = #tpu.core_type<tc>, window_params = [{transform_indices = @transform_0, window_bounds = array<i64: 1, 8, 8>}, {transform_indices = @transform_1, window_bounds = array<i64: 1, 8, 32>}, {pipeline_mode = #tpu.pipeline_mode<synchronous>, transform_indices = @transform_2, window_bounds = array<i64: 5, 32>}, {pipeline_mode = #tpu.pipeline_mode<synchronous>, transform_indices = @transform_3, window_bounds = array<i64: 1, 32>}, {transform_indices = @transform_4, window_bounds = array<i64: 1, 8, 32>}, {transform_indices = @transform_5, window_bounds = array<i64: 1, 1, 5>}, {transform_indices = @transform_6, window_bounds = array<i64: 1, 5, 1>}, {transform_indices = @transform_7, window_bounds = array<i64: 1, 8, 1>}, {transform_indices = @transform_8, window_bounds = array<i64: 1, 8, 5>}]} {
    %c0 = arith.constant 0 : index
    %c0_0 = arith.constant 0 : index
    %c0_1 = arith.constant 0 : index
    %0 = vector.load %arg1[%c0, %c0_0, %c0_1] : memref<1x8x8xf32, #tpu.memory_space<vmem>>, vector<1x8x8xf32>
    %1 = vector.shape_cast %0 : vector<1x8x8xf32> to vector<8x8xf32>
    %c0_2 = arith.constant 0 : index
    %c0_3 = arith.constant 0 : index
    %c0_4 = arith.constant 0 : index
    %2 = vector.load %arg2[%c0_2, %c0_3, %c0_4] : memref<1x8x32xf32, #tpu.memory_space<vmem>>, vector<1x8x32xf32>
    %3 = vector.shape_cast %2 : vector<1x8x32xf32> to vector<8x32xf32>
    %cst = arith.constant dense<0.000000e+00> : vector<8x32xf32>
    %4 = tpu.matmul %1, %3, %cst {dimension_numbers = #tpu.dot_dimension_numbers<[1], [0], [0], [1], [0, 0, 1, 1], [], []>} : vector<8x8xf32>, vector<8x32xf32>, vector<8x32xf32> -> vector<8x32xf32>
    %c0_5 = arith.constant 0 : index
    %c0_6 = arith.constant 0 : index
    %c0_7 = arith.constant 0 : index
    %5 = vector.load %arg5[%c0_5, %c0_6, %c0_7] : memref<1x8x32xf32, #tpu.memory_space<vmem>>, vector<1x8x32xf32>
    %6 = vector.shape_cast %5 : vector<1x8x32xf32> to vector<8x32xf32>
    %7 = vector.shape_cast %4 : vector<8x32xf32> to vector<1x8x32xf32>
    tpu.vector_store %arg5[%c0_5, %c0_6, %c0_7], %7 {strides = array<i32>} : memref<1x8x32xf32, #tpu.memory_space<vmem>>, vector<1x8x32xf32>,
    %8 = arith.mulf %4, %4 : vector<8x32xf32>
    %cst_8 = arith.constant dense<0.000000e+00> : vector<8xf32>
    %9 = vector.multi_reduction <add>, %8, %cst_8 [1] : vector<8x32xf32> to vector<8xf32>
    %10 = vector.shape_cast %9 : vector<8xf32> to vector<8x1xf32>
    %11 = math.sqrt %10 : vector<8x1xf32>
    %cst_9 = arith.constant 9.99999971E-10 : f32
    %12 = vector.broadcast %cst_9 : f32 to vector<8x1xf32>
    %13 = arith.addf %11, %12 : vector<8x1xf32>
    %14 = vector.broadcast %13 : vector<8x1xf32> to vector<8x32xf32>
    %15 = arith.divf %4, %14 : vector<8x32xf32>
    %c0_10 = arith.constant 0 : index
    %c0_11 = arith.constant 0 : index
    %16 = vector.load %arg3[%c0_10, %c0_11] : memref<5x32xf32, #tpu.memory_space<vmem>>, vector<5x32xf32>
    %c0_12 = arith.constant 0 : index
    %c0_13 = arith.constant 0 : index
    %17 = vector.load %arg4[%c0_12, %c0_13] : memref<1x32xf32, #tpu.memory_space<vmem>>, vector<1x32xf32>
    "tpu.trace_start"() <{level = 10 : i32, message = "td,cd->tc"}> : () -> ()
    %cst_14 = arith.constant dense<0.000000e+00> : vector<8x5xf32>
    %18 = tpu.matmul %15, %16, %cst_14 {dimension_numbers = #tpu.dot_dimension_numbers<[1], [1], [0], [0], [0, 0, 1, 0], [], []>} : vector<8x32xf32>, vector<5x32xf32>, vector<8x5xf32> -> vector<8x5xf32>
    "tpu.trace_stop"() : () -> ()
    %cst_15 = arith.constant 2.000000e+01 : f32
    %19 = vector.broadcast %cst_15 : f32 to vector<8x5xf32>
    %20 = arith.mulf %18, %19 : vector<8x5xf32>
    %21 = vector.broadcast %17 : vector<1x32xf32> to vector<8x32xf32>
    %22 = arith.mulf %15, %21 : vector<8x32xf32>
    %cst_16 = arith.constant dense<0.000000e+00> : vector<8xf32>
    %23 = vector.multi_reduction <add>, %22, %cst_16 [1] : vector<8x32xf32> to vector<8xf32>
    %24 = vector.shape_cast %23 : vector<8xf32> to vector<8x1xf32>
    %cst_17 = arith.constant 2.000000e+01 : f32
    %25 = vector.broadcast %cst_17 : f32 to vector<8x1xf32>
    %26 = arith.mulf %24, %25 : vector<8x1xf32>
    %27 = arith.negf %26 : vector<8x1xf32>
    %28 = math.exp %27 : vector<8x1xf32>
    %cst_18 = arith.constant 1.000000e+00 : f32
    %29 = vector.broadcast %cst_18 : f32 to vector<8x1xf32>
    %30 = arith.addf %29, %28 : vector<8x1xf32>
    %31 = arith.divf %29, %30 : vector<8x1xf32>
    %32 = arith.negf %20 : vector<8x5xf32>
    %33 = math.exp %32 : vector<8x5xf32>
    %cst_19 = arith.constant 1.000000e+00 : f32
    %34 = vector.broadcast %cst_19 : f32 to vector<8x5xf32>
    %35 = arith.addf %34, %33 : vector<8x5xf32>
    %36 = arith.divf %34, %35 : vector<8x5xf32>
    %cst_20 = arith.constant dense<0.000000e+00> : vector<5xf32>
    %37 = vector.multi_reduction <add>, %36, %cst_20 [0] : vector<8x5xf32> to vector<5xf32>
    %38 = vector.shape_cast %37 : vector<5xf32> to vector<1x5xf32>
    %cst_21 = arith.constant 9.99999974E-6 : f32
    %39 = vector.broadcast %cst_21 : f32 to vector<1x5xf32>
    %40 = arith.addf %38, %39 : vector<1x5xf32>
    %41 = vector.broadcast %40 : vector<1x5xf32> to vector<8x5xf32>
    %42 = arith.divf %36, %41 : vector<8x5xf32>
    %cst_22 = arith.constant dense<0.000000e+00> : vector<1xf32>
    %43 = vector.multi_reduction <add>, %31, %cst_22 [0] : vector<8x1xf32> to vector<1xf32>
    %44 = vector.shape_cast %43 : vector<1xf32> to vector<1x1xf32>
    %cst_23 = arith.constant 9.99999974E-6 : f32
    %45 = vector.broadcast %cst_23 : f32 to vector<1x1xf32>
    %46 = arith.addf %44, %45 : vector<1x1xf32>
    %47 = vector.broadcast %46 : vector<1x1xf32> to vector<8x1xf32>
    %48 = arith.divf %31, %47 : vector<8x1xf32>
    %49 = vector.broadcast %48 : vector<8x1xf32> to vector<8x32xf32>
    %50 = arith.mulf %4, %49 : vector<8x32xf32>
    %cst_24 = arith.constant dense<0.000000e+00> : vector<32xf32>
    %51 = vector.multi_reduction <add>, %50, %cst_24 [0] : vector<8x32xf32> to vector<32xf32>
    %52 = vector.shape_cast %51 : vector<32xf32> to vector<1x32xf32>
    "tpu.trace_start"() <{level = 10 : i32, message = "tc,td->cd"}> : () -> ()
    %cst_25 = arith.constant dense<0.000000e+00> : vector<5x32xf32>
    %53 = tpu.matmul %42, %4, %cst_25 {dimension_numbers = #tpu.dot_dimension_numbers<[0], [0], [1], [1], [0, 1, 1, 1], [], []>} : vector<8x5xf32>, vector<8x32xf32>, vector<5x32xf32> -> vector<5x32xf32>
    "tpu.trace_stop"() : () -> ()
    %54 = arith.mulf %52, %52 : vector<1x32xf32>
    %cst_26 = arith.constant dense<0.000000e+00> : vector<1xf32>
    %55 = vector.multi_reduction <add>, %54, %cst_26 [1] : vector<1x32xf32> to vector<1xf32>
    %56 = vector.shape_cast %55 : vector<1xf32> to vector<1x1xf32>
    %57 = math.sqrt %56 : vector<1x1xf32>
    %cst_27 = arith.constant 9.99999971E-10 : f32
    %58 = vector.broadcast %cst_27 : f32 to vector<1x1xf32>
    %59 = arith.addf %57, %58 : vector<1x1xf32>
    %60 = vector.broadcast %59 : vector<1x1xf32> to vector<1x32xf32>
    %61 = arith.divf %52, %60 : vector<1x32xf32>
    %62 = arith.mulf %53, %53 : vector<5x32xf32>
    %cst_28 = arith.constant dense<0.000000e+00> : vector<5xf32>
    %63 = vector.multi_reduction <add>, %62, %cst_28 [1] : vector<5x32xf32> to vector<5xf32>
    %64 = vector.shape_cast %63 : vector<5xf32> to vector<5x1xf32>
    %65 = math.sqrt %64 : vector<5x1xf32>
    %cst_29 = arith.constant 9.99999971E-10 : f32
    %66 = vector.broadcast %cst_29 : f32 to vector<5x1xf32>
    %67 = arith.addf %65, %66 : vector<5x1xf32>
    %68 = vector.broadcast %67 : vector<5x1xf32> to vector<5x32xf32>
    %69 = arith.divf %53, %68 : vector<5x32xf32>
    "tpu.trace_start"() <{level = 10 : i32, message = "kd,cd->kc"}> : () -> ()
    %cst_30 = arith.constant dense<0.000000e+00> : vector<1x5xf32>
    %70 = tpu.matmul %61, %16, %cst_30 {dimension_numbers = #tpu.dot_dimension_numbers<[1], [1], [0], [0], [0, 0, 1, 0], [], []>} : vector<1x32xf32>, vector<5x32xf32>, vector<1x5xf32> -> vector<1x5xf32>
    "tpu.trace_stop"() : () -> ()
    %cst_31 = arith.constant 2.000000e+01 : f32
    %71 = vector.broadcast %cst_31 : f32 to vector<1x5xf32>
    %72 = arith.mulf %70, %71 : vector<1x5xf32>
    %73 = arith.mulf %69, %16 : vector<5x32xf32>
    %cst_32 = arith.constant dense<0.000000e+00> : vector<5xf32>
    %74 = vector.multi_reduction <add>, %73, %cst_32 [1] : vector<5x32xf32> to vector<5xf32>
    %75 = vector.shape_cast %74 : vector<5xf32> to vector<5x1xf32>
    %cst_33 = arith.constant 2.000000e+01 : f32
    %76 = vector.broadcast %cst_33 : f32 to vector<5x1xf32>
    %77 = arith.mulf %75, %76 : vector<5x1xf32>
    %cst_34 = arith.constant dense<0xFF800000> : vector<1xf32>
    %78 = vector.multi_reduction <maximumf>, %72, %cst_34 [1] : vector<1x5xf32> to vector<1xf32>
    %79 = vector.shape_cast %78 : vector<1xf32> to vector<1x1xf32>
    %80 = vector.broadcast %79 : vector<1x1xf32> to vector<1x5xf32>
    %81 = arith.subf %72, %80 : vector<1x5xf32>
    %82 = math.exp %81 : vector<1x5xf32>
    %cst_35 = arith.constant dense<0.000000e+00> : vector<1xf32>
    %83 = vector.multi_reduction <add>, %82, %cst_35 [1] : vector<1x5xf32> to vector<1xf32>
    %84 = vector.shape_cast %83 : vector<1xf32> to vector<1x1xf32>
    %85 = vector.broadcast %84 : vector<1x1xf32> to vector<1x5xf32>
    %86 = arith.divf %82, %85 : vector<1x5xf32>
    %cst_36 = arith.constant dense<0xFF800000> : vector<1xf32>
    %87 = vector.multi_reduction <maximumf>, %77, %cst_36 [0] : vector<5x1xf32> to vector<1xf32>
    %88 = vector.shape_cast %87 : vector<1xf32> to vector<1x1xf32>
    %89 = vector.broadcast %88 : vector<1x1xf32> to vector<5x1xf32>
    %90 = arith.subf %77, %89 : vector<5x1xf32>
    %91 = math.exp %90 : vector<5x1xf32>
    %cst_37 = arith.constant dense<0.000000e+00> : vector<1xf32>
    %92 = vector.multi_reduction <add>, %91, %cst_37 [0] : vector<5x1xf32> to vector<1xf32>
    %93 = vector.shape_cast %92 : vector<1xf32> to vector<1x1xf32>
    %94 = vector.broadcast %93 : vector<1x1xf32> to vector<5x1xf32>
    %95 = arith.divf %91, %94 : vector<5x1xf32>
    %c0_38 = arith.constant 0 : index
    %c0_39 = arith.constant 0 : index
    %c0_40 = arith.constant 0 : index
    %96 = vector.load %arg6[%c0_38, %c0_39, %c0_40] : memref<1x1x5xf32, #tpu.memory_space<vmem>>, vector<1x1x5xf32>
    %97 = vector.shape_cast %96 : vector<1x1x5xf32> to vector<1x5xf32>
    %98 = vector.shape_cast %86 : vector<1x5xf32> to vector<1x1x5xf32>
    tpu.vector_store %arg6[%c0_38, %c0_39, %c0_40], %98 {strides = array<i32>} : memref<1x1x5xf32, #tpu.memory_space<vmem>>, vector<1x1x5xf32>,
    %c0_41 = arith.constant 0 : index
    %c0_42 = arith.constant 0 : index
    %c0_43 = arith.constant 0 : index
    %99 = vector.load %arg7[%c0_41, %c0_42, %c0_43] : memref<1x5x1xf32, #tpu.memory_space<vmem>>, vector<1x5x1xf32>
    %100 = vector.shape_cast %99 : vector<1x5x1xf32> to vector<5x1xf32>
    %101 = vector.shape_cast %95 : vector<5x1xf32> to vector<1x5x1xf32>
    tpu.vector_store %arg7[%c0_41, %c0_42, %c0_43], %101 {strides = array<i32>} : memref<1x5x1xf32, #tpu.memory_space<vmem>>, vector<1x5x1xf32>,
    %c0_44 = arith.constant 0 : index
    %c0_45 = arith.constant 0 : index
    %c0_46 = arith.constant 0 : index
    %102 = vector.load %arg8[%c0_44, %c0_45, %c0_46] : memref<1x8x1xf32, #tpu.memory_space<vmem>>, vector<1x8x1xf32>
    %103 = vector.shape_cast %102 : vector<1x8x1xf32> to vector<8x1xf32>
    %104 = vector.shape_cast %31 : vector<8x1xf32> to vector<1x8x1xf32>
    tpu.vector_store %arg8[%c0_44, %c0_45, %c0_46], %104 {strides = array<i32>} : memref<1x8x1xf32, #tpu.memory_space<vmem>>, vector<1x8x1xf32>,
    %c0_47 = arith.constant 0 : index
    %c0_48 = arith.constant 0 : index
    %c0_49 = arith.constant 0 : index
    %105 = vector.load %arg9[%c0_47, %c0_48, %c0_49] : memref<1x8x5xf32, #tpu.memory_space<vmem>>, vector<1x8x5xf32>
    %106 = vector.shape_cast %105 : vector<1x8x5xf32> to vector<8x5xf32>
    %107 = vector.shape_cast %20 : vector<8x5xf32> to vector<1x8x5xf32>
    tpu.vector_store %arg9[%c0_47, %c0_48, %c0_49], %107 {strides = array<i32>} : memref<1x8x5xf32, #tpu.memory_space<vmem>>, vector<1x8x5xf32>,
    return
  }
  func.func @transform_0(%arg0: i32) -> (i32, i32, i32) {
    %c0_i32 = arith.constant 0 : i32
    %c0_i32_0 = arith.constant 0 : i32
    %c0_i32_1 = arith.constant 0 : i32
    return %arg0, %c0_i32, %c0_i32_0 : i32, i32, i32
  }
  func.func @transform_1(%arg0: i32) -> (i32, i32, i32) {
    %c0_i32 = arith.constant 0 : i32
    %c0_i32_0 = arith.constant 0 : i32
    %c0_i32_1 = arith.constant 0 : i32
    return %arg0, %c0_i32, %c0_i32_0 : i32, i32, i32
  }
  func.func @transform_2(%arg0: i32) -> (i32, i32) {
    %c0_i32 = arith.constant 0 : i32
    %c0_i32_0 = arith.constant 0 : i32
    %c0_i32_1 = arith.constant 0 : i32
    return %c0_i32, %c0_i32_0 : i32, i32
  }
  func.func @transform_3(%arg0: i32) -> (i32, i32) {
    %c0_i32 = arith.constant 0 : i32
    %c0_i32_0 = arith.constant 0 : i32
    %c0_i32_1 = arith.constant 0 : i32
    return %c0_i32, %c0_i32_0 : i32, i32
  }
  func.func @transform_4(%arg0: i32) -> (i32, i32, i32) {
    %c0_i32 = arith.constant 0 : i32
    %c0_i32_0 = arith.constant 0 : i32
    %c0_i32_1 = arith.constant 0 : i32
    return %arg0, %c0_i32, %c0_i32_0 : i32, i32, i32
  }
  func.func @transform_5(%arg0: i32) -> (i32, i32, i32) {
    %c0_i32 = arith.constant 0 : i32
    %c0_i32_0 = arith.constant 0 : i32
    %c0_i32_1 = arith.constant 0 : i32
    return %arg0, %c0_i32, %c0_i32_0 : i32, i32, i32
  }
  func.func @transform_6(%arg0: i32) -> (i32, i32, i32) {
    %c0_i32 = arith.constant 0 : i32
    %c0_i32_0 = arith.constant 0 : i32
    %c0_i32_1 = arith.constant 0 : i32
    return %arg0, %c0_i32, %c0_i32_0 : i32, i32, i32
  }
  func.func @transform_7(%arg0: i32) -> (i32, i32, i32) {
    %c0_i32 = arith.constant 0 : i32
    %c0_i32_0 = arith.constant 0 : i32
    %c0_i32_1 = arith.constant 0 : i32
    return %arg0, %c0_i32, %c0_i32_0 : i32, i32, i32
  }
  func.func @transform_8(%arg0: i32) -> (i32, i32, i32) {
    %c0_i32 = arith.constant 0 : i32
    %c0_i32_0 = arith.constant 0 : i32
    %c0_i32_1 = arith.constant 0 : i32
    return %arg0, %c0_i32, %c0_i32_0 : i32, i32, i32
  }
}

</mosaic_0001>

<llo_original>
// kernel: custom-call.11
$region0: #{custom-call.11}
  %s0 = inlined_call_operand.vmem [shape: f32[2,8,8], index: 0, kind: input, shape index: {}]
  %s1 = inlined_call_operand.vmem [shape: f32[2,8,8], index: 1, kind: output, shape index: {0}]
  %s2 = inlined_call_operand.hbm [shape: s32[2,8], index: 2, kind: output, shape index: {1}]
  %s3 = inlined_call_operand.vmem [shape: s32[2,8], index: 3, kind: output, shape index: {2}]
  %4 = xla_tuple %s1, %s2, %s3
  $region1: #{custom-call.11} parent=0
    #allocation0 [shape = 'u8[8192]{0}', space=vmem, size = 0x2000, scoped, tag = 'operand span for operand 0']
    #allocation1 [shape = 'u8[8192]{0}', space=vmem, size = 0x2000, scoped, tag = 'operand span for operand 1']
    #allocation2 [shape = 'u8[4096]{0}', space=vmem, size = 0x1000, scoped, tag = 'operand span for operand 2']
    #allocation3 [shape = 'u8[2048]{0}', space=vmem, size = 0x800, scoped, tag = 'packed  for operand 2']
    #allocation4 [shape = 's32[2]{0}', space=sflag, size = 0x8, scoped, tag = 'scoped memory for custom-call.11']
    #allocation5 [shape = 'u8[4096]{0}', space=vmem, size = 0x1000, scoped, tag = 'operand span for operand 3']
    #allocation6 [shape = 'u8[2048]{0}', space=vmem, size = 0x800, scoped, tag = 'packed  for operand 3']
    %5 = vsyncpa [#allocation4], 0
    %s6 = scalar_lea.sflag [#allocation4], 1
    %7 = vsyncpa %s6, 0
    loop: start=0, step=1, limit=4
    $region2: #{custom-call.11} parent=1 // loop_pre_header
      _
    $region3: #{custom-call.11} parent=1 // loop_header
      %s9 = sphi 0, %s13
      %p10 = scmp.ge.s32.totalorder %s9, 4
      %s21 = sphi 0, %s23
      %s24 = sphi 0, %s21
      %s25 = sphi 0, %s24
      %s41 = sphi 0, %s25
      %s49 = sphi 0, %s51
      %s52 = sphi 0, %s49
      %s53 = sphi 0, %s52
      %s69 = sphi 0, %s53
    $region4: #{custom-call.11} parent=1 // loop_header_branch
      %12 = sbr.rel (%p10) target = $region8
    $region5: #{custom-call.11} parent=1 // loop_body
      %s14 = ssub.s32 %s9, 1
      %s15 = ssub.s32 %s9, 2
      %s16 = sadd.s32 %s9, 1
      %s17 = sshrl.u32 %s9, 3
      %s18 = sshrl.u32 %s16, 3
      %s19 = ssub.s32 %s17, %s18
      %p20 = scmp.eq.s32.totalorder %s19, 0
      %s22 = sadd.s32 %s21, 1
      %s23 = scalar_select %p20, %s21, %s22
      %p26 = pneg %p20
      %p27 = scmp.eq.s32.totalorder %s9, 1
      %p28 = por %p26, %p27
      %p29 = scmp.ne.s32.totalorder %s21, %s24
      %p30 = scmp.eq.s32.totalorder %s9, 0
      %p31 = por %p29, %p30
      %p32 = scmp.ne.s32.totalorder %s21, %s24
      %p33 = scmp.eq.s32.totalorder %s14, 1
      %p34 = por %p32, %p33
      %p35 = scmp.ne.s32.totalorder %s24, %s25
      %p36 = scmp.eq.s32.totalorder %s14, 0
      %p37 = por %p35, %p36
      %p38 = scmp.ne.s32.totalorder %s24, %s25
      %p39 = scmp.eq.s32.totalorder %s15, 1
      %p40 = por %p38, %p39
      %p42 = scmp.ne.s32.totalorder %s25, %s41
      %p43 = scmp.eq.s32.totalorder %s15, 0
      %p44 = por %p42, %p43
      %s45 = sshrl.u32 %s9, 3
      %s46 = sshrl.u32 %s16, 3
      %s47 = ssub.s32 %s45, %s46
      %p48 = scmp.eq.s32.totalorder %s47, 0
      %s50 = sadd.s32 %s49, 1
      %s51 = scalar_select %p48, %s49, %s50
      %p54 = pneg %p48
      %p55 = scmp.eq.s32.totalorder %s9, 1
      %p56 = por %p54, %p55
      %p57 = scmp.ne.s32.totalorder %s49, %s52
      %p58 = scmp.eq.s32.totalorder %s9, 0
      %p59 = por %p57, %p58
      %p60 = scmp.ne.s32.totalorder %s49, %s52
      %p61 = scmp.eq.s32.totalorder %s14, 1
      %p62 = por %p60, %p61
      %p63 = scmp.ne.s32.totalorder %s52, %s53
      %p64 = scmp.eq.s32.totalorder %s14, 0
      %p65 = por %p63, %p64
      %p66 = scmp.ne.s32.totalorder %s52, %s53
      %p67 = scmp.eq.s32.totalorder %s15, 1
      %p68 = por %p66, %p67
      %p70 = scmp.ne.s32.totalorder %s53, %s69
      %p71 = scmp.eq.s32.totalorder %s15, 0
      %p72 = por %p70, %p71
      %p73 = scmp.le.s32.totalorder 1, %s9
      %p74 = scmp.lt.s32.totalorder %s9, 3
      %p75 = pnand %p73, %p74
      %p76 = pneg %p75
      // Predicated region
      $region9: #{custom-call.11} parent=5 // pred_check
        _
      $region10: #{custom-call.11} parent=5 // pred_check_branch
        %78 = sbr.rel (%p75) target = $region12
      $region11: #{custom-call.11} parent=5 // pred_region
        %s79 = ssub.s32 %s9, 1
      $region12: #{custom-call.11} parent=5 // pred_fallthru
        _
      %p80 = scmp.lt.s32.totalorder %s9, 2
      // Predicated region
      $region13: #{custom-call.11} parent=5 // pred_check
        %p81 = pneg %p80
      $region14: #{custom-call.11} parent=5 // pred_check_branch
        %83 = sbr.rel (%p81) target = $region16
      $region15: #{custom-call.11} parent=5 // pred_region
        %s84 = sand.u32 %s9, 1
        %s85 = sand.u32 %s9, 1
        %s86 = smul.addr %s85, 8
        %s87 = scalar_lea.vmem [#allocation0], %s86
        %s88 = smul.addr %s9, 8
        %s89 = scalar_lea.vmem %s0, %s88
        // Predicated region
        $region17: #{custom-call.11} parent=15 // pred_check
          _
        $region18: #{custom-call.11} parent=15 // pred_check_branch
          %91 = sbr.rel (0) target = $region20
        $region19: #{custom-call.11} parent=15 // pred_region
          // Predicated region
          $region21: #{custom-call.11} parent=19 // pred_check
            _
          $region22: #{custom-call.11} parent=19 // pred_check_branch
            %93 = sbr.rel (0) target = $region24
          $region23: #{custom-call.11} parent=19 // pred_region
            // Predicated region
            $region36: #{custom-call.11} parent=23 // pred_check
              _
            $region37: #{custom-call.11} parent=23 // pred_check_branch
              %109 = sbr.rel (0) target = $region39
            $region38: #{custom-call.11} parent=23 // pred_region
              loop: start=0, step=1, limit=1
              $region40: #{custom-call.11} parent=38 // loop_pre_header
                _
              $region41: #{custom-call.11} parent=38 // loop_header
                %s111 = sphi 0, %s115
                %p112 = scmp.ge.s32.totalorder %s111, 1
                %s116 = sphi %s89, %s89
                %s117 = sphi %s87, %s87
              $region42: #{custom-call.11} parent=38 // loop_header_branch
                %114 = sbr.rel (%p112) target = $region46
              $region43: #{custom-call.11} parent=38 // loop_body
                %v118 = vld [vmem:[%s116] sm:$0xff]
                %119 = vst [vmem:[%s117] sm:$0xff] %v118
              $region44: #{custom-call.11} parent=38 // loop_footer
                %s115 = sadd.s32 1, %s111
              $region45: #{custom-call.11} parent=38 // loop_footer_branch
                %110 = sbr.rel target = $region41
              $region46: #{custom-call.11} parent=38 // loop_exit
                _
            $region39: #{custom-call.11} parent=23 // pred_fallthru
              _
            // Predicated region
            $region47: #{custom-call.11} parent=23 // pred_check
              _
            $region48: #{custom-call.11} parent=23 // pred_check_branch
              %121 = sbr.rel target = $region50
            $region49: #{custom-call.11} parent=23 // pred_region
              _
            $region50: #{custom-call.11} parent=23 // pred_fallthru
              _
          $region24: #{custom-call.11} parent=19 // pred_fallthru
            _
          // Predicated region
          $region25: #{custom-call.11} parent=19 // pred_check
            _
          $region26: #{custom-call.11} parent=19 // pred_check_branch
            %95 = sbr.rel target = $region28
          $region27: #{custom-call.11} parent=19 // pred_region
            %s97 = ssub.s32 256, 1
            loop: start=0, step=1, limit=1
            $region29: #{custom-call.11} parent=27 // loop_pre_header
              _
            $region30: #{custom-call.11} parent=27 // loop_header
              %s99 = sphi 0, %s103
              %p100 = scmp.ge.s32.totalorder %s99, 1
              %s104 = sphi %s89, %s89
              %s105 = sphi %s87, %s87
            $region31: #{custom-call.11} parent=27 // loop_header_branch
              %102 = sbr.rel (%p100) target = $region35
            $region32: #{custom-call.11} parent=27 // loop_body
              %v106 = vld [vmem:[%s104] sm:%s97]
              %107 = vst [vmem:[%s105] sm:%s97] %v106
            $region33: #{custom-call.11} parent=27 // loop_footer
              %s103 = sadd.s32 1, %s99
            $region34: #{custom-call.11} parent=27 // loop_footer_branch
              %98 = sbr.rel target = $region30
            $region35: #{custom-call.11} parent=27 // loop_exit
              _
          $region28: #{custom-call.11} parent=19 // pred_fallthru
            _
        $region20: #{custom-call.11} parent=15 // pred_fallthru
          _
        %122 = vnop
      $region16: #{custom-call.11} parent=5 // pred_fallthru
        _
      %p123 = scmp.le.s32.totalorder 1, %s9
      %p124 = scmp.lt.s32.totalorder %s9, 3
      %p125 = pnand %p123, %p124
      %p126 = pneg %p125
      // Predicated region
      $region51: #{custom-call.11} parent=5 // pred_check
        _
      $region52: #{custom-call.11} parent=5 // pred_check_branch
        %128 = sbr.rel (%p125) target = $region54
      $region53: #{custom-call.11} parent=5 // pred_region
        #allocation7 [shape = 's32[8,128]{1,0}', space=vmem, size = 0x1000, scoped, tag = 'scratch for permutations']
        %s129 = ssub.s32 %s9, 1
        %s130 = sand.u32 %s14, 1
        %s131 = sand.u32 %s14, 1
        %s132 = smul.addr %s131, 8
        %s133 = scalar_lea.vmem [#allocation0], %s132
        %s134 = sand.u32 %s14, 1
        %s135 = sand.u32 %s14, 1
        %s136 = smul.addr %s135, 8
        %s137 = scalar_lea.vmem [#allocation0], %s136
        %s138 = sand.u32 %s14, 1
        %s139 = sand.u32 %s14, 1
        %s140 = smul.addr %s139, 8
        %s141 = scalar_lea.vmem [#allocation1], %s140
        %p142 = pneg %p37
        %p143 = pneg %p34
        %s144 = sand.u32 %s24, 1
        %s145 = scalar_lea.sflag [#allocation4], %s144
        %s146 = sand.u32 %s24, 1
        %s147 = smul.addr %s146, 2
        %s148 = scalar_lea.vmem [#allocation3], %s147
        %p149 = pneg %p65
        %p150 = pneg %p62
        %s151 = sand.u32 %s52, 1
        %s152 = sand.u32 %s52, 1
        %s153 = smul.addr %s152, 2
        %s154 = scalar_lea.vmem [#allocation6], %s153
        %s155 = sshrl.u32 %s14, 3
        %s156 = sshrl.u32 %s14, 3
        %v157 = vld [vmem:[%s133] sm:$0xff]
        %158 = vst [vmem:[%s141] sm:$0xff] %v157
        %s159 = sand.u32 %s14, 7
        %s160 = scalar_lea.vmem [#allocation2], %s159
        %s161 = sand.u32 %s14, 7
        %s162 = scalar_lea.vmem [#allocation5], %s161
        %163 = vst [vmem:[%s160] sm:$0x1] 0
        %v164 = vlaneseq
        %v165 = vshrl.u32 %v164, 7
        %v166 = vmov %v165
        %168 = vst [vmem:[#allocation7] sm:$0xff] %v166
        loop: start=0, step=1, limit=8
        $region56: #{custom-call.11} parent=53 // loop_pre_header
          _
        $region57: #{custom-call.11} parent=53 // loop_header
          %s170 = sphi 0, %s174
          %p171 = scmp.ge.s32.totalorder %s170, 8
        $region58: #{custom-call.11} parent=53 // loop_header_branch
          %173 = sbr.rel (%p171) target = $region62
        $region59: #{custom-call.11} parent=53 // loop_body
          %v175 = vstv %s170
          %v176 = vlaneseq
          %v177 = vshrl.u32 %v176, 7
          %v178 = vmov %v177
          %v179 = vld [vmem:[%s141] sm:$0xff]
          %v180 = vand.u32 2147483647, %v179
          %v182 = vstv %s170
          %vm183 = vcmp.ge.s32.totalorder %v178, %v182
          %vm184 = vcmp.lt.s32.totalorder %v178, 8
          %vm185 = vmand %vm183, %vm184
          %vm186 = vcmp.lt.f32.partialorder -inf, %v180
          %vm187 = vmand %vm185, %vm186
          %v188 = vsel %vm187, %v178, %v175
          %v189 = vsel %vm187, %v180, -inf
          %v190 = vrot.slane %v189, 1
          %v191 = vrot.slane %v188, 1
          %vm192 = vcmp.ge.f32.partialorder %v190, %v189
          %v193 = vsel %vm192, %v190, %v189
          %v194 = vsel %vm192, %v191, %v188
          %v195 = vrot.slane %v190, 1
          %v196 = vrot.slane %v191, 1
          %vm197 = vcmp.ge.f32.partialorder %v195, %v193
          %v198 = vsel %vm197, %v195, %v193
          %v199 = vsel %vm197, %v196, %v194
          %v200 = vrot.slane %v195, 1
          %v201 = vrot.slane %v196, 1
          %vm202 = vcmp.ge.f32.partialorder %v200, %v198
          %v203 = vsel %vm202, %v200, %v198
          %v204 = vsel %vm202, %v201, %v199
          %v205 = vrot.slane %v200, 1
          %v206 = vrot.slane %v201, 1
          %vm207 = vcmp.ge.f32.partialorder %v205, %v203
          %v208 = vsel %vm207, %v205, %v203
          %v209 = vsel %vm207, %v206, %v204
          %v210 = vrot.slane %v205, 1
          %v211 = vrot.slane %v206, 1
          %vm212 = vcmp.ge.f32.partialorder %v210, %v208
          %v213 = vsel %vm212, %v210, %v208
          %v214 = vsel %vm212, %v211, %v209
          %v215 = vrot.slane %v210, 1
          %v216 = vrot.slane %v211, 1
          %vm217 = vcmp.ge.f32.partialorder %v215, %v213
          %v218 = vsel %vm217, %v215, %v213
          %v219 = vsel %vm217, %v216, %v214
          %v220 = vrot.slane %v215, 1
          %v221 = vrot.slane %v216, 1
          %vm222 = vcmp.ge.f32.partialorder %v220, %v218
          %v223 = vsel %vm222, %v220, %v218
          %v224 = vsel %vm222, %v221, %v219
          %s225 = ssub.s32 128, %s170
          %226 = vrot.lane.b32.xlu0 %v224, %s225
          %v227 = vpop.permute.xlu0 %226
          %s228 = vtos %v227
          %v229 = vstv %s170
          %v230 = vlaneseq
          %v231 = vand.u32 %v230, 127
          %vm232 = vcmp.eq.s32.totalorder %v231, %v229
          %v233 = vstv %s228
          %v234 = vld [vmem:[%s160] ss:$0 sm:$0xff]
          %v235 = vsel %vm232, %v233, %v234
          %236 = vst [vmem:[%s160] sm:$0x1] %v235
          %s237 = scalar_lea.vmem %s141, %s170 [#allocation1]
          %s238 = scalar_lea.vmem %s141, %s228 [#allocation1]
          %v239 = vld [vmem:[%s237] ss:$0 sm:$0xff]
          %v240 = vld [vmem:[%s238] ss:$0 sm:$0xff]
          %241 = vst [vmem:[%s238] sm:$0x1] %v239
          %242 = vst [vmem:[%s237] sm:$0x1] %v240
          %s243 = scalar_lea.vmem [#allocation7], %s170
          %s244 = scalar_lea.vmem [#allocation7], %s228
          %v245 = vld [vmem:[%s243] ss:$0 sm:$0xff]
          %v246 = vld [vmem:[%s244] ss:$0 sm:$0xff]
          %247 = vst [vmem:[%s244] sm:$0x1] %v245
          %248 = vst [vmem:[%s243] sm:$0x1] %v246
          %vm249 = vcmp.ne.f32.partialorder %v240, 0.0
          %vm250 = vmand %vm232, %vm249
          %v251 = vsel %vm250, %v240, 1.0
          %v252 = vlaneseq
          %v253 = vand.u32 %v252, 127
          %v254 = vstv %s170
          %vm255 = vcmp.gt.s32.totalorder %v253, %v254
          %v256 = vsel %vm255, %v240, 0.0
          %v257 = vlaneseq
          %v258 = vshrl.u32 %v257, 7
          %v259 = vmov %v258
          %v260 = vld [vmem:[%s141] sm:$0xff]
          %v262 = vstv %s170
          %vm263 = vcmp.gt.s32.totalorder %v259, %v262
          %v264 = vsel %vm263, %v251, 1.0
          %v265 = vrcp.pop %v264
          %v266 = vmul.f32 %v264, %v265
          %v267 = vsub.f32 1.0, %v266
          %v268 = vmul.f32 %v265, %v267
          %v269 = vadd.f32 %v265, %v268
          %vm270 = vweird.f32 %v264
          %vm271 = vweird.f32 %v265
          %vm272 = vmor %vm270, %vm271
          %v273 = vsel %vm272, %v265, %v269
          %v274 = vand.u32 2147483647, %v264
          %vm275 = vcmp.eq.f32.partialorder %v274, 8.507059e+37
          %v276 = vand.u32 %v264, 2147483648
          %v277 = vor.u32 1.1754944e-38, %v276
          %v278 = vsel %vm275, %v277, %v273
          %v279 = vmul.f32 %v260, %v278
          %vm280 = vmand %vm263, %vm232
          %v281 = vsel %vm280, %v279, 0.0
          %282 = vadd.xlane.f32.xlu0 %v281
          %v283 = vpop.xlane.xlu0 %282
          %v284 = vmul.f32 %v283, %v256
          %v285 = vsub.f32 %v279, %v284
          %286 = vst [vmem:[%s141] sm:$0xff] %v285
        $region60: #{custom-call.11} parent=53 // loop_footer
          %s174 = sadd.s32 1, %s170
        $region61: #{custom-call.11} parent=53 // loop_footer_branch
          %169 = sbr.rel target = $region57
        $region62: #{custom-call.11} parent=53 // loop_exit
          _
        %v287 = vld [vmem:[#allocation7] sm:$0xff]
        %s288 = scalar_lea.vmem [#allocation7], 8
        %s289 = scalar_lea.vmem [#allocation7], 16
        %s290 = scalar_lea.vmem [#allocation7], 24
        %s291 = scalar_lea.vmem [#allocation7], 32
        %s292 = scalar_lea.vmem [#allocation7], 40
        %s293 = scalar_lea.vmem [#allocation7], 48
        %s294 = scalar_lea.vmem [#allocation7], 56
        %s295 = scalar_lea.vmem [#allocation7], 64
        %s296 = scalar_lea.vmem [#allocation7], 72
        %s297 = scalar_lea.vmem [#allocation7], 80
        %s298 = scalar_lea.vmem [#allocation7], 88
        %s299 = scalar_lea.vmem [#allocation7], 96
        %s300 = scalar_lea.vmem [#allocation7], 104
        %s301 = scalar_lea.vmem [#allocation7], 112
        %s302 = scalar_lea.vmem [#allocation7], 120
        %303 = vxpose.xlu0.b32.start [1/16] %v287, 128
        %304 = vxpose.xlu0.b32.cont [2/16] 0, 128
        %305 = vxpose.xlu0.b32.cont [3/16] 0, 128
        %306 = vxpose.xlu0.b32.cont [4/16] 0, 128
        %307 = vxpose.xlu0.b32.cont [5/16] 0, 128
        %308 = vxpose.xlu0.b32.cont [6/16] 0, 128
        %309 = vxpose.xlu0.b32.cont [7/16] 0, 128
        %310 = vxpose.xlu0.b32.cont [8/16] 0, 128
        %311 = vxpose.xlu0.b32.cont [9/16] 0, 128
        %312 = vxpose.xlu0.b32.cont [10/16] 0, 128
        %313 = vxpose.xlu0.b32.cont [11/16] 0, 128
        %314 = vxpose.xlu0.b32.cont [12/16] 0, 128
        %315 = vxpose.xlu0.b32.cont [13/16] 0, 128
        %316 = vxpose.xlu0.b32.cont [14/16] 0, 128
        %317 = vxpose.xlu0.b32.cont [15/16] 0, 128
        %318 = vxpose.xlu0.b32.end [16/16] 0, 128
        %v319 = vpop.trf.xlu0
        %v320 = vpop.trf.xlu0
        %v321 = vpop.trf.xlu0
        %v322 = vpop.trf.xlu0
        %v323 = vpop.trf.xlu0
        %v324 = vpop.trf.xlu0
        %v325 = vpop.trf.xlu0
        %v326 = vpop.trf.xlu0
        %v327 = vpop.trf.xlu0
        %v328 = vpop.trf.xlu0
        %v329 = vpop.trf.xlu0
        %v330 = vpop.trf.xlu0
        %v331 = vpop.trf.xlu0
        %v332 = vpop.trf.xlu0
        %v333 = vpop.trf.xlu0
        %v334 = vpop.trf.xlu0
        %335 = vst [vmem:[%s162] sm:$0x1] %v319
        %s337 = ssub.s32 4, 1
        %v338 = vld [vmem:[#allocation2] sm:%s337]
        %s340 = ssub.s32 4, 1
        %341 = vst [vmem:[%s148] sm:%s340] %v338
        %s343 = ssub.s32 4, 1
        %v344 = vld [vmem:[#allocation5] sm:%s343]
        %s346 = ssub.s32 4, 1
        %347 = vst [vmem:[%s154] sm:%s346] %v344
        %s348 = sand.u32 %s14, 1
        %s349 = sand.u32 %s14, 1
        %s350 = smul.addr %s349, 8
        %s351 = scalar_lea.vmem [#allocation1], %s350
        %s352 = sand.u32 %s24, 1
        %s353 = scalar_lea.sflag [#allocation4], %s352
        %s354 = sand.u32 %s24, 1
        %s355 = smul.addr %s354, 2
        %s356 = scalar_lea.vmem [#allocation3], %s355
        %s357 = sand.u32 %s52, 1
        %s358 = sand.u32 %s52, 1
        %s359 = smul.addr %s358, 2
        %s360 = scalar_lea.vmem [#allocation6], %s359
        %s361 = smul.addr %s14, 8
        %s362 = scalar_lea.vmem %s1, %s361
        // Predicated region
        $region63: #{custom-call.11} parent=53 // pred_check
          _
        $region64: #{custom-call.11} parent=53 // pred_check_branch
          %364 = sbr.rel (0) target = $region66
        $region65: #{custom-call.11} parent=53 // pred_region
          // Predicated region
          $region67: #{custom-call.11} parent=65 // pred_check
            _
          $region68: #{custom-call.11} parent=65 // pred_check_branch
            %366 = sbr.rel (0) target = $region70
          $region69: #{custom-call.11} parent=65 // pred_region
            // Predicated region
            $region82: #{custom-call.11} parent=69 // pred_check
              _
            $region83: #{custom-call.11} parent=69 // pred_check_branch
              %382 = sbr.rel (0) target = $region85
            $region84: #{custom-call.11} parent=69 // pred_region
              loop: start=0, step=1, limit=1
              $region86: #{custom-call.11} parent=84 // loop_pre_header
                _
              $region87: #{custom-call.11} parent=84 // loop_header
                %s384 = sphi 0, %s388
                %p385 = scmp.ge.s32.totalorder %s384, 1
                %s389 = sphi %s351, %s351
                %s390 = sphi %s362, %s362
              $region88: #{custom-call.11} parent=84 // loop_header_branch
                %387 = sbr.rel (%p385) target = $region92
              $region89: #{custom-call.11} parent=84 // loop_body
                %v391 = vld [vmem:[%s389] sm:$0xff]
                %392 = vst [vmem:[%s390] sm:$0xff] %v391
              $region90: #{custom-call.11} parent=84 // loop_footer
                %s388 = sadd.s32 1, %s384
              $region91: #{custom-call.11} parent=84 // loop_footer_branch
                %383 = sbr.rel target = $region87
              $region92: #{custom-call.11} parent=84 // loop_exit
                _
            $region85: #{custom-call.11} parent=69 // pred_fallthru
              _
            // Predicated region
            $region93: #{custom-call.11} parent=69 // pred_check
              _
            $region94: #{custom-call.11} parent=69 // pred_check_branch
              %394 = sbr.rel target = $region96
            $region95: #{custom-call.11} parent=69 // pred_region
              _
            $region96: #{custom-call.11} parent=69 // pred_fallthru
              _
          $region70: #{custom-call.11} parent=65 // pred_fallthru
            _
          // Predicated region
          $region71: #{custom-call.11} parent=65 // pred_check
            _
          $region72: #{custom-call.11} parent=65 // pred_check_branch
            %368 = sbr.rel target = $region74
          $region73: #{custom-call.11} parent=65 // pred_region
            %s370 = ssub.s32 256, 1
            loop: start=0, step=1, limit=1
            $region75: #{custom-call.11} parent=73 // loop_pre_header
              _
            $region76: #{custom-call.11} parent=73 // loop_header
              %s372 = sphi 0, %s376
              %p373 = scmp.ge.s32.totalorder %s372, 1
              %s377 = sphi %s351, %s351
              %s378 = sphi %s362, %s362
            $region77: #{custom-call.11} parent=73 // loop_header_branch
              %375 = sbr.rel (%p373) target = $region81
            $region78: #{custom-call.11} parent=73 // loop_body
              %v379 = vld [vmem:[%s377] sm:%s370]
              %380 = vst [vmem:[%s378] sm:%s370] %v379
            $region79: #{custom-call.11} parent=73 // loop_footer
              %s376 = sadd.s32 1, %s372
            $region80: #{custom-call.11} parent=73 // loop_footer_branch
              %371 = sbr.rel target = $region76
            $region81: #{custom-call.11} parent=73 // loop_exit
              _
          $region74: #{custom-call.11} parent=65 // pred_fallthru
            _
        $region66: #{custom-call.11} parent=53 // pred_fallthru
          _
        %395 = vnop
        // Predicated region
        $region97: #{custom-call.11} parent=53 // pred_check
          %p396 = pneg %p34
        $region98: #{custom-call.11} parent=53 // pred_check_branch
          %398 = sbr.rel (%p396) target = $region100
        $region99: #{custom-call.11} parent=53 // pred_region
          %s399 = sshrl.u32 %s14, 3
          %401 = vsyncadd %s353, 0
          %s402 = smul.addr %s399, 2
          %s403 = scalar_lea.hbm %s2, %s402
          %s405 = sshll.u32 %s356, 4
          %s406 = int_to_ptr.vmem [resolvable:$true] %s405
          %s407 = sshll.u32 %s403, 4
          %s408 = int_to_ptr.hbm [resolvable:$true] %s407
          %410 = dma.vmem_to_hbm [thread:$0]  %s406, 32, %s408, %s353
        $region100: #{custom-call.11} parent=53 // pred_fallthru
          _
        // Predicated region
        $region101: #{custom-call.11} parent=53 // pred_check
          %p411 = pneg %p62
        $region102: #{custom-call.11} parent=53 // pred_check_branch
          %413 = sbr.rel (%p411) target = $region104
        $region103: #{custom-call.11} parent=53 // pred_region
          %s414 = sshrl.u32 %s14, 3
          %s415 = smul.addr %s414, 2
          %s416 = scalar_lea.vmem %s3, %s415
          // Predicated region
          $region105: #{custom-call.11} parent=103 // pred_check
            _
          $region106: #{custom-call.11} parent=103 // pred_check_branch
            %418 = sbr.rel (0) target = $region108
          $region107: #{custom-call.11} parent=103 // pred_region
            // Predicated region
            $region109: #{custom-call.11} parent=107 // pred_check
              _
            $region110: #{custom-call.11} parent=107 // pred_check_branch
              %420 = sbr.rel target = $region112
            $region111: #{custom-call.11} parent=107 // pred_region
              // Predicated region
              $region124: #{custom-call.11} parent=111 // pred_check
                _
              $region125: #{custom-call.11} parent=111 // pred_check_branch
                %436 = sbr.rel (0) target = $region127
              $region126: #{custom-call.11} parent=111 // pred_region
                %s438 = ssub.s32 4, 1
                loop: start=0, step=1, limit=1
                $region128: #{custom-call.11} parent=126 // loop_pre_header
                  _
                $region129: #{custom-call.11} parent=126 // loop_header
                  %s440 = sphi 0, %s444
                  %p441 = scmp.ge.s32.totalorder %s440, 1
                  %s445 = sphi %s360, %s360
                  %s446 = sphi %s416, %s416
                $region130: #{custom-call.11} parent=126 // loop_header_branch
                  %443 = sbr.rel (%p441) target = $region134
                $region131: #{custom-call.11} parent=126 // loop_body
                  %v447 = vld [vmem:[%s445] sm:%s438]
                  %448 = vst [vmem:[%s446] sm:%s438] %v447
                $region132: #{custom-call.11} parent=126 // loop_footer
                  %s444 = sadd.s32 1, %s440
                $region133: #{custom-call.11} parent=126 // loop_footer_branch
                  %439 = sbr.rel target = $region129
                $region134: #{custom-call.11} parent=126 // loop_exit
                  _
              $region127: #{custom-call.11} parent=111 // pred_fallthru
                _
            $region112: #{custom-call.11} parent=107 // pred_fallthru
              _
            // Predicated region
            $region113: #{custom-call.11} parent=107 // pred_check
              _
            $region114: #{custom-call.11} parent=107 // pred_check_branch
              %422 = sbr.rel (0) target = $region116
            $region115: #{custom-call.11} parent=107 // pred_region
              %s424 = ssub.s32 4, 1
              loop: start=0, step=1, limit=1
              $region117: #{custom-call.11} parent=115 // loop_pre_header
                _
              $region118: #{custom-call.11} parent=115 // loop_header
                %s426 = sphi 0, %s430
                %p427 = scmp.ge.s32.totalorder %s426, 1
                %s431 = sphi %s360, %s360
                %s432 = sphi %s416, %s416
              $region119: #{custom-call.11} parent=115 // loop_header_branch
                %429 = sbr.rel (%p427) target = $region123
              $region120: #{custom-call.11} parent=115 // loop_body
                %v433 = vld [vmem:[%s431] sm:%s424]
                %434 = vst [vmem:[%s432] sm:%s424] %v433
              $region121: #{custom-call.11} parent=115 // loop_footer
                %s430 = sadd.s32 1, %s426
              $region122: #{custom-call.11} parent=115 // loop_footer_branch
                %425 = sbr.rel target = $region118
              $region123: #{custom-call.11} parent=115 // loop_exit
                _
            $region116: #{custom-call.11} parent=107 // pred_fallthru
              _
          $region108: #{custom-call.11} parent=103 // pred_fallthru
            _
          %449 = vnop
        $region104: #{custom-call.11} parent=53 // pred_fallthru
          _
      $region54: #{custom-call.11} parent=5 // pred_fallthru
        _
      %p450 = scmp.le.s32.totalorder 2, %s9
      // Predicated region
      $region135: #{custom-call.11} parent=5 // pred_check
        %p451 = pneg %p450
      $region136: #{custom-call.11} parent=5 // pred_check_branch
        %453 = sbr.rel (%p451) target = $region138
      $region137: #{custom-call.11} parent=5 // pred_region
        %s454 = ssub.s32 %s9, 2
        %s455 = sand.u32 %s15, 1
        %s456 = sand.u32 %s15, 1
        %s457 = smul.addr %s456, 8
        %s458 = scalar_lea.vmem [#allocation1], %s457
        // Predicated region
        $region139: #{custom-call.11} parent=137 // pred_check
          %p459 = pneg %p40
        $region140: #{custom-call.11} parent=137 // pred_check_branch
          %461 = sbr.rel (%p459) target = $region142
        $region141: #{custom-call.11} parent=137 // pred_region
          %s462 = sand.u32 %s25, 1
          %s463 = scalar_lea.sflag [#allocation4], %s462
          %s464 = sand.u32 %s25, 1
          %s465 = smul.addr %s464, 2
          %s466 = scalar_lea.vmem [#allocation3], %s465
          %468 = dma.done %s463, 32
        $region142: #{custom-call.11} parent=137 // pred_fallthru
          _
        // Predicated region
        $region143: #{custom-call.11} parent=137 // pred_check
          %p469 = pneg %p68
        $region144: #{custom-call.11} parent=137 // pred_check_branch
          %471 = sbr.rel (%p469) target = $region146
        $region145: #{custom-call.11} parent=137 // pred_region
          %s472 = sand.u32 %s53, 1
          %s473 = sand.u32 %s53, 1
          %s474 = smul.addr %s473, 2
          %s475 = scalar_lea.vmem [#allocation6], %s474
        $region146: #{custom-call.11} parent=137 // pred_fallthru
          _
      $region138: #{custom-call.11} parent=5 // pred_fallthru
        _
    $region6: #{custom-call.11} parent=1 // loop_footer
      %s13 = sadd.s32 1, %s9
    $region7: #{custom-call.11} parent=1 // loop_footer_branch
      %8 = sbr.rel target = $region3
    $region8: #{custom-call.11} parent=1 // loop_exit
      _
    %476 = vsyncpa [#allocation4], 1
    %s477 = scalar_lea.sflag [#allocation4], 1
    %478 = vsyncpa %s477, 1

// kernel: custom-call.13
$region0: #{custom-call.13}
  %s0 = inlined_call_operand.vmem [shape: f32[2,1,8,8], index: 0, kind: input, shape index: {}]
  %s1 = inlined_call_operand.vmem [shape: f32[2,1,8,8], index: 1, kind: output, shape index: {}]
  $region1: #{custom-call.13} parent=0
    #allocation0 [shape = 'u8[8192]{0}', space=vmem, size = 0x2000, scoped, tag = 'operand span for operand 0']
    #allocation1 [shape = 'u8[8192]{0}', space=vmem, size = 0x2000, scoped, tag = 'operand span for operand 1']
    loop: start=0, step=1, limit=4
    $region2: #{custom-call.13} parent=1 // loop_pre_header
      _
    $region3: #{custom-call.13} parent=1 // loop_header
      %s3 = sphi 0, %s7
      %p4 = scmp.ge.s32.totalorder %s3, 4
      %s10 = sphi 0, %s36
      %s11 = sphi 0, %s32
      %s12 = sphi 0, %s28
      %s13 = sphi 0, %s24
      %s14 = sphi 0, %s10
      %s15 = sphi 0, %s11
      %s16 = sphi 0, %s12
      %s17 = sphi 0, %s13
      %s18 = sphi 0, %s14
      %s19 = sphi 0, %s15
      %s20 = sphi 0, %s16
      %s21 = sphi 0, %s17
    $region4: #{custom-call.13} parent=1 // loop_header_branch
      %6 = sbr.rel (%p4) target = $region8
    $region5: #{custom-call.13} parent=1 // loop_body
      %s8 = ssub.s32 %s3, 1
      %s9 = ssub.s32 %s3, 2
      %s22 = sadd.s32 1, %s13
      %p23 = scmp.ge.s32.totalorder %s22, 1
      %s24 = scalar_select %p23, 0, %s22
      %s25 = sadd.s32 1, %s12
      %s26 = scalar_select %p23, %s25, %s12
      %p27 = scmp.ge.s32.totalorder %s26, 1
      %s28 = scalar_select %p27, 0, %s26
      %s29 = sadd.s32 1, %s11
      %s30 = scalar_select %p27, %s29, %s11
      %p31 = scmp.ge.s32.totalorder %s30, 1
      %s32 = scalar_select %p31, 0, %s30
      %s33 = sadd.s32 1, %s10
      %s34 = scalar_select %p31, %s33, %s10
      %p35 = scmp.ge.s32.totalorder %s34, 2
      %s36 = scalar_select %p35, 0, %s34
      %p37 = scmp.le.s32.totalorder 1, %s3
      %p38 = scmp.lt.s32.totalorder %s3, 3
      %p39 = pnand %p37, %p38
      %p40 = pneg %p39
      // Predicated region
      $region9: #{custom-call.13} parent=5 // pred_check
        _
      $region10: #{custom-call.13} parent=5 // pred_check_branch
        %42 = sbr.rel (%p39) target = $region12
      $region11: #{custom-call.13} parent=5 // pred_region
        %s43 = ssub.s32 %s3, 1
      $region12: #{custom-call.13} parent=5 // pred_fallthru
        _
      %p44 = scmp.lt.s32.totalorder %s3, 2
      // Predicated region
      $region13: #{custom-call.13} parent=5 // pred_check
        %p45 = pneg %p44
      $region14: #{custom-call.13} parent=5 // pred_check_branch
        %47 = sbr.rel (%p45) target = $region16
      $region15: #{custom-call.13} parent=5 // pred_region
        %s48 = sand.u32 %s3, 1
        %s49 = sand.u32 %s3, 1
        %s50 = smul.addr %s49, 8
        %s51 = scalar_lea.vmem [#allocation0], %s50
        %s52 = sadd.s32 %s13, %s12
        %s53 = sadd.s32 %s52, %s11
        %s54 = sadd.s32 %s53, %s10
        %s55 = smul.addr %s54, 8
        %s56 = scalar_lea.vmem %s0, %s55
        // Predicated region
        $region17: #{custom-call.13} parent=15 // pred_check
          _
        $region18: #{custom-call.13} parent=15 // pred_check_branch
          %58 = sbr.rel (0) target = $region20
        $region19: #{custom-call.13} parent=15 // pred_region
          // Predicated region
          $region21: #{custom-call.13} parent=19 // pred_check
            _
          $region22: #{custom-call.13} parent=19 // pred_check_branch
            %60 = sbr.rel (0) target = $region24
          $region23: #{custom-call.13} parent=19 // pred_region
            // Predicated region
            $region36: #{custom-call.13} parent=23 // pred_check
              _
            $region37: #{custom-call.13} parent=23 // pred_check_branch
              %76 = sbr.rel (0) target = $region39
            $region38: #{custom-call.13} parent=23 // pred_region
              loop: start=0, step=1, limit=1
              $region40: #{custom-call.13} parent=38 // loop_pre_header
                _
              $region41: #{custom-call.13} parent=38 // loop_header
                %s78 = sphi 0, %s82
                %p79 = scmp.ge.s32.totalorder %s78, 1
                %s83 = sphi %s56, %s56
                %s84 = sphi %s51, %s51
              $region42: #{custom-call.13} parent=38 // loop_header_branch
                %81 = sbr.rel (%p79) target = $region46
              $region43: #{custom-call.13} parent=38 // loop_body
                %v85 = vld [vmem:[%s83] sm:$0xff]
                %86 = vst [vmem:[%s84] sm:$0xff] %v85
              $region44: #{custom-call.13} parent=38 // loop_footer
                %s82 = sadd.s32 1, %s78
              $region45: #{custom-call.13} parent=38 // loop_footer_branch
                %77 = sbr.rel target = $region41
              $region46: #{custom-call.13} parent=38 // loop_exit
                _
            $region39: #{custom-call.13} parent=23 // pred_fallthru
              _
            // Predicated region
            $region47: #{custom-call.13} parent=23 // pred_check
              _
            $region48: #{custom-call.13} parent=23 // pred_check_branch
              %88 = sbr.rel target = $region50
            $region49: #{custom-call.13} parent=23 // pred_region
              _
            $region50: #{custom-call.13} parent=23 // pred_fallthru
              _
          $region24: #{custom-call.13} parent=19 // pred_fallthru
            _
          // Predicated region
          $region25: #{custom-call.13} parent=19 // pred_check
            _
          $region26: #{custom-call.13} parent=19 // pred_check_branch
            %62 = sbr.rel target = $region28
          $region27: #{custom-call.13} parent=19 // pred_region
            %s64 = ssub.s32 256, 1
            loop: start=0, step=1, limit=1
            $region29: #{custom-call.13} parent=27 // loop_pre_header
              _
            $region30: #{custom-call.13} parent=27 // loop_header
              %s66 = sphi 0, %s70
              %p67 = scmp.ge.s32.totalorder %s66, 1
              %s71 = sphi %s56, %s56
              %s72 = sphi %s51, %s51
            $region31: #{custom-call.13} parent=27 // loop_header_branch
              %69 = sbr.rel (%p67) target = $region35
            $region32: #{custom-call.13} parent=27 // loop_body
              %v73 = vld [vmem:[%s71] sm:%s64]
              %74 = vst [vmem:[%s72] sm:%s64] %v73
            $region33: #{custom-call.13} parent=27 // loop_footer
              %s70 = sadd.s32 1, %s66
            $region34: #{custom-call.13} parent=27 // loop_footer_branch
              %65 = sbr.rel target = $region30
            $region35: #{custom-call.13} parent=27 // loop_exit
              _
          $region28: #{custom-call.13} parent=19 // pred_fallthru
            _
        $region20: #{custom-call.13} parent=15 // pred_fallthru
          _
        %89 = vnop
      $region16: #{custom-call.13} parent=5 // pred_fallthru
        _
      %p90 = scmp.le.s32.totalorder 1, %s3
      %p91 = scmp.lt.s32.totalorder %s3, 3
      %p92 = pnand %p90, %p91
      %p93 = pneg %p92
      // Predicated region
      $region51: #{custom-call.13} parent=5 // pred_check
        _
      $region52: #{custom-call.13} parent=5 // pred_check_branch
        %95 = sbr.rel (%p92) target = $region54
      $region53: #{custom-call.13} parent=5 // pred_region
        #allocation2 [shape = 'f32[8,8]{1,0}', space=vmem, size = 0x1000, scoped, tag = 'rescaled input a']
        %s96 = ssub.s32 %s3, 1
        %s97 = sand.u32 %s8, 1
        %s98 = sand.u32 %s8, 1
        %s99 = smul.addr %s98, 8
        %s100 = scalar_lea.vmem [#allocation0], %s99
        %s101 = sand.u32 %s8, 1
        %s102 = sand.u32 %s8, 1
        %s103 = smul.addr %s102, 8
        %s104 = scalar_lea.vmem [#allocation0], %s103
        %s105 = sand.u32 %s8, 1
        %s106 = sand.u32 %s8, 1
        %s107 = smul.addr %s106, 8
        %s108 = scalar_lea.vmem [#allocation1], %s107
        %v109 = vlaneseq
        %v110 = vand.u32 %v109, 127
        %vm111 = vcmp.lt.s32.totalorder %v110, 8
        %v112 = vlaneseq
        %v113 = vshrl.u32 %v112, 7
        %vm115 = vcmp.eq.s32.totalorder %v113, %v110
        %v116 = vld [vmem:[%s100] sm:$0xff]
        %v117 = vsel %vm115, %v116, 0.0
        %118 = vadd.xlane.f32.xlu0 %v117
        %v119 = vpop.xlane.xlu0 %118
        %vm120 = vcmp.ge.s32.totalorder %v113, %v110
        %vm121 = vmand %vm120, %vm111
        %v122 = vsel %vm121, %v116, 0.0
        %v123 = vrcp.pop %v119
        %v124 = vmul.f32 %v119, %v123
        %v125 = vsub.f32 1.0, %v124
        %v126 = vmul.f32 %v123, %v125
        %v127 = vadd.f32 %v123, %v126
        %vm128 = vweird.f32 %v119
        %vm129 = vweird.f32 %v123
        %vm130 = vmor %vm128, %vm129
        %v131 = vsel %vm130, %v123, %v127
        %v132 = vand.u32 2147483647, %v119
        %vm133 = vcmp.eq.f32.partialorder %v132, 8.507059e+37
        %v134 = vand.u32 %v119, 2147483648
        %v135 = vor.u32 1.1754944e-38, %v134
        %v136 = vsel %vm133, %v135, %v131
        %v137 = vmul.f32 %v122, %v136
        %138 = vst [vmem:[#allocation2] sm:$0xff] %v137
        %v139 = vlaneseq
        %v140 = vand.u32 %v139, 127
        %v141 = vlaneseq
        %v142 = vshrl.u32 %v141, 7
        %vm144 = vcmp.eq.s32.totalorder %v140, %v142
        %v145 = vlaneseq
        %v146 = vand.u32 %v145, 127
        %vm147 = vcmp.eq.s32.totalorder %v146, 0
        %v148 = vsel %vm147, 1.0, -1.0
        %v149 = vsel %vm144, %v148, 0.0
        %s150 = scalar_lea.vmem [#allocation2], 1
        %v151 = vld [vmem:[%s150] ss:$0 sm:$0xff]
        %v152 = vxor.u32 %v151, 2147483648
        %v153 = vlaneseq
        %v154 = vand.u32 %v153, 127
        %vm155 = vcmp.eq.s32.totalorder %v154, 1
        %v156 = vmul.f32 %v152, %v149
        %157 = vadd.xlane.f32.xlu0 %v156
        %v158 = vpop.xlane.xlu0 %157
        %v159 = vsel %vm155, %v158, %v149
        %s160 = scalar_lea.vmem [#allocation2], 2
        %v161 = vld [vmem:[%s160] ss:$0 sm:$0xff]
        %v162 = vxor.u32 %v161, 2147483648
        %v163 = vlaneseq
        %v164 = vand.u32 %v163, 127
        %vm165 = vcmp.eq.s32.totalorder %v164, 2
        %v166 = vmul.f32 %v162, %v159
        %167 = vadd.xlane.f32.xlu0 %v166
        %v168 = vpop.xlane.xlu0 %167
        %v169 = vsel %vm165, %v168, %v159
        %s170 = scalar_lea.vmem [#allocation2], 3
        %v171 = vld [vmem:[%s170] ss:$0 sm:$0xff]
        %v172 = vxor.u32 %v171, 2147483648
        %v173 = vlaneseq
        %v174 = vand.u32 %v173, 127
        %vm175 = vcmp.eq.s32.totalorder %v174, 3
        %v176 = vmul.f32 %v172, %v169
        %177 = vadd.xlane.f32.xlu0 %v176
        %v178 = vpop.xlane.xlu0 %177
        %v179 = vsel %vm175, %v178, %v169
        %s180 = scalar_lea.vmem [#allocation2], 4
        %v181 = vld [vmem:[%s180] ss:$0 sm:$0xff]
        %v182 = vxor.u32 %v181, 2147483648
        %v183 = vlaneseq
        %v184 = vand.u32 %v183, 127
        %vm185 = vcmp.eq.s32.totalorder %v184, 4
        %v186 = vmul.f32 %v182, %v179
        %187 = vadd.xlane.f32.xlu0 %v186
        %v188 = vpop.xlane.xlu0 %187
        %v189 = vsel %vm185, %v188, %v179
        %s190 = scalar_lea.vmem [#allocation2], 5
        %v191 = vld [vmem:[%s190] ss:$0 sm:$0xff]
        %v192 = vxor.u32 %v191, 2147483648
        %v193 = vlaneseq
        %v194 = vand.u32 %v193, 127
        %vm195 = vcmp.eq.s32.totalorder %v194, 5
        %v196 = vmul.f32 %v192, %v189
        %197 = vadd.xlane.f32.xlu0 %v196
        %v198 = vpop.xlane.xlu0 %197
        %v199 = vsel %vm195, %v198, %v189
        %s200 = scalar_lea.vmem [#allocation2], 6
        %v201 = vld [vmem:[%s200] ss:$0 sm:$0xff]
        %v202 = vxor.u32 %v201, 2147483648
        %v203 = vlaneseq
        %v204 = vand.u32 %v203, 127
        %vm205 = vcmp.eq.s32.totalorder %v204, 6
        %v206 = vmul.f32 %v202, %v199
        %207 = vadd.xlane.f32.xlu0 %v206
        %v208 = vpop.xlane.xlu0 %207
        %v209 = vsel %vm205, %v208, %v199
        %s210 = scalar_lea.vmem [#allocation2], 7
        %v211 = vld [vmem:[%s210] ss:$0 sm:$0xff]
        %v212 = vxor.u32 %v211, 2147483648
        %v213 = vlaneseq
        %v214 = vand.u32 %v213, 127
        %vm215 = vcmp.eq.s32.totalorder %v214, 7
        %v216 = vmul.f32 %v212, %v209
        %217 = vadd.xlane.f32.xlu0 %v216
        %v218 = vpop.xlane.xlu0 %217
        %v219 = vsel %vm215, %v218, %v209
        %v220 = vrcp.pop %v119
        %v221 = vmul.f32 %v119, %v220
        %v222 = vsub.f32 1.0, %v221
        %v223 = vmul.f32 %v220, %v222
        %v224 = vadd.f32 %v220, %v223
        %vm225 = vweird.f32 %v119
        %vm226 = vweird.f32 %v220
        %vm227 = vmor %vm225, %vm226
        %v228 = vsel %vm227, %v220, %v224
        %v229 = vand.u32 2147483647, %v119
        %vm230 = vcmp.eq.f32.partialorder %v229, 8.507059e+37
        %v231 = vand.u32 %v119, 2147483648
        %v232 = vor.u32 1.1754944e-38, %v231
        %v233 = vsel %vm230, %v232, %v228
        %v234 = vmul.f32 %v219, %v233
        %vm235 = vweird.f32 %v119
        %v236 = vsel %vm235, %v219, %v234
        %237 = vst [vmem:[%s108] sm:$0xff] %v236
        %s238 = sand.u32 %s8, 1
        %s239 = sand.u32 %s8, 1
        %s240 = smul.addr %s239, 8
        %s241 = scalar_lea.vmem [#allocation1], %s240
        %s242 = sadd.s32 %s17, %s16
        %s243 = sadd.s32 %s242, %s15
        %s244 = sadd.s32 %s243, %s14
        %s245 = smul.addr %s244, 8
        %s246 = scalar_lea.vmem %s1, %s245
        // Predicated region
        $region55: #{custom-call.13} parent=53 // pred_check
          _
        $region56: #{custom-call.13} parent=53 // pred_check_branch
          %248 = sbr.rel (0) target = $region58
        $region57: #{custom-call.13} parent=53 // pred_region
          // Predicated region
          $region59: #{custom-call.13} parent=57 // pred_check
            _
          $region60: #{custom-call.13} parent=57 // pred_check_branch
            %250 = sbr.rel (0) target = $region62
          $region61: #{custom-call.13} parent=57 // pred_region
            // Predicated region
            $region74: #{custom-call.13} parent=61 // pred_check
              _
            $region75: #{custom-call.13} parent=61 // pred_check_branch
              %266 = sbr.rel (0) target = $region77
            $region76: #{custom-call.13} parent=61 // pred_region
              loop: start=0, step=1, limit=1
              $region78: #{custom-call.13} parent=76 // loop_pre_header
                _
              $region79: #{custom-call.13} parent=76 // loop_header
                %s268 = sphi 0, %s272
                %p269 = scmp.ge.s32.totalorder %s268, 1
                %s273 = sphi %s241, %s241
                %s274 = sphi %s246, %s246
              $region80: #{custom-call.13} parent=76 // loop_header_branch
                %271 = sbr.rel (%p269) target = $region84
              $region81: #{custom-call.13} parent=76 // loop_body
                %v275 = vld [vmem:[%s273] sm:$0xff]
                %276 = vst [vmem:[%s274] sm:$0xff] %v275
              $region82: #{custom-call.13} parent=76 // loop_footer
                %s272 = sadd.s32 1, %s268
              $region83: #{custom-call.13} parent=76 // loop_footer_branch
                %267 = sbr.rel target = $region79
              $region84: #{custom-call.13} parent=76 // loop_exit
                _
            $region77: #{custom-call.13} parent=61 // pred_fallthru
              _
            // Predicated region
            $region85: #{custom-call.13} parent=61 // pred_check
              _
            $region86: #{custom-call.13} parent=61 // pred_check_branch
              %278 = sbr.rel target = $region88
            $region87: #{custom-call.13} parent=61 // pred_region
              _
            $region88: #{custom-call.13} parent=61 // pred_fallthru
              _
          $region62: #{custom-call.13} parent=57 // pred_fallthru
            _
          // Predicated region
          $region63: #{custom-call.13} parent=57 // pred_check
            _
          $region64: #{custom-call.13} parent=57 // pred_check_branch
            %252 = sbr.rel target = $region66
          $region65: #{custom-call.13} parent=57 // pred_region
            %s254 = ssub.s32 256, 1
            loop: start=0, step=1, limit=1
            $region67: #{custom-call.13} parent=65 // loop_pre_header
              _
            $region68: #{custom-call.13} parent=65 // loop_header
              %s256 = sphi 0, %s260
              %p257 = scmp.ge.s32.totalorder %s256, 1
              %s261 = sphi %s241, %s241
              %s262 = sphi %s246, %s246
            $region69: #{custom-call.13} parent=65 // loop_header_branch
              %259 = sbr.rel (%p257) target = $region73
            $region70: #{custom-call.13} parent=65 // loop_body
              %v263 = vld [vmem:[%s261] sm:%s254]
              %264 = vst [vmem:[%s262] sm:%s254] %v263
            $region71: #{custom-call.13} parent=65 // loop_footer
              %s260 = sadd.s32 1, %s256
            $region72: #{custom-call.13} parent=65 // loop_footer_branch
              %255 = sbr.rel target = $region68
            $region73: #{custom-call.13} parent=65 // loop_exit
              _
          $region66: #{custom-call.13} parent=57 // pred_fallthru
            _
        $region58: #{custom-call.13} parent=53 // pred_fallthru
          _
        %279 = vnop
      $region54: #{custom-call.13} parent=5 // pred_fallthru
        _
      %p280 = scmp.le.s32.totalorder 2, %s3
      // Predicated region
      $region89: #{custom-call.13} parent=5 // pred_check
        %p281 = pneg %p280
      $region90: #{custom-call.13} parent=5 // pred_check_branch
        %283 = sbr.rel (%p281) target = $region92
      $region91: #{custom-call.13} parent=5 // pred_region
        %s284 = ssub.s32 %s3, 2
        %s285 = sand.u32 %s9, 1
        %s286 = sand.u32 %s9, 1
        %s287 = smul.addr %s286, 8
        %s288 = scalar_lea.vmem [#allocation1], %s287
      $region92: #{custom-call.13} parent=5 // pred_fallthru
        _
    $region6: #{custom-call.13} parent=1 // loop_footer
      %s7 = sadd.s32 1, %s3
    $region7: #{custom-call.13} parent=1 // loop_footer_branch
      %2 = sbr.rel target = $region3
    $region8: #{custom-call.13} parent=1 // loop_exit
      _

// kernel: custom-call.12
$region0: #{custom-call.12}
  %s0 = inlined_call_operand.vmem [shape: f32[2,1,8,8], index: 0, kind: input, shape index: {}]
  %s1 = inlined_call_operand.vmem [shape: f32[2,1,8,8], index: 1, kind: output, shape index: {}]
  $region1: #{custom-call.12} parent=0
    #allocation0 [shape = 'u8[8192]{0}', space=vmem, size = 0x2000, scoped, tag = 'operand span for operand 0']
    #allocation1 [shape = 'u8[8192]{0}', space=vmem, size = 0x2000, scoped, tag = 'operand span for operand 1']
    loop: start=0, step=1, limit=4
    $region2: #{custom-call.12} parent=1 // loop_pre_header
      _
    $region3: #{custom-call.12} parent=1 // loop_header
      %s3 = sphi 0, %s7
      %p4 = scmp.ge.s32.totalorder %s3, 4
      %s10 = sphi 0, %s36
      %s11 = sphi 0, %s32
      %s12 = sphi 0, %s28
      %s13 = sphi 0, %s24
      %s14 = sphi 0, %s10
      %s15 = sphi 0, %s11
      %s16 = sphi 0, %s12
      %s17 = sphi 0, %s13
      %s18 = sphi 0, %s14
      %s19 = sphi 0, %s15
      %s20 = sphi 0, %s16
      %s21 = sphi 0, %s17
    $region4: #{custom-call.12} parent=1 // loop_header_branch
      %6 = sbr.rel (%p4) target = $region8
    $region5: #{custom-call.12} parent=1 // loop_body
      %s8 = ssub.s32 %s3, 1
      %s9 = ssub.s32 %s3, 2
      %s22 = sadd.s32 1, %s13
      %p23 = scmp.ge.s32.totalorder %s22, 1
      %s24 = scalar_select %p23, 0, %s22
      %s25 = sadd.s32 1, %s12
      %s26 = scalar_select %p23, %s25, %s12
      %p27 = scmp.ge.s32.totalorder %s26, 1
      %s28 = scalar_select %p27, 0, %s26
      %s29 = sadd.s32 1, %s11
      %s30 = scalar_select %p27, %s29, %s11
      %p31 = scmp.ge.s32.totalorder %s30, 1
      %s32 = scalar_select %p31, 0, %s30
      %s33 = sadd.s32 1, %s10
      %s34 = scalar_select %p31, %s33, %s10
      %p35 = scmp.ge.s32.totalorder %s34, 2
      %s36 = scalar_select %p35, 0, %s34
      %p37 = scmp.le.s32.totalorder 1, %s3
      %p38 = scmp.lt.s32.totalorder %s3, 3
      %p39 = pnand %p37, %p38
      %p40 = pneg %p39
      // Predicated region
      $region9: #{custom-call.12} parent=5 // pred_check
        _
      $region10: #{custom-call.12} parent=5 // pred_check_branch
        %42 = sbr.rel (%p39) target = $region12
      $region11: #{custom-call.12} parent=5 // pred_region
        %s43 = ssub.s32 %s3, 1
      $region12: #{custom-call.12} parent=5 // pred_fallthru
        _
      %p44 = scmp.lt.s32.totalorder %s3, 2
      // Predicated region
      $region13: #{custom-call.12} parent=5 // pred_check
        %p45 = pneg %p44
      $region14: #{custom-call.12} parent=5 // pred_check_branch
        %47 = sbr.rel (%p45) target = $region16
      $region15: #{custom-call.12} parent=5 // pred_region
        %s48 = sand.u32 %s3, 1
        %s49 = sand.u32 %s3, 1
        %s50 = smul.addr %s49, 8
        %s51 = scalar_lea.vmem [#allocation0], %s50
        %s52 = sadd.s32 %s13, %s12
        %s53 = sadd.s32 %s52, %s11
        %s54 = sadd.s32 %s53, %s10
        %s55 = smul.addr %s54, 8
        %s56 = scalar_lea.vmem %s0, %s55
        // Predicated region
        $region17: #{custom-call.12} parent=15 // pred_check
          _
        $region18: #{custom-call.12} parent=15 // pred_check_branch
          %58 = sbr.rel (0) target = $region20
        $region19: #{custom-call.12} parent=15 // pred_region
          // Predicated region
          $region21: #{custom-call.12} parent=19 // pred_check
            _
          $region22: #{custom-call.12} parent=19 // pred_check_branch
            %60 = sbr.rel (0) target = $region24
          $region23: #{custom-call.12} parent=19 // pred_region
            // Predicated region
            $region36: #{custom-call.12} parent=23 // pred_check
              _
            $region37: #{custom-call.12} parent=23 // pred_check_branch
              %76 = sbr.rel (0) target = $region39
            $region38: #{custom-call.12} parent=23 // pred_region
              loop: start=0, step=1, limit=1
              $region40: #{custom-call.12} parent=38 // loop_pre_header
                _
              $region41: #{custom-call.12} parent=38 // loop_header
                %s78 = sphi 0, %s82
                %p79 = scmp.ge.s32.totalorder %s78, 1
                %s83 = sphi %s56, %s56
                %s84 = sphi %s51, %s51
              $region42: #{custom-call.12} parent=38 // loop_header_branch
                %81 = sbr.rel (%p79) target = $region46
              $region43: #{custom-call.12} parent=38 // loop_body
                %v85 = vld [vmem:[%s83] sm:$0xff]
                %86 = vst [vmem:[%s84] sm:$0xff] %v85
              $region44: #{custom-call.12} parent=38 // loop_footer
                %s82 = sadd.s32 1, %s78
              $region45: #{custom-call.12} parent=38 // loop_footer_branch
                %77 = sbr.rel target = $region41
              $region46: #{custom-call.12} parent=38 // loop_exit
                _
            $region39: #{custom-call.12} parent=23 // pred_fallthru
              _
            // Predicated region
            $region47: #{custom-call.12} parent=23 // pred_check
              _
            $region48: #{custom-call.12} parent=23 // pred_check_branch
              %88 = sbr.rel target = $region50
            $region49: #{custom-call.12} parent=23 // pred_region
              _
            $region50: #{custom-call.12} parent=23 // pred_fallthru
              _
          $region24: #{custom-call.12} parent=19 // pred_fallthru
            _
          // Predicated region
          $region25: #{custom-call.12} parent=19 // pred_check
            _
          $region26: #{custom-call.12} parent=19 // pred_check_branch
            %62 = sbr.rel target = $region28
          $region27: #{custom-call.12} parent=19 // pred_region
            %s64 = ssub.s32 256, 1
            loop: start=0, step=1, limit=1
            $region29: #{custom-call.12} parent=27 // loop_pre_header
              _
            $region30: #{custom-call.12} parent=27 // loop_header
              %s66 = sphi 0, %s70
              %p67 = scmp.ge.s32.totalorder %s66, 1
              %s71 = sphi %s56, %s56
              %s72 = sphi %s51, %s51
            $region31: #{custom-call.12} parent=27 // loop_header_branch
              %69 = sbr.rel (%p67) target = $region35
            $region32: #{custom-call.12} parent=27 // loop_body
              %v73 = vld [vmem:[%s71] sm:%s64]
              %74 = vst [vmem:[%s72] sm:%s64] %v73
            $region33: #{custom-call.12} parent=27 // loop_footer
              %s70 = sadd.s32 1, %s66
            $region34: #{custom-call.12} parent=27 // loop_footer_branch
              %65 = sbr.rel target = $region30
            $region35: #{custom-call.12} parent=27 // loop_exit
              _
          $region28: #{custom-call.12} parent=19 // pred_fallthru
            _
        $region20: #{custom-call.12} parent=15 // pred_fallthru
          _
        %89 = vnop
      $region16: #{custom-call.12} parent=5 // pred_fallthru
        _
      %p90 = scmp.le.s32.totalorder 1, %s3
      %p91 = scmp.lt.s32.totalorder %s3, 3
      %p92 = pnand %p90, %p91
      %p93 = pneg %p92
      // Predicated region
      $region51: #{custom-call.12} parent=5 // pred_check
        _
      $region52: #{custom-call.12} parent=5 // pred_check_branch
        %95 = sbr.rel (%p92) target = $region54
      $region53: #{custom-call.12} parent=5 // pred_region
        #allocation2 [shape = 'f32[8,8]{1,0}', space=vmem, size = 0x1000, scoped, tag = 'rescaled input a']
        %s96 = ssub.s32 %s3, 1
        %s97 = sand.u32 %s8, 1
        %s98 = sand.u32 %s8, 1
        %s99 = smul.addr %s98, 8
        %s100 = scalar_lea.vmem [#allocation0], %s99
        %s101 = sand.u32 %s8, 1
        %s102 = sand.u32 %s8, 1
        %s103 = smul.addr %s102, 8
        %s104 = scalar_lea.vmem [#allocation0], %s103
        %s105 = sand.u32 %s8, 1
        %s106 = sand.u32 %s8, 1
        %s107 = smul.addr %s106, 8
        %s108 = scalar_lea.vmem [#allocation1], %s107
        %v109 = vlaneseq
        %v110 = vand.u32 %v109, 127
        %vm111 = vcmp.lt.s32.totalorder %v110, 8
        %v112 = vlaneseq
        %v113 = vshrl.u32 %v112, 7
        %vm115 = vcmp.eq.s32.totalorder %v113, %v110
        %v116 = vld [vmem:[%s100] sm:$0xff]
        %v117 = vsel %vm115, %v116, 0.0
        %118 = vadd.xlane.f32.xlu0 %v117
        %v119 = vpop.xlane.xlu0 %118
        %vm120 = vcmp.le.s32.totalorder %v113, %v110
        %vm121 = vmand %vm120, %vm111
        %v122 = vsel %vm121, %v116, 0.0
        %v123 = vrcp.pop %v119
        %v124 = vmul.f32 %v119, %v123
        %v125 = vsub.f32 1.0, %v124
        %v126 = vmul.f32 %v123, %v125
        %v127 = vadd.f32 %v123, %v126
        %vm128 = vweird.f32 %v119
        %vm129 = vweird.f32 %v123
        %vm130 = vmor %vm128, %vm129
        %v131 = vsel %vm130, %v123, %v127
        %v132 = vand.u32 2147483647, %v119
        %vm133 = vcmp.eq.f32.partialorder %v132, 8.507059e+37
        %v134 = vand.u32 %v119, 2147483648
        %v135 = vor.u32 1.1754944e-38, %v134
        %v136 = vsel %vm133, %v135, %v131
        %v137 = vmul.f32 %v122, %v136
        %138 = vst [vmem:[#allocation2] sm:$0xff] %v137
        %v139 = vlaneseq
        %v140 = vand.u32 %v139, 127
        %v141 = vlaneseq
        %v142 = vshrl.u32 %v141, 7
        %vm144 = vcmp.eq.s32.totalorder %v140, %v142
        %v145 = vlaneseq
        %v146 = vand.u32 %v145, 127
        %vm147 = vcmp.eq.s32.totalorder %v146, 7
        %v148 = vsel %vm147, 1.0, -1.0
        %v149 = vsel %vm144, %v148, 0.0
        %s150 = scalar_lea.vmem [#allocation2], 6
        %v151 = vld [vmem:[%s150] ss:$0 sm:$0xff]
        %v152 = vxor.u32 %v151, 2147483648
        %v153 = vlaneseq
        %v154 = vand.u32 %v153, 127
        %vm155 = vcmp.eq.s32.totalorder %v154, 6
        %v156 = vmul.f32 %v152, %v149
        %157 = vadd.xlane.f32.xlu0 %v156
        %v158 = vpop.xlane.xlu0 %157
        %v159 = vsel %vm155, %v158, %v149
        %s160 = scalar_lea.vmem [#allocation2], 5
        %v161 = vld [vmem:[%s160] ss:$0 sm:$0xff]
        %v162 = vxor.u32 %v161, 2147483648
        %v163 = vlaneseq
        %v164 = vand.u32 %v163, 127
        %vm165 = vcmp.eq.s32.totalorder %v164, 5
        %v166 = vmul.f32 %v162, %v159
        %167 = vadd.xlane.f32.xlu0 %v166
        %v168 = vpop.xlane.xlu0 %167
        %v169 = vsel %vm165, %v168, %v159
        %s170 = scalar_lea.vmem [#allocation2], 4
        %v171 = vld [vmem:[%s170] ss:$0 sm:$0xff]
        %v172 = vxor.u32 %v171, 2147483648
        %v173 = vlaneseq
        %v174 = vand.u32 %v173, 127
        %vm175 = vcmp.eq.s32.totalorder %v174, 4
        %v176 = vmul.f32 %v172, %v169
        %177 = vadd.xlane.f32.xlu0 %v176
        %v178 = vpop.xlane.xlu0 %177
        %v179 = vsel %vm175, %v178, %v169
        %s180 = scalar_lea.vmem [#allocation2], 3
        %v181 = vld [vmem:[%s180] ss:$0 sm:$0xff]
        %v182 = vxor.u32 %v181, 2147483648
        %v183 = vlaneseq
        %v184 = vand.u32 %v183, 127
        %vm185 = vcmp.eq.s32.totalorder %v184, 3
        %v186 = vmul.f32 %v182, %v179
        %187 = vadd.xlane.f32.xlu0 %v186
        %v188 = vpop.xlane.xlu0 %187
        %v189 = vsel %vm185, %v188, %v179
        %s190 = scalar_lea.vmem [#allocation2], 2
        %v191 = vld [vmem:[%s190] ss:$0 sm:$0xff]
        %v192 = vxor.u32 %v191, 2147483648
        %v193 = vlaneseq
        %v194 = vand.u32 %v193, 127
        %vm195 = vcmp.eq.s32.totalorder %v194, 2
        %v196 = vmul.f32 %v192, %v189
        %197 = vadd.xlane.f32.xlu0 %v196
        %v198 = vpop.xlane.xlu0 %197
        %v199 = vsel %vm195, %v198, %v189
        %s200 = scalar_lea.vmem [#allocation2], 1
        %v201 = vld [vmem:[%s200] ss:$0 sm:$0xff]
        %v202 = vxor.u32 %v201, 2147483648
        %v203 = vlaneseq
        %v204 = vand.u32 %v203, 127
        %vm205 = vcmp.eq.s32.totalorder %v204, 1
        %v206 = vmul.f32 %v202, %v199
        %207 = vadd.xlane.f32.xlu0 %v206
        %v208 = vpop.xlane.xlu0 %207
        %v209 = vsel %vm205, %v208, %v199
        %v210 = vld [vmem:[#allocation2] ss:$0 sm:$0xff]
        %v211 = vxor.u32 %v210, 2147483648
        %v212 = vlaneseq
        %v213 = vand.u32 %v212, 127
        %vm214 = vcmp.eq.s32.totalorder %v213, 0
        %v215 = vmul.f32 %v211, %v209
        %216 = vadd.xlane.f32.xlu0 %v215
        %v217 = vpop.xlane.xlu0 %216
        %v218 = vsel %vm214, %v217, %v209
        %v219 = vrcp.pop %v119
        %v220 = vmul.f32 %v119, %v219
        %v221 = vsub.f32 1.0, %v220
        %v222 = vmul.f32 %v219, %v221
        %v223 = vadd.f32 %v219, %v222
        %vm224 = vweird.f32 %v119
        %vm225 = vweird.f32 %v219
        %vm226 = vmor %vm224, %vm225
        %v227 = vsel %vm226, %v219, %v223
        %v228 = vand.u32 2147483647, %v119
        %vm229 = vcmp.eq.f32.partialorder %v228, 8.507059e+37
        %v230 = vand.u32 %v119, 2147483648
        %v231 = vor.u32 1.1754944e-38, %v230
        %v232 = vsel %vm229, %v231, %v227
        %v233 = vmul.f32 %v218, %v232
        %vm234 = vweird.f32 %v119
        %v235 = vsel %vm234, %v218, %v233
        %236 = vst [vmem:[%s108] sm:$0xff] %v235
        %s237 = sand.u32 %s8, 1
        %s238 = sand.u32 %s8, 1
        %s239 = smul.addr %s238, 8
        %s240 = scalar_lea.vmem [#allocation1], %s239
        %s241 = sadd.s32 %s17, %s16
        %s242 = sadd.s32 %s241, %s15
        %s243 = sadd.s32 %s242, %s14
        %s244 = smul.addr %s243, 8
        %s245 = scalar_lea.vmem %s1, %s244
        // Predicated region
        $region55: #{custom-call.12} parent=53 // pred_check
          _
        $region56: #{custom-call.12} parent=53 // pred_check_branch
          %247 = sbr.rel (0) target = $region58
        $region57: #{custom-call.12} parent=53 // pred_region
          // Predicated region
          $region59: #{custom-call.12} parent=57 // pred_check
            _
          $region60: #{custom-call.12} parent=57 // pred_check_branch
            %249 = sbr.rel (0) target = $region62
          $region61: #{custom-call.12} parent=57 // pred_region
            // Predicated region
            $region74: #{custom-call.12} parent=61 // pred_check
              _
            $region75: #{custom-call.12} parent=61 // pred_check_branch
              %265 = sbr.rel (0) target = $region77
            $region76: #{custom-call.12} parent=61 // pred_region
              loop: start=0, step=1, limit=1
              $region78: #{custom-call.12} parent=76 // loop_pre_header
                _
              $region79: #{custom-call.12} parent=76 // loop_header
                %s267 = sphi 0, %s271
                %p268 = scmp.ge.s32.totalorder %s267, 1
                %s272 = sphi %s240, %s240
                %s273 = sphi %s245, %s245
              $region80: #{custom-call.12} parent=76 // loop_header_branch
                %270 = sbr.rel (%p268) target = $region84
              $region81: #{custom-call.12} parent=76 // loop_body
                %v274 = vld [vmem:[%s272] sm:$0xff]
                %275 = vst [vmem:[%s273] sm:$0xff] %v274
              $region82: #{custom-call.12} parent=76 // loop_footer
                %s271 = sadd.s32 1, %s267
              $region83: #{custom-call.12} parent=76 // loop_footer_branch
                %266 = sbr.rel target = $region79
              $region84: #{custom-call.12} parent=76 // loop_exit
                _
            $region77: #{custom-call.12} parent=61 // pred_fallthru
              _
            // Predicated region
            $region85: #{custom-call.12} parent=61 // pred_check
              _
            $region86: #{custom-call.12} parent=61 // pred_check_branch
              %277 = sbr.rel target = $region88
            $region87: #{custom-call.12} parent=61 // pred_region
              _
            $region88: #{custom-call.12} parent=61 // pred_fallthru
              _
          $region62: #{custom-call.12} parent=57 // pred_fallthru
            _
          // Predicated region
          $region63: #{custom-call.12} parent=57 // pred_check
            _
          $region64: #{custom-call.12} parent=57 // pred_check_branch
            %251 = sbr.rel target = $region66
          $region65: #{custom-call.12} parent=57 // pred_region
            %s253 = ssub.s32 256, 1
            loop: start=0, step=1, limit=1
            $region67: #{custom-call.12} parent=65 // loop_pre_header
              _
            $region68: #{custom-call.12} parent=65 // loop_header
              %s255 = sphi 0, %s259
              %p256 = scmp.ge.s32.totalorder %s255, 1
              %s260 = sphi %s240, %s240
              %s261 = sphi %s245, %s245
            $region69: #{custom-call.12} parent=65 // loop_header_branch
              %258 = sbr.rel (%p256) target = $region73
            $region70: #{custom-call.12} parent=65 // loop_body
              %v262 = vld [vmem:[%s260] sm:%s253]
              %263 = vst [vmem:[%s261] sm:%s253] %v262
            $region71: #{custom-call.12} parent=65 // loop_footer
              %s259 = sadd.s32 1, %s255
            $region72: #{custom-call.12} parent=65 // loop_footer_branch
              %254 = sbr.rel target = $region68
            $region73: #{custom-call.12} parent=65 // loop_exit
              _
          $region66: #{custom-call.12} parent=57 // pred_fallthru
            _
        $region58: #{custom-call.12} parent=53 // pred_fallthru
          _
        %278 = vnop
      $region54: #{custom-call.12} parent=5 // pred_fallthru
        _
      %p279 = scmp.le.s32.totalorder 2, %s3
      // Predicated region
      $region89: #{custom-call.12} parent=5 // pred_check
        %p280 = pneg %p279
      $region90: #{custom-call.12} parent=5 // pred_check_branch
        %282 = sbr.rel (%p280) target = $region92
      $region91: #{custom-call.12} parent=5 // pred_region
        %s283 = ssub.s32 %s3, 2
        %s284 = sand.u32 %s9, 1
        %s285 = sand.u32 %s9, 1
        %s286 = smul.addr %s285, 8
        %s287 = scalar_lea.vmem [#allocation1], %s286
      $region92: #{custom-call.12} parent=5 // pred_fallthru
        _
    $region6: #{custom-call.12} parent=1 // loop_footer
      %s7 = sadd.s32 1, %s3
    $region7: #{custom-call.12} parent=1 // loop_footer_branch
      %2 = sbr.rel target = $region3
    $region8: #{custom-call.12} parent=1 // loop_exit
      _

// kernel: wstal_forward.3
$region0: #{wstal_forward.3}
  #allocation0 [shape = 'u32[]', space=smem, size = 0x4, offset = 0x4, fixed_abs, tag = 'smem constant byte address 0x4 - core index']
  #allocation1 [shape = 'u32[72,128]{1,0:T(1,128)}', space=vmem, size = 0x9000, scoped, tag = 'internal scratch']
  %s0 = inlined_call_operand.vmem [shape: f32[2,8,8], index: 0, kind: input, shape index: {}]
  %s1 = inlined_call_operand.vmem [shape: f32[2,8,32], index: 1, kind: input, shape index: {}]
  %s2 = inlined_call_operand.vmem [shape: f32[5,32], index: 2, kind: input, shape index: {}]
  %s3 = inlined_call_operand.vmem [shape: f32[1,32], index: 3, kind: input, shape index: {}]
  %s4 = inlined_call_operand.vmem [shape: f32[2,8,32], index: 4, kind: output, shape index: {0}]
  %s5 = inlined_call_operand.hbm [shape: f32[2,1,5], index: 5, kind: output, shape index: {1}]
  %s6 = inlined_call_operand.vmem [shape: f32[2,5,1], index: 6, kind: output, shape index: {2}]
  %s7 = inlined_call_operand.vmem [shape: f32[2,8,1], index: 7, kind: output, shape index: {3}]
  %s8 = inlined_call_operand.vmem [shape: f32[2,8,5], index: 8, kind: output, shape index: {4}]
  %9 = xla_tuple %s4, %s5, %s6, %s7, %s8
  %s10 = sld [smem:[#allocation0]]
  $region81: #{wstal_forward.3} parent=0
    _
  %s12 = ssub.s32 1, %s10
  %s13 = scalar_select 0, %s12, %s10
  $region1: #{wstal_forward.3} parent=0
    #allocation2 [shape = 'u8[1024]{0}', space=vmem, size = 0x400, scoped, tag = 'output window, operand 1']
    #allocation3 [shape = 's32[2]{0}', space=sflag, size = 0x8, scoped, tag = 'scoped memory for wstal_forward.3']
    %14 = vsyncpa [#allocation3], 0
    %s15 = scalar_lea.sflag [#allocation3], 1
    %16 = vsyncpa %s15, 0
    loop: start=0, step=1, limit=4
    $region2: #{wstal_forward.3} parent=1 // loop_pre_header
      _
    $region3: #{wstal_forward.3} parent=1 // loop_header
      %s18 = sphi 0, %s22
      %p19 = scmp.ge.s32.totalorder %s18, 4
      %s28 = sphi 0, %s30
      %s31 = sphi 0, %s28
      %s32 = sphi 0, %s31
      %s48 = sphi 0, %s32
      %s54 = sphi 0, %s56
      %s57 = sphi 0, %s54
      %s58 = sphi 0, %s57
      %s74 = sphi 0, %s58
      %s78 = sphi 0, %s78
      %s80 = sphi 0, %s78
      %s81 = sphi 0, %s80
      %s95 = sphi 0, %s81
      %s99 = sphi 0, %s99
      %s101 = sphi 0, %s99
      %s102 = sphi 0, %s101
      %s116 = sphi 0, %s102
      %s122 = sphi 0, %s124
      %s125 = sphi 0, %s122
      %s126 = sphi 0, %s125
      %s142 = sphi 0, %s126
      %s148 = sphi 0, %s150
      %s151 = sphi 0, %s148
      %s152 = sphi 0, %s151
      %s168 = sphi 0, %s152
      %s174 = sphi 0, %s176
      %s177 = sphi 0, %s174
      %s178 = sphi 0, %s177
      %s194 = sphi 0, %s178
      %s200 = sphi 0, %s202
      %s203 = sphi 0, %s200
      %s204 = sphi 0, %s203
      %s220 = sphi 0, %s204
      %s226 = sphi 0, %s228
      %s229 = sphi 0, %s226
      %s230 = sphi 0, %s229
      %s246 = sphi 0, %s230
    $region4: #{wstal_forward.3} parent=1 // loop_header_branch
      %21 = sbr.rel (%p19) target = $region8
    $region5: #{wstal_forward.3} parent=1 // loop_body
      %s23 = ssub.s32 %s18, 1
      %s24 = ssub.s32 %s18, 2
      %s25 = sadd.s32 %s18, 1
      %s26 = ssub.s32 %s18, %s25
      %p27 = scmp.eq.s32.totalorder %s26, 0
      %s29 = sadd.s32 %s28, 1
      %s30 = scalar_select %p27, %s28, %s29
      %p33 = pneg %p27
      %p34 = scmp.eq.s32.totalorder %s18, 1
      %p35 = por %p33, %p34
      %p36 = scmp.ne.s32.totalorder %s28, %s31
      %p37 = scmp.eq.s32.totalorder %s18, 0
      %p38 = por %p36, %p37
      %p39 = scmp.ne.s32.totalorder %s28, %s31
      %p40 = scmp.eq.s32.totalorder %s23, 1
      %p41 = por %p39, %p40
      %p42 = scmp.ne.s32.totalorder %s31, %s32
      %p43 = scmp.eq.s32.totalorder %s23, 0
      %p44 = por %p42, %p43
      %p45 = scmp.ne.s32.totalorder %s31, %s32
      %p46 = scmp.eq.s32.totalorder %s24, 1
      %p47 = por %p45, %p46
      %p49 = scmp.ne.s32.totalorder %s32, %s48
      %p50 = scmp.eq.s32.totalorder %s24, 0
      %p51 = por %p49, %p50
      %s52 = ssub.s32 %s18, %s25
      %p53 = scmp.eq.s32.totalorder %s52, 0
      %s55 = sadd.s32 %s54, 1
      %s56 = scalar_select %p53, %s54, %s55
      %p59 = pneg %p53
      %p60 = scmp.eq.s32.totalorder %s18, 1
      %p61 = por %p59, %p60
      %p62 = scmp.ne.s32.totalorder %s54, %s57
      %p63 = scmp.eq.s32.totalorder %s18, 0
      %p64 = por %p62, %p63
      %p65 = scmp.ne.s32.totalorder %s54, %s57
      %p66 = scmp.eq.s32.totalorder %s23, 1
      %p67 = por %p65, %p66
      %p68 = scmp.ne.s32.totalorder %s57, %s58
      %p69 = scmp.eq.s32.totalorder %s23, 0
      %p70 = por %p68, %p69
      %p71 = scmp.ne.s32.totalorder %s57, %s58
      %p72 = scmp.eq.s32.totalorder %s24, 1
      %p73 = por %p71, %p72
      %p75 = scmp.ne.s32.totalorder %s58, %s74
      %p76 = scmp.eq.s32.totalorder %s24, 0
      %p77 = por %p75, %p76
      %s79 = sadd.s32 %s78, 1
      %p82 = scmp.eq.s32.totalorder %s18, 1
      %p83 = scmp.ne.s32.totalorder %s78, %s80
      %p84 = scmp.eq.s32.totalorder %s18, 0
      %p85 = por %p83, %p84
      %p86 = scmp.ne.s32.totalorder %s78, %s80
      %p87 = scmp.eq.s32.totalorder %s23, 1
      %p88 = por %p86, %p87
      %p89 = scmp.ne.s32.totalorder %s80, %s81
      %p90 = scmp.eq.s32.totalorder %s23, 0
      %p91 = por %p89, %p90
      %p92 = scmp.ne.s32.totalorder %s80, %s81
      %p93 = scmp.eq.s32.totalorder %s24, 1
      %p94 = por %p92, %p93
      %p96 = scmp.ne.s32.totalorder %s81, %s95
      %p97 = scmp.eq.s32.totalorder %s24, 0
      %p98 = por %p96, %p97
      %s100 = sadd.s32 %s99, 1
      %p103 = scmp.eq.s32.totalorder %s18, 1
      %p104 = scmp.ne.s32.totalorder %s99, %s101
      %p105 = scmp.eq.s32.totalorder %s18, 0
      %p106 = por %p104, %p105
      %p107 = scmp.ne.s32.totalorder %s99, %s101
      %p108 = scmp.eq.s32.totalorder %s23, 1
      %p109 = por %p107, %p108
      %p110 = scmp.ne.s32.totalorder %s101, %s102
      %p111 = scmp.eq.s32.totalorder %s23, 0
      %p112 = por %p110, %p111
      %p113 = scmp.ne.s32.totalorder %s101, %s102
      %p114 = scmp.eq.s32.totalorder %s24, 1
      %p115 = por %p113, %p114
      %p117 = scmp.ne.s32.totalorder %s102, %s116
      %p118 = scmp.eq.s32.totalorder %s24, 0
      %p119 = por %p117, %p118
      %s120 = ssub.s32 %s18, %s25
      %p121 = scmp.eq.s32.totalorder %s120, 0
      %s123 = sadd.s32 %s122, 1
      %s124 = scalar_select %p121, %s122, %s123
      %p127 = pneg %p121
      %p128 = scmp.eq.s32.totalorder %s18, 1
      %p129 = por %p127, %p128
      %p130 = scmp.ne.s32.totalorder %s122, %s125
      %p131 = scmp.eq.s32.totalorder %s18, 0
      %p132 = por %p130, %p131
      %p133 = scmp.ne.s32.totalorder %s122, %s125
      %p134 = scmp.eq.s32.totalorder %s23, 1
      %p135 = por %p133, %p134
      %p136 = scmp.ne.s32.totalorder %s125, %s126
      %p137 = scmp.eq.s32.totalorder %s23, 0
      %p138 = por %p136, %p137
      %p139 = scmp.ne.s32.totalorder %s125, %s126
      %p140 = scmp.eq.s32.totalorder %s24, 1
      %p141 = por %p139, %p140
      %p143 = scmp.ne.s32.totalorder %s126, %s142
      %p144 = scmp.eq.s32.totalorder %s24, 0
      %p145 = por %p143, %p144
      %s146 = ssub.s32 %s18, %s25
      %p147 = scmp.eq.s32.totalorder %s146, 0
      %s149 = sadd.s32 %s148, 1
      %s150 = scalar_select %p147, %s148, %s149
      %p153 = pneg %p147
      %p154 = scmp.eq.s32.totalorder %s18, 1
      %p155 = por %p153, %p154
      %p156 = scmp.ne.s32.totalorder %s148, %s151
      %p157 = scmp.eq.s32.totalorder %s18, 0
      %p158 = por %p156, %p157
      %p159 = scmp.ne.s32.totalorder %s148, %s151
      %p160 = scmp.eq.s32.totalorder %s23, 1
      %p161 = por %p159, %p160
      %p162 = scmp.ne.s32.totalorder %s151, %s152
      %p163 = scmp.eq.s32.totalorder %s23, 0
      %p164 = por %p162, %p163
      %p165 = scmp.ne.s32.totalorder %s151, %s152
      %p166 = scmp.eq.s32.totalorder %s24, 1
      %p167 = por %p165, %p166
      %p169 = scmp.ne.s32.totalorder %s152, %s168
      %p170 = scmp.eq.s32.totalorder %s24, 0
      %p171 = por %p169, %p170
      %s172 = ssub.s32 %s18, %s25
      %p173 = scmp.eq.s32.totalorder %s172, 0
      %s175 = sadd.s32 %s174, 1
      %s176 = scalar_select %p173, %s174, %s175
      %p179 = pneg %p173
      %p180 = scmp.eq.s32.totalorder %s18, 1
      %p181 = por %p179, %p180
      %p182 = scmp.ne.s32.totalorder %s174, %s177
      %p183 = scmp.eq.s32.totalorder %s18, 0
      %p184 = por %p182, %p183
      %p185 = scmp.ne.s32.totalorder %s174, %s177
      %p186 = scmp.eq.s32.totalorder %s23, 1
      %p187 = por %p185, %p186
      %p188 = scmp.ne.s32.totalorder %s177, %s178
      %p189 = scmp.eq.s32.totalorder %s23, 0
      %p190 = por %p188, %p189
      %p191 = scmp.ne.s32.totalorder %s177, %s178
      %p192 = scmp.eq.s32.totalorder %s24, 1
      %p193 = por %p191, %p192
      %p195 = scmp.ne.s32.totalorder %s178, %s194
      %p196 = scmp.eq.s32.totalorder %s24, 0
      %p197 = por %p195, %p196
      %s198 = ssub.s32 %s18, %s25
      %p199 = scmp.eq.s32.totalorder %s198, 0
      %s201 = sadd.s32 %s200, 1
      %s202 = scalar_select %p199, %s200, %s201
      %p205 = pneg %p199
      %p206 = scmp.eq.s32.totalorder %s18, 1
      %p207 = por %p205, %p206
      %p208 = scmp.ne.s32.totalorder %s200, %s203
      %p209 = scmp.eq.s32.totalorder %s18, 0
      %p210 = por %p208, %p209
      %p211 = scmp.ne.s32.totalorder %s200, %s203
      %p212 = scmp.eq.s32.totalorder %s23, 1
      %p213 = por %p211, %p212
      %p214 = scmp.ne.s32.totalorder %s203, %s204
      %p215 = scmp.eq.s32.totalorder %s23, 0
      %p216 = por %p214, %p215
      %p217 = scmp.ne.s32.totalorder %s203, %s204
      %p218 = scmp.eq.s32.totalorder %s24, 1
      %p219 = por %p217, %p218
      %p221 = scmp.ne.s32.totalorder %s204, %s220
      %p222 = scmp.eq.s32.totalorder %s24, 0
      %p223 = por %p221, %p222
      %s224 = ssub.s32 %s18, %s25
      %p225 = scmp.eq.s32.totalorder %s224, 0
      %s227 = sadd.s32 %s226, 1
      %s228 = scalar_select %p225, %s226, %s227
      %p231 = pneg %p225
      %p232 = scmp.eq.s32.totalorder %s18, 1
      %p233 = por %p231, %p232
      %p234 = scmp.ne.s32.totalorder %s226, %s229
      %p235 = scmp.eq.s32.totalorder %s18, 0
      %p236 = por %p234, %p235
      %p237 = scmp.ne.s32.totalorder %s226, %s229
      %p238 = scmp.eq.s32.totalorder %s23, 1
      %p239 = por %p237, %p238
      %p240 = scmp.ne.s32.totalorder %s229, %s230
      %p241 = scmp.eq.s32.totalorder %s23, 0
      %p242 = por %p240, %p241
      %p243 = scmp.ne.s32.totalorder %s229, %s230
      %p244 = scmp.eq.s32.totalorder %s24, 1
      %p245 = por %p243, %p244
      %p247 = scmp.ne.s32.totalorder %s230, %s246
      %p248 = scmp.eq.s32.totalorder %s24, 0
      %p249 = por %p247, %p248
      %p250 = scmp.le.s32.totalorder 1, %s18
      %p251 = scmp.lt.s32.totalorder %s18, 3
      %p252 = pnand %p250, %p251
      %p253 = pneg %p252
      // Predicated region
      $region9: #{wstal_forward.3} parent=5 // pred_check
        _
      $region10: #{wstal_forward.3} parent=5 // pred_check_branch
        %255 = sbr.rel (%p252) target = $region12
      $region11: #{wstal_forward.3} parent=5 // pred_region
        %s256 = ssub.s32 %s18, 1
        // Predicated region
        $region13: #{wstal_forward.3} parent=11 // pred_check
          %p257 = pneg %p91
        $region14: #{wstal_forward.3} parent=11 // pred_check_branch
          %259 = sbr.rel (%p257) target = $region16
        $region15: #{wstal_forward.3} parent=11 // pred_region
          _
        $region16: #{wstal_forward.3} parent=11 // pred_fallthru
          _
        // Predicated region
        $region17: #{wstal_forward.3} parent=11 // pred_check
          %p260 = pneg %p112
        $region18: #{wstal_forward.3} parent=11 // pred_check_branch
          %262 = sbr.rel (%p260) target = $region20
        $region19: #{wstal_forward.3} parent=11 // pred_region
          _
        $region20: #{wstal_forward.3} parent=11 // pred_fallthru
          _
      $region12: #{wstal_forward.3} parent=5 // pred_fallthru
        _
      %p263 = scmp.lt.s32.totalorder %s18, 2
      // Predicated region
      $region21: #{wstal_forward.3} parent=5 // pred_check
        %p264 = pneg %p263
      $region22: #{wstal_forward.3} parent=5 // pred_check_branch
        %266 = sbr.rel (%p264) target = $region24
      $region23: #{wstal_forward.3} parent=5 // pred_region
        // Predicated region
        $region25: #{wstal_forward.3} parent=23 // pred_check
          %p267 = pneg %p38
        $region26: #{wstal_forward.3} parent=23 // pred_check_branch
          %269 = sbr.rel (%p267) target = $region28
        $region27: #{wstal_forward.3} parent=23 // pred_region
          %p270 = scmp.lt.s32.totalorder %s18, 1
          %s271 = scalar_select %p270, %s18, 1
          %s272 = smul.addr %s271, 8
          %s273 = scalar_lea.vmem %s0, %s272
        $region28: #{wstal_forward.3} parent=23 // pred_fallthru
          _
        // Predicated region
        $region29: #{wstal_forward.3} parent=23 // pred_check
          %p274 = pneg %p64
        $region30: #{wstal_forward.3} parent=23 // pred_check_branch
          %276 = sbr.rel (%p274) target = $region32
        $region31: #{wstal_forward.3} parent=23 // pred_region
          %p277 = scmp.lt.s32.totalorder %s18, 1
          %s278 = scalar_select %p277, %s18, 1
          %s279 = smul.addr %s278, 8
          %s280 = scalar_lea.vmem %s1, %s279
        $region32: #{wstal_forward.3} parent=23 // pred_fallthru
          _
      $region24: #{wstal_forward.3} parent=5 // pred_fallthru
        _
      %p281 = scmp.le.s32.totalorder 1, %s18
      %p282 = scmp.lt.s32.totalorder %s18, 3
      %p283 = pnand %p281, %p282
      %p284 = pneg %p283
      // Predicated region
      $region33: #{wstal_forward.3} parent=5 // pred_check
        _
      $region34: #{wstal_forward.3} parent=5 // pred_check_branch
        %286 = sbr.rel (%p283) target = $region36
      $region35: #{wstal_forward.3} parent=5 // pred_region
        %s287 = ssub.s32 %s18, 1
        %p288 = scmp.lt.s32.totalorder %s23, 1
        %s289 = scalar_select %p288, %s23, 1
        %s290 = smul.addr %s289, 8
        %s291 = scalar_lea.vmem %s0, %s290
        %p292 = pneg %p44
        %p293 = pneg %p41
        %p294 = scmp.lt.s32.totalorder %s23, 1
        %s295 = scalar_select %p294, %s23, 1
        %s296 = smul.addr %s295, 8
        %s297 = scalar_lea.vmem %s1, %s296
        %p298 = pneg %p70
        %p299 = pneg %p67
        %p300 = pneg %p91
        %p301 = pneg %p88
        %p302 = pneg %p112
        %p303 = pneg %p109
        %p304 = pneg %p138
        %p305 = pneg %p135
        %p306 = scmp.lt.s32.totalorder %s23, 1
        %s307 = scalar_select %p306, %s23, 1
        %s308 = smul.addr %s307, 8
        %s309 = scalar_lea.vmem %s4, %s308
        %p310 = pneg %p164
        %p311 = pneg %p161
        %s312 = sand.u32 %s151, 1
        %s313 = scalar_lea.sflag [#allocation3], %s312
        %s314 = sand.u32 %s151, 1
        %s315 = scalar_lea.vmem [#allocation2], %s314
        %p316 = pneg %p190
        %p317 = pneg %p187
        %p318 = scmp.lt.s32.totalorder %s23, 1
        %s319 = scalar_select %p318, %s23, 1
        %s320 = smul.addr %s319, 8
        %s321 = scalar_lea.vmem %s6, %s320
        %p322 = pneg %p216
        %p323 = pneg %p213
        %p324 = scmp.lt.s32.totalorder %s23, 1
        %s325 = scalar_select %p324, %s23, 1
        %s326 = smul.addr %s325, 8
        %s327 = scalar_lea.vmem %s7, %s326
        %p328 = pneg %p242
        %p329 = pneg %p239
        %p330 = scmp.lt.s32.totalorder %s23, 1
        %s331 = scalar_select %p330, %s23, 1
        %s332 = smul.addr %s331, 8
        %s333 = scalar_lea.vmem %s8, %s332
        %p334 = scmp.lt.s32.totalorder %s23, 1
        %s335 = scalar_select %p334, %s23, 1
        %s336 = smul.addr %s335, 8
        %s337 = scalar_lea.vmem %s0, %s336
        %p338 = scmp.lt.s32.totalorder %s23, 1
        %s339 = scalar_select %p338, %s23, 1
        %s340 = smul.addr %s339, 8
        %s341 = scalar_lea.vmem %s1, %s340
        %p342 = scmp.lt.s32.totalorder %s23, 1
        %s343 = scalar_select %p342, %s23, 1
        %s344 = smul.addr %s343, 8
        %s345 = scalar_lea.vmem %s4, %s344
        %p346 = scmp.lt.s32.totalorder %s23, 1
        %s347 = scalar_select %p346, %s23, 1
        %s348 = smul.addr %s347, 8
        %s349 = scalar_lea.vmem %s6, %s348
        %p350 = scmp.lt.s32.totalorder %s23, 1
        %s351 = scalar_select %p350, %s23, 1
        %s352 = smul.addr %s351, 8
        %s353 = scalar_lea.vmem %s7, %s352
        %p354 = scmp.lt.s32.totalorder %s23, 1
        %s355 = scalar_select %p354, %s23, 1
        %s356 = smul.addr %s355, 8
        %s357 = scalar_lea.vmem %s8, %s356
        %v358 = vld [vmem:[%s337] sm:$0xff]
        %v359 = vld [vmem:[%s341] sm:$0xff]
        %vm360 = vcmask 64512
        %v362 = vsel %vm360, %v358, 0
        %364 = vmatpush.msra.mxu0 0.0
        %365 = vmatpush.msra.mxu0 0.0
        %366 = vmatpush.msra.mxu0 0.0
        %367 = vmatpush.msra.mxu0 0.0
        %368 = vmatpush.msra.mxu0 0.0
        %369 = vmatpush.msra.mxu0 0.0
        %370 = vmatpush.msra.mxu0 0.0
        %371 = vmatpush.msra.mxu0 0.0
        %372 = vmatpush.msra.mxu0 0.0
        %373 = vmatpush.msra.mxu0 0.0
        %374 = vmatpush.msra.mxu0 0.0
        %375 = vmatpush.msra.mxu0 0.0
        %376 = vmatpush.msra.mxu0 0.0
        %377 = vmatpush.msra.mxu0 0.0
        %378 = vmatpush.msra.mxu0 0.0
        %379 = vmatpush.msra.mxu0 %v359
        %380 = vmatmul.f32.gmra.mxu0 %v362
        %v381 = vpop.f32.mrf.mxu0
        %v382 = vadd.f32 0.0, %v381
        %383 = vdwg.mxu0
        %vm384 = vcmask 261120
        %385 = vst.msk [vmem:[%s345] sm:$0xff] %vm384, %v382
        %v386 = vmul.f32 %v382, %v382
        %v387 = vsel %vm384, %v386, 0.0
        %388 = vadd.xlane.f32.xlu0 %v387
        %v389 = vpop.xlane.xlu0 %388
        %v390 = vrsqrt.pop %v389
        %v391 = vmul.f32 %v390, %v389
        %v392 = vmul.f32 %v391, %v390
        %v393 = vmul.f32 0.5, %v392
        %v394 = vsub.f32 1.5, %v393
        %v395 = vmul.f32 %v390, %v394
        %v396 = vmul.f32 %v389, %v395
        %vm397 = vcmp.eq.f32.partialorder %v389, inf
        %v398 = vsel %vm397, %v389, %v396
        %vm399 = vcmp.eq.f32.partialorder %v389, 0.0
        %v400 = vand.u32 %v389, 2147483648
        %v401 = vsel %vm399, %v400, %v398
        %v402 = vadd.f32 %v401, 1e-09
        %v403 = vrcp.pop %v402
        %v404 = vmul.f32 %v402, %v403
        %v405 = vsub.f32 1.0, %v404
        %v406 = vmul.f32 %v403, %v405
        %v407 = vadd.f32 %v403, %v406
        %vm408 = vweird.f32 %v402
        %vm409 = vweird.f32 %v403
        %vm410 = vmor %vm408, %vm409
        %v411 = vsel %vm410, %v403, %v407
        %v412 = vand.u32 2147483647, %v402
        %vm413 = vcmp.eq.f32.partialorder %v412, 8.507059e+37
        %v414 = vand.u32 %v402, 2147483648
        %v415 = vor.u32 1.1754944e-38, %v414
        %v416 = vsel %vm413, %v415, %v411
        %v417 = vmul.f32 %v382, %v416
        %v418 = vld [vmem:[%s2] sm:$0x1f]
        %v419 = vld [vmem:[%s3] sm:$0x1]
        %v421 = vsel %vm384, %v417, 0
        %v424 = vsel %vm384, %v418, 0
        %426 = vmatpush.xpose.msra.mxu0 0.0
        %427 = vmatpush.xpose.msra.mxu0 0.0
        %428 = vmatpush.xpose.msra.mxu0 0.0
        %429 = vmatpush.xpose.msra.mxu0 0.0
        %430 = vmatpush.xpose.msra.mxu0 0.0
        %431 = vmatpush.xpose.msra.mxu0 0.0
        %432 = vmatpush.xpose.msra.mxu0 0.0
        %433 = vmatpush.xpose.msra.mxu0 0.0
        %434 = vmatpush.xpose.msra.mxu0 0.0
        %435 = vmatpush.xpose.msra.mxu0 0.0
        %436 = vmatpush.xpose.msra.mxu0 0.0
        %437 = vmatpush.xpose.msra.mxu0 0.0
        %438 = vmatpush.xpose.msra.mxu0 0.0
        %439 = vmatpush.xpose.msra.mxu0 0.0
        %440 = vmatpush.xpose.msra.mxu0 0.0
        %441 = vmatpush.xpose.msra.mxu0 %v424
        %442 = vmatmul.f32.gmra.mxu0 %v421
        %v443 = vpop.f32.mrf.mxu0
        %v444 = vadd.f32 0.0, %v443
        %445 = vdwg.mxu0
        %v446 = vmul.f32 %v444, 20.0
        %v448 = vperm.slane %v419, 0
        %v450 = vmul.f32 %v417, %v448
        %v451 = vsel %vm384, %v450, 0.0
        %452 = vadd.xlane.f32.xlu0 %v451
        %v453 = vpop.xlane.xlu0 %452
        %v454 = vmul.f32 %v453, 20.0
        %v455 = vxor.u32 %v454, 2147483648
        %v456 = vmul.f32 %v455, 1.442695
        %v457 = vpow.pop %v456
        %v458 = vadd.f32 %v457, 1.0
        %v459 = vrcp.pop %v458
        %v460 = vmul.f32 %v458, %v459
        %v461 = vsub.f32 1.0, %v460
        %v462 = vmul.f32 %v459, %v461
        %v463 = vadd.f32 %v459, %v462
        %vm464 = vweird.f32 %v458
        %vm465 = vweird.f32 %v459
        %vm466 = vmor %vm464, %vm465
        %v467 = vsel %vm466, %v459, %v463
        %v468 = vand.u32 2147483647, %v458
        %vm469 = vcmp.eq.f32.partialorder %v468, 8.507059e+37
        %v470 = vand.u32 %v458, 2147483648
        %v471 = vor.u32 1.1754944e-38, %v470
        %v472 = vsel %vm469, %v471, %v467
        %v473 = vmul.f32 1.0, %v472
        %v474 = vxor.u32 %v446, 2147483648
        %v475 = vmul.f32 %v474, 1.442695
        %v476 = vpow.pop %v475
        %v477 = vadd.f32 %v476, 1.0
        %v478 = vrcp.pop %v477
        %v479 = vmul.f32 %v477, %v478
        %v480 = vsub.f32 1.0, %v479
        %v481 = vmul.f32 %v478, %v480
        %v482 = vadd.f32 %v478, %v481
        %vm483 = vweird.f32 %v477
        %vm484 = vweird.f32 %v478
        %vm485 = vmor %vm483, %vm484
        %v486 = vsel %vm485, %v478, %v482
        %v487 = vand.u32 2147483647, %v477
        %vm488 = vcmp.eq.f32.partialorder %v487, 8.507059e+37
        %v489 = vand.u32 %v477, 2147483648
        %v490 = vor.u32 1.1754944e-38, %v489
        %v491 = vsel %vm488, %v490, %v486
        %v492 = vmul.f32 1.0, %v491
        %vm493 = vcmask 39936
        %v494 = vsel %vm493, %v492, 0.0
        %v495 = vrot.slane %v494, 4
        %v496 = vadd.f32 %v494, %v495
        %v497 = vrot.slane %v496, 2
        %v498 = vadd.f32 %v496, %v497
        %v499 = vrot.slane %v498, 1
        %v500 = vadd.f32 %v498, %v499
        %v501 = vadd.f32 %v500, 1e-05
        %v502 = vrcp.pop %v501
        %v503 = vmul.f32 %v501, %v502
        %v504 = vsub.f32 1.0, %v503
        %v505 = vmul.f32 %v502, %v504
        %v506 = vadd.f32 %v502, %v505
        %vm507 = vweird.f32 %v501
        %vm508 = vweird.f32 %v502
        %vm509 = vmor %vm507, %vm508
        %v510 = vsel %vm509, %v502, %v506
        %v511 = vand.u32 2147483647, %v501
        %vm512 = vcmp.eq.f32.partialorder %v511, 8.507059e+37
        %v513 = vand.u32 %v501, 2147483648
        %v514 = vor.u32 1.1754944e-38, %v513
        %v515 = vsel %vm512, %v514, %v510
        %v516 = vmul.f32 %v492, %v515
        %v517 = vrot.slane %v473, 4
        %v518 = vadd.f32 %v473, %v517
        %v519 = vrot.slane %v518, 2
        %v520 = vadd.f32 %v518, %v519
        %v521 = vrot.slane %v520, 1
        %v522 = vadd.f32 %v520, %v521
        %v523 = vadd.f32 %v522, 1e-05
        %v524 = vrcp.pop %v523
        %v525 = vmul.f32 %v523, %v524
        %v526 = vsub.f32 1.0, %v525
        %v527 = vmul.f32 %v524, %v526
        %v528 = vadd.f32 %v524, %v527
        %vm529 = vweird.f32 %v523
        %vm530 = vweird.f32 %v524
        %vm531 = vmor %vm529, %vm530
        %v532 = vsel %vm531, %v524, %v528
        %v533 = vand.u32 2147483647, %v523
        %vm534 = vcmp.eq.f32.partialorder %v533, 8.507059e+37
        %v535 = vand.u32 %v523, 2147483648
        %v536 = vor.u32 1.1754944e-38, %v535
        %v537 = vsel %vm534, %v536, %v532
        %v538 = vmul.f32 %v473, %v537
        %v539 = vmul.f32 %v382, %v538
        %v540 = vsel %vm384, %v539, 0.0
        %v541 = vrot.slane %v540, 4
        %v542 = vadd.f32 %v540, %v541
        %v543 = vrot.slane %v542, 2
        %v544 = vadd.f32 %v542, %v543
        %v545 = vrot.slane %v544, 1
        %v546 = vadd.f32 %v544, %v545
        %547 = vxpose.xlu0.b32.start [1/16] %v516, 128
        %548 = vxpose.xlu0.b32.cont [2/16] 0.0, 128
        %549 = vxpose.xlu0.b32.cont [3/16] 0.0, 128
        %550 = vxpose.xlu0.b32.cont [4/16] 0.0, 128
        %551 = vxpose.xlu0.b32.cont [5/16] 0.0, 128
        %552 = vxpose.xlu0.b32.cont [6/16] 0.0, 128
        %553 = vxpose.xlu0.b32.cont [7/16] 0.0, 128
        %554 = vxpose.xlu0.b32.cont [8/16] 0.0, 128
        %555 = vxpose.xlu0.b32.cont [9/16] 0.0, 128
        %556 = vxpose.xlu0.b32.cont [10/16] 0.0, 128
        %557 = vxpose.xlu0.b32.cont [11/16] 0.0, 128
        %558 = vxpose.xlu0.b32.cont [12/16] 0.0, 128
        %559 = vxpose.xlu0.b32.cont [13/16] 0.0, 128
        %560 = vxpose.xlu0.b32.cont [14/16] 0.0, 128
        %561 = vxpose.xlu0.b32.cont [15/16] 0.0, 128
        %562 = vxpose.xlu0.b32.end [16/16] 0.0, 128
        %v563 = vpop.trf.xlu0
        %v564 = vpop.trf.xlu0
        %v565 = vpop.trf.xlu0
        %v566 = vpop.trf.xlu0
        %v567 = vpop.trf.xlu0
        %v568 = vpop.trf.xlu0
        %v569 = vpop.trf.xlu0
        %v570 = vpop.trf.xlu0
        %v571 = vpop.trf.xlu0
        %v572 = vpop.trf.xlu0
        %v573 = vpop.trf.xlu0
        %v574 = vpop.trf.xlu0
        %v575 = vpop.trf.xlu0
        %v576 = vpop.trf.xlu0
        %v577 = vpop.trf.xlu0
        %v578 = vpop.trf.xlu0
        %v580 = vsel %vm360, %v563, 0
        %582 = vmatpush.msra.mxu0 0.0
        %583 = vmatpush.msra.mxu0 0.0
        %584 = vmatpush.msra.mxu0 0.0
        %585 = vmatpush.msra.mxu0 0.0
        %586 = vmatpush.msra.mxu0 0.0
        %587 = vmatpush.msra.mxu0 0.0
        %588 = vmatpush.msra.mxu0 0.0
        %589 = vmatpush.msra.mxu0 0.0
        %590 = vmatpush.msra.mxu0 0.0
        %591 = vmatpush.msra.mxu0 0.0
        %592 = vmatpush.msra.mxu0 0.0
        %593 = vmatpush.msra.mxu0 0.0
        %594 = vmatpush.msra.mxu0 0.0
        %595 = vmatpush.msra.mxu0 0.0
        %596 = vmatpush.msra.mxu0 0.0
        %597 = vmatpush.msra.mxu0 %v382
        %598 = vmatmul.f32.gmra.mxu0 %v580
        %v599 = vpop.f32.mrf.mxu0
        %v600 = vadd.f32 0.0, %v599
        %601 = vdwg.mxu0
        %v602 = vmul.f32 %v546, %v546
        %v603 = vsel %vm384, %v602, 0.0
        %604 = vadd.xlane.f32.xlu0 %v603
        %v605 = vpop.xlane.xlu0 %604
        %v606 = vrsqrt.pop %v605
        %v607 = vmul.f32 %v606, %v605
        %v608 = vmul.f32 %v607, %v606
        %v609 = vmul.f32 0.5, %v608
        %v610 = vsub.f32 1.5, %v609
        %v611 = vmul.f32 %v606, %v610
        %v612 = vmul.f32 %v605, %v611
        %vm613 = vcmp.eq.f32.partialorder %v605, inf
        %v614 = vsel %vm613, %v605, %v612
        %vm615 = vcmp.eq.f32.partialorder %v605, 0.0
        %v616 = vand.u32 %v605, 2147483648
        %v617 = vsel %vm615, %v616, %v614
        %v618 = vadd.f32 %v617, 1e-09
        %v619 = vrcp.pop %v618
        %v620 = vmul.f32 %v618, %v619
        %v621 = vsub.f32 1.0, %v620
        %v622 = vmul.f32 %v619, %v621
        %v623 = vadd.f32 %v619, %v622
        %vm624 = vweird.f32 %v618
        %vm625 = vweird.f32 %v619
        %vm626 = vmor %vm624, %vm625
        %v627 = vsel %vm626, %v619, %v623
        %v628 = vand.u32 2147483647, %v618
        %vm629 = vcmp.eq.f32.partialorder %v628, 8.507059e+37
        %v630 = vand.u32 %v618, 2147483648
        %v631 = vor.u32 1.1754944e-38, %v630
        %v632 = vsel %vm629, %v631, %v627
        %v633 = vmul.f32 %v546, %v632
        %v634 = vmul.f32 %v600, %v600
        %vm635 = vcmask 258048
        %v636 = vsel %vm635, %v634, 0.0
        %637 = vadd.xlane.f32.xlu0 %v636
        %v638 = vpop.xlane.xlu0 %637
        %v639 = vrsqrt.pop %v638
        %v640 = vmul.f32 %v639, %v638
        %v641 = vmul.f32 %v640, %v639
        %v642 = vmul.f32 0.5, %v641
        %v643 = vsub.f32 1.5, %v642
        %v644 = vmul.f32 %v639, %v643
        %v645 = vmul.f32 %v638, %v644
        %vm646 = vcmp.eq.f32.partialorder %v638, inf
        %v647 = vsel %vm646, %v638, %v645
        %vm648 = vcmp.eq.f32.partialorder %v638, 0.0
        %v649 = vand.u32 %v638, 2147483648
        %v650 = vsel %vm648, %v649, %v647
        %v651 = vadd.f32 %v650, 1e-09
        %v652 = vrcp.pop %v651
        %v653 = vmul.f32 %v651, %v652
        %v654 = vsub.f32 1.0, %v653
        %v655 = vmul.f32 %v652, %v654
        %v656 = vadd.f32 %v652, %v655
        %vm657 = vweird.f32 %v651
        %vm658 = vweird.f32 %v652
        %vm659 = vmor %vm657, %vm658
        %v660 = vsel %vm659, %v652, %v656
        %v661 = vand.u32 2147483647, %v651
        %vm662 = vcmp.eq.f32.partialorder %v661, 8.507059e+37
        %v663 = vand.u32 %v651, 2147483648
        %v664 = vor.u32 1.1754944e-38, %v663
        %v665 = vsel %vm662, %v664, %v660
        %v666 = vmul.f32 %v600, %v665
        %v668 = vsel %vm384, %v633, 0
        %670 = vmatpush.xpose.msra.mxu0 0.0
        %671 = vmatpush.xpose.msra.mxu0 0.0
        %672 = vmatpush.xpose.msra.mxu0 0.0
        %673 = vmatpush.xpose.msra.mxu0 0.0
        %674 = vmatpush.xpose.msra.mxu0 0.0
        %675 = vmatpush.xpose.msra.mxu0 0.0
        %676 = vmatpush.xpose.msra.mxu0 0.0
        %677 = vmatpush.xpose.msra.mxu0 0.0
        %678 = vmatpush.xpose.msra.mxu0 0.0
        %679 = vmatpush.xpose.msra.mxu0 0.0
        %680 = vmatpush.xpose.msra.mxu0 0.0
        %681 = vmatpush.xpose.msra.mxu0 0.0
        %682 = vmatpush.xpose.msra.mxu0 0.0
        %683 = vmatpush.xpose.msra.mxu0 0.0
        %684 = vmatpush.xpose.msra.mxu0 0.0
        %685 = vmatpush.xpose.msra.mxu0 %v424
        %686 = vmatmul.f32.gmra.mxu0 %v668
        %v687 = vpop.f32.mrf.mxu0
        %v688 = vadd.f32 0.0, %v687
        %689 = vdwg.mxu0
        %v690 = vmul.f32 %v688, 20.0
        %v691 = vmul.f32 %v666, %v418
        %v692 = vsel %vm635, %v691, 0.0
        %693 = vadd.xlane.f32.xlu0 %v692
        %v694 = vpop.xlane.xlu0 %693
        %v695 = vmul.f32 %v694, 20.0
        %vm696 = vcmask 32768
        %v697 = vsel %vm696, %v690, -inf
        %698 = vmax.xlane.f32.xlu0 %v697
        %v699 = vpop.xlane.xlu0 %698
        %v700 = vsub.f32 %v690, %v699
        %v701 = vmul.f32 %v700, 1.442695
        %v702 = vpow.pop %v701
        %v703 = vsel %vm696, %v702, 0.0
        %704 = vadd.xlane.f32.xlu0 %v703
        %v705 = vpop.xlane.xlu0 %704
        %v706 = vrcp.pop %v705
        %v707 = vmul.f32 %v705, %v706
        %v708 = vsub.f32 1.0, %v707
        %v709 = vmul.f32 %v706, %v708
        %v710 = vadd.f32 %v706, %v709
        %vm711 = vweird.f32 %v705
        %vm712 = vweird.f32 %v706
        %vm713 = vmor %vm711, %vm712
        %v714 = vsel %vm713, %v706, %v710
        %v715 = vand.u32 2147483647, %v705
        %vm716 = vcmp.eq.f32.partialorder %v715, 8.507059e+37
        %v717 = vand.u32 %v705, 2147483648
        %v718 = vor.u32 1.1754944e-38, %v717
        %v719 = vsel %vm716, %v718, %v714
        %v720 = vmul.f32 %v702, %v719
        %vm721 = vcmask 1044480
        %v722 = vsel %vm721, %v695, -inf
        %v723 = vrot.slane %v722, 4
        %v724 = vmax.f32 %v722, %v723
        %v725 = vrot.slane %v724, 2
        %v726 = vmax.f32 %v724, %v725
        %v727 = vrot.slane %v726, 1
        %v728 = vmax.f32 %v726, %v727
        %v729 = vsub.f32 %v695, %v728
        %v730 = vmul.f32 %v729, 1.442695
        %v731 = vpow.pop %v730
        %v732 = vsel %vm721, %v731, 0.0
        %v733 = vrot.slane %v732, 4
        %v734 = vadd.f32 %v732, %v733
        %v735 = vrot.slane %v734, 2
        %v736 = vadd.f32 %v734, %v735
        %v737 = vrot.slane %v736, 1
        %v738 = vadd.f32 %v736, %v737
        %v739 = vrcp.pop %v738
        %v740 = vmul.f32 %v738, %v739
        %v741 = vsub.f32 1.0, %v740
        %v742 = vmul.f32 %v739, %v741
        %v743 = vadd.f32 %v739, %v742
        %vm744 = vweird.f32 %v738
        %vm745 = vweird.f32 %v739
        %vm746 = vmor %vm744, %vm745
        %v747 = vsel %vm746, %v739, %v743
        %v748 = vand.u32 2147483647, %v738
        %vm749 = vcmp.eq.f32.partialorder %v748, 8.507059e+37
        %v750 = vand.u32 %v738, 2147483648
        %v751 = vor.u32 1.1754944e-38, %v750
        %v752 = vsel %vm749, %v751, %v747
        %v753 = vmul.f32 %v731, %v752
        %754 = vst.msk [vmem:[%s315] sm:$0x1] %vm696, %v720
        %vm755 = vcmask 4096
        %756 = vst.msk [vmem:[%s349] sm:$0x1f] %vm755, %v753
        %vm757 = vcmask 7168
        %758 = vst.msk [vmem:[%s353] sm:$0xff] %vm757, %v473
        %759 = vst.msk [vmem:[%s357] sm:$0xff] %vm493, %v446
        %p760 = scmp.lt.s32.totalorder %s23, 1
        %s761 = scalar_select %p760, %s23, 1
        %s762 = smul.addr %s761, 8
        %s763 = scalar_lea.vmem %s4, %s762
        %s764 = sand.u32 %s151, 1
        %s765 = scalar_lea.sflag [#allocation3], %s764
        %s766 = sand.u32 %s151, 1
        %s767 = scalar_lea.vmem [#allocation2], %s766
        %p768 = scmp.lt.s32.totalorder %s23, 1
        %s769 = scalar_select %p768, %s23, 1
        %s770 = smul.addr %s769, 8
        %s771 = scalar_lea.vmem %s6, %s770
        %p772 = scmp.lt.s32.totalorder %s23, 1
        %s773 = scalar_select %p772, %s23, 1
        %s774 = smul.addr %s773, 8
        %s775 = scalar_lea.vmem %s7, %s774
        %p776 = scmp.lt.s32.totalorder %s23, 1
        %s777 = scalar_select %p776, %s23, 1
        %s778 = smul.addr %s777, 8
        %s779 = scalar_lea.vmem %s8, %s778
        // Predicated region
        $region37: #{wstal_forward.3} parent=35 // pred_check
          %p780 = pneg %p135
        $region38: #{wstal_forward.3} parent=35 // pred_check_branch
          %782 = sbr.rel (%p780) target = $region40
        $region39: #{wstal_forward.3} parent=35 // pred_region
          _
        $region40: #{wstal_forward.3} parent=35 // pred_fallthru
          _
        // Predicated region
        $region41: #{wstal_forward.3} parent=35 // pred_check
          %p783 = pneg %p161
        $region42: #{wstal_forward.3} parent=35 // pred_check_branch
          %785 = sbr.rel (%p783) target = $region44
        $region43: #{wstal_forward.3} parent=35 // pred_region
          %787 = vsyncadd %s765, 0
          %s788 = scalar_lea.hbm %s5, %s23
          %s790 = sshll.u32 %s767, 4
          %s791 = int_to_ptr.vmem [resolvable:$true] %s790
          %s792 = sshll.u32 %s788, 4
          %s793 = int_to_ptr.hbm [resolvable:$true] %s792
          %795 = dma.vmem_to_hbm [thread:$0]  %s791, 16, %s793, %s765
        $region44: #{wstal_forward.3} parent=35 // pred_fallthru
          _
        // Predicated region
        $region45: #{wstal_forward.3} parent=35 // pred_check
          %p796 = pneg %p187
        $region46: #{wstal_forward.3} parent=35 // pred_check_branch
          %798 = sbr.rel (%p796) target = $region48
        $region47: #{wstal_forward.3} parent=35 // pred_region
          _
        $region48: #{wstal_forward.3} parent=35 // pred_fallthru
          _
        // Predicated region
        $region49: #{wstal_forward.3} parent=35 // pred_check
          %p799 = pneg %p213
        $region50: #{wstal_forward.3} parent=35 // pred_check_branch
          %801 = sbr.rel (%p799) target = $region52
        $region51: #{wstal_forward.3} parent=35 // pred_region
          _
        $region52: #{wstal_forward.3} parent=35 // pred_fallthru
          _
        // Predicated region
        $region53: #{wstal_forward.3} parent=35 // pred_check
          %p802 = pneg %p239
        $region54: #{wstal_forward.3} parent=35 // pred_check_branch
          %804 = sbr.rel (%p802) target = $region56
        $region55: #{wstal_forward.3} parent=35 // pred_region
          _
        $region56: #{wstal_forward.3} parent=35 // pred_fallthru
          _
      $region36: #{wstal_forward.3} parent=5 // pred_fallthru
        _
      %p805 = scmp.le.s32.totalorder 2, %s18
      // Predicated region
      $region57: #{wstal_forward.3} parent=5 // pred_check
        %p806 = pneg %p805
      $region58: #{wstal_forward.3} parent=5 // pred_check_branch
        %808 = sbr.rel (%p806) target = $region60
      $region59: #{wstal_forward.3} parent=5 // pred_region
        %s809 = ssub.s32 %s18, 2
        // Predicated region
        $region61: #{wstal_forward.3} parent=59 // pred_check
          %p810 = pneg %p141
        $region62: #{wstal_forward.3} parent=59 // pred_check_branch
          %812 = sbr.rel (%p810) target = $region64
        $region63: #{wstal_forward.3} parent=59 // pred_region
          %p813 = scmp.lt.s32.totalorder %s24, 1
          %s814 = scalar_select %p813, %s24, 1
          %s815 = smul.addr %s814, 8
          %s816 = scalar_lea.vmem %s4, %s815
        $region64: #{wstal_forward.3} parent=59 // pred_fallthru
          _
        // Predicated region
        $region65: #{wstal_forward.3} parent=59 // pred_check
          %p817 = pneg %p167
        $region66: #{wstal_forward.3} parent=59 // pred_check_branch
          %819 = sbr.rel (%p817) target = $region68
        $region67: #{wstal_forward.3} parent=59 // pred_region
          %s820 = sand.u32 %s152, 1
          %s821 = scalar_lea.sflag [#allocation3], %s820
          %s822 = sand.u32 %s152, 1
          %s823 = scalar_lea.vmem [#allocation2], %s822
          %825 = dma.done %s821, 16
        $region68: #{wstal_forward.3} parent=59 // pred_fallthru
          _
        // Predicated region
        $region69: #{wstal_forward.3} parent=59 // pred_check
          %p826 = pneg %p193
        $region70: #{wstal_forward.3} parent=59 // pred_check_branch
          %828 = sbr.rel (%p826) target = $region72
        $region71: #{wstal_forward.3} parent=59 // pred_region
          %p829 = scmp.lt.s32.totalorder %s24, 1
          %s830 = scalar_select %p829, %s24, 1
          %s831 = smul.addr %s830, 8
          %s832 = scalar_lea.vmem %s6, %s831
        $region72: #{wstal_forward.3} parent=59 // pred_fallthru
          _
        // Predicated region
        $region73: #{wstal_forward.3} parent=59 // pred_check
          %p833 = pneg %p219
        $region74: #{wstal_forward.3} parent=59 // pred_check_branch
          %835 = sbr.rel (%p833) target = $region76
        $region75: #{wstal_forward.3} parent=59 // pred_region
          %p836 = scmp.lt.s32.totalorder %s24, 1
          %s837 = scalar_select %p836, %s24, 1
          %s838 = smul.addr %s837, 8
          %s839 = scalar_lea.vmem %s7, %s838
        $region76: #{wstal_forward.3} parent=59 // pred_fallthru
          _
        // Predicated region
        $region77: #{wstal_forward.3} parent=59 // pred_check
          %p840 = pneg %p245
        $region78: #{wstal_forward.3} parent=59 // pred_check_branch
          %842 = sbr.rel (%p840) target = $region80
        $region79: #{wstal_forward.3} parent=59 // pred_region
          %p843 = scmp.lt.s32.totalorder %s24, 1
          %s844 = scalar_select %p843, %s24, 1
          %s845 = smul.addr %s844, 8
          %s846 = scalar_lea.vmem %s8, %s845
        $region80: #{wstal_forward.3} parent=59 // pred_fallthru
          _
      $region60: #{wstal_forward.3} parent=5 // pred_fallthru
        _
    $region6: #{wstal_forward.3} parent=1 // loop_footer
      %s22 = sadd.s32 1, %s18
    $region7: #{wstal_forward.3} parent=1 // loop_footer_branch
      %17 = sbr.rel target = $region3
    $region8: #{wstal_forward.3} parent=1 // loop_exit
      _
    %847 = vsyncpa [#allocation3], 1
    %s848 = scalar_lea.sflag [#allocation3], 1
    %849 = vsyncpa %s848, 1

// kernel: wstal_forward.2
$region0: #{wstal_forward.2}
  #allocation0 [shape = 'u32[]', space=smem, size = 0x4, offset = 0x4, fixed_abs, tag = 'smem constant byte address 0x4 - core index']
  #allocation1 [shape = 'u32[72,128]{1,0:T(1,128)}', space=vmem, size = 0x9000, scoped, tag = 'internal scratch']
  %s0 = inlined_call_operand.vmem [shape: f32[2,8,32], index: 0, kind: input, shape index: {}]
  %s1 = inlined_call_operand.vmem [shape: f32[32,32], index: 1, kind: input, shape index: {}]
  %s2 = inlined_call_operand.vmem [shape: f32[1,32], index: 2, kind: input, shape index: {}]
  %s3 = inlined_call_operand.vmem [shape: f32[8,32], index: 3, kind: input, shape index: {}]
  %s4 = inlined_call_operand.vmem [shape: f32[5,32], index: 4, kind: input, shape index: {}]
  %s5 = inlined_call_operand.vmem [shape: f32[1,32], index: 5, kind: input, shape index: {}]
  %s6 = inlined_call_operand.hbm [shape: f32[2,8,32], index: 6, kind: output, shape index: {0}]
  %s7 = inlined_call_operand.hbm [shape: f32[2,8,32], index: 7, kind: output, shape index: {1}]
  %s8 = inlined_call_operand.vmem [shape: f32[2,8,5], index: 8, kind: output, shape index: {2}]
  %s9 = inlined_call_operand.vmem [shape: f32[2,8,8], index: 9, kind: output, shape index: {3}]
  %s10 = inlined_call_operand.vmem [shape: f32[2,8,32], index: 10, kind: output, shape index: {4}]
  %s11 = inlined_call_operand.hbm [shape: f32[2,1,5], index: 11, kind: output, shape index: {5}]
  %s12 = inlined_call_operand.vmem [shape: f32[2,5,1], index: 12, kind: output, shape index: {6}]
  %s13 = inlined_call_operand.vmem [shape: f32[2,8,1], index: 13, kind: output, shape index: {7}]
  %s14 = inlined_call_operand.vmem [shape: f32[2,8,5], index: 14, kind: output, shape index: {8}]
  %15 = xla_tuple %s6, %s7, %s8, %s9, %s10, %s11, %s12, %s13, %s14
  %s16 = sld [smem:[#allocation0]]
  $region121: #{wstal_forward.2} parent=0
    _
  %s18 = ssub.s32 1, %s16
  %s19 = scalar_select 0, %s18, %s16
  $region1: #{wstal_forward.2} parent=0
    #allocation2 [shape = 'u8[8192]{0}', space=vmem, size = 0x2000, scoped, tag = 'output window, operand 0']
    #allocation3 [shape = 's32[2]{0}', space=sflag, size = 0x8, scoped, tag = 'scoped memory for wstal_forward.2']
    #allocation4 [shape = 'u8[8192]{0}', space=vmem, size = 0x2000, scoped, tag = 'output window, operand 1']
    #allocation5 [shape = 's32[2]{0}', space=sflag, size = 0x8, scoped, tag = 'scoped memory for wstal_forward.2']
    #allocation6 [shape = 'u8[1024]{0}', space=vmem, size = 0x400, scoped, tag = 'output window, operand 5']
    %20 = vsyncpa [#allocation3], 0
    %s21 = scalar_lea.sflag [#allocation3], 1
    %22 = vsyncpa %s21, 0
    %23 = vsyncpa [#allocation5], 0
    %s24 = scalar_lea.sflag [#allocation5], 1
    %25 = vsyncpa %s24, 0
    loop: start=0, step=1, limit=4
    $region2: #{wstal_forward.2} parent=1 // loop_pre_header
      _
    $region3: #{wstal_forward.2} parent=1 // loop_header
      %s27 = sphi 0, %s31
      %p28 = scmp.ge.s32.totalorder %s27, 4
      %s37 = sphi 0, %s39
      %s40 = sphi 0, %s37
      %s41 = sphi 0, %s40
      %s57 = sphi 0, %s41
      %s61 = sphi 0, %s61
      %s63 = sphi 0, %s61
      %s64 = sphi 0, %s63
      %s78 = sphi 0, %s64
      %s82 = sphi 0, %s82
      %s84 = sphi 0, %s82
      %s85 = sphi 0, %s84
      %s99 = sphi 0, %s85
      %s103 = sphi 0, %s103
      %s105 = sphi 0, %s103
      %s106 = sphi 0, %s105
      %s120 = sphi 0, %s106
      %s124 = sphi 0, %s124
      %s126 = sphi 0, %s124
      %s127 = sphi 0, %s126
      %s141 = sphi 0, %s127
      %s145 = sphi 0, %s145
      %s147 = sphi 0, %s145
      %s148 = sphi 0, %s147
      %s162 = sphi 0, %s148
      %s168 = sphi 0, %s170
      %s171 = sphi 0, %s168
      %s172 = sphi 0, %s171
      %s188 = sphi 0, %s172
      %s194 = sphi 0, %s196
      %s197 = sphi 0, %s194
      %s198 = sphi 0, %s197
      %s214 = sphi 0, %s198
      %s220 = sphi 0, %s222
      %s223 = sphi 0, %s220
      %s224 = sphi 0, %s223
      %s240 = sphi 0, %s224
      %s246 = sphi 0, %s248
      %s249 = sphi 0, %s246
      %s250 = sphi 0, %s249
      %s266 = sphi 0, %s250
      %s272 = sphi 0, %s274
      %s275 = sphi 0, %s272
      %s276 = sphi 0, %s275
      %s292 = sphi 0, %s276
      %s298 = sphi 0, %s300
      %s301 = sphi 0, %s298
      %s302 = sphi 0, %s301
      %s318 = sphi 0, %s302
      %s324 = sphi 0, %s326
      %s327 = sphi 0, %s324
      %s328 = sphi 0, %s327
      %s344 = sphi 0, %s328
      %s350 = sphi 0, %s352
      %s353 = sphi 0, %s350
      %s354 = sphi 0, %s353
      %s370 = sphi 0, %s354
      %s376 = sphi 0, %s378
      %s379 = sphi 0, %s376
      %s380 = sphi 0, %s379
      %s396 = sphi 0, %s380
    $region4: #{wstal_forward.2} parent=1 // loop_header_branch
      %30 = sbr.rel (%p28) target = $region8
    $region5: #{wstal_forward.2} parent=1 // loop_body
      %s32 = ssub.s32 %s27, 1
      %s33 = ssub.s32 %s27, 2
      %s34 = sadd.s32 %s27, 1
      %s35 = ssub.s32 %s27, %s34
      %p36 = scmp.eq.s32.totalorder %s35, 0
      %s38 = sadd.s32 %s37, 1
      %s39 = scalar_select %p36, %s37, %s38
      %p42 = pneg %p36
      %p43 = scmp.eq.s32.totalorder %s27, 1
      %p44 = por %p42, %p43
      %p45 = scmp.ne.s32.totalorder %s37, %s40
      %p46 = scmp.eq.s32.totalorder %s27, 0
      %p47 = por %p45, %p46
      %p48 = scmp.ne.s32.totalorder %s37, %s40
      %p49 = scmp.eq.s32.totalorder %s32, 1
      %p50 = por %p48, %p49
      %p51 = scmp.ne.s32.totalorder %s40, %s41
      %p52 = scmp.eq.s32.totalorder %s32, 0
      %p53 = por %p51, %p52
      %p54 = scmp.ne.s32.totalorder %s40, %s41
      %p55 = scmp.eq.s32.totalorder %s33, 1
      %p56 = por %p54, %p55
      %p58 = scmp.ne.s32.totalorder %s41, %s57
      %p59 = scmp.eq.s32.totalorder %s33, 0
      %p60 = por %p58, %p59
      %s62 = sadd.s32 %s61, 1
      %p65 = scmp.eq.s32.totalorder %s27, 1
      %p66 = scmp.ne.s32.totalorder %s61, %s63
      %p67 = scmp.eq.s32.totalorder %s27, 0
      %p68 = por %p66, %p67
      %p69 = scmp.ne.s32.totalorder %s61, %s63
      %p70 = scmp.eq.s32.totalorder %s32, 1
      %p71 = por %p69, %p70
      %p72 = scmp.ne.s32.totalorder %s63, %s64
      %p73 = scmp.eq.s32.totalorder %s32, 0
      %p74 = por %p72, %p73
      %p75 = scmp.ne.s32.totalorder %s63, %s64
      %p76 = scmp.eq.s32.totalorder %s33, 1
      %p77 = por %p75, %p76
      %p79 = scmp.ne.s32.totalorder %s64, %s78
      %p80 = scmp.eq.s32.totalorder %s33, 0
      %p81 = por %p79, %p80
      %s83 = sadd.s32 %s82, 1
      %p86 = scmp.eq.s32.totalorder %s27, 1
      %p87 = scmp.ne.s32.totalorder %s82, %s84
      %p88 = scmp.eq.s32.totalorder %s27, 0
      %p89 = por %p87, %p88
      %p90 = scmp.ne.s32.totalorder %s82, %s84
      %p91 = scmp.eq.s32.totalorder %s32, 1
      %p92 = por %p90, %p91
      %p93 = scmp.ne.s32.totalorder %s84, %s85
      %p94 = scmp.eq.s32.totalorder %s32, 0
      %p95 = por %p93, %p94
      %p96 = scmp.ne.s32.totalorder %s84, %s85
      %p97 = scmp.eq.s32.totalorder %s33, 1
      %p98 = por %p96, %p97
      %p100 = scmp.ne.s32.totalorder %s85, %s99
      %p101 = scmp.eq.s32.totalorder %s33, 0
      %p102 = por %p100, %p101
      %s104 = sadd.s32 %s103, 1
      %p107 = scmp.eq.s32.totalorder %s27, 1
      %p108 = scmp.ne.s32.totalorder %s103, %s105
      %p109 = scmp.eq.s32.totalorder %s27, 0
      %p110 = por %p108, %p109
      %p111 = scmp.ne.s32.totalorder %s103, %s105
      %p112 = scmp.eq.s32.totalorder %s32, 1
      %p113 = por %p111, %p112
      %p114 = scmp.ne.s32.totalorder %s105, %s106
      %p115 = scmp.eq.s32.totalorder %s32, 0
      %p116 = por %p114, %p115
      %p117 = scmp.ne.s32.totalorder %s105, %s106
      %p118 = scmp.eq.s32.totalorder %s33, 1
      %p119 = por %p117, %p118
      %p121 = scmp.ne.s32.totalorder %s106, %s120
      %p122 = scmp.eq.s32.totalorder %s33, 0
      %p123 = por %p121, %p122
      %s125 = sadd.s32 %s124, 1
      %p128 = scmp.eq.s32.totalorder %s27, 1
      %p129 = scmp.ne.s32.totalorder %s124, %s126
      %p130 = scmp.eq.s32.totalorder %s27, 0
      %p131 = por %p129, %p130
      %p132 = scmp.ne.s32.totalorder %s124, %s126
      %p133 = scmp.eq.s32.totalorder %s32, 1
      %p134 = por %p132, %p133
      %p135 = scmp.ne.s32.totalorder %s126, %s127
      %p136 = scmp.eq.s32.totalorder %s32, 0
      %p137 = por %p135, %p136
      %p138 = scmp.ne.s32.totalorder %s126, %s127
      %p139 = scmp.eq.s32.totalorder %s33, 1
      %p140 = por %p138, %p139
      %p142 = scmp.ne.s32.totalorder %s127, %s141
      %p143 = scmp.eq.s32.totalorder %s33, 0
      %p144 = por %p142, %p143
      %s146 = sadd.s32 %s145, 1
      %p149 = scmp.eq.s32.totalorder %s27, 1
      %p150 = scmp.ne.s32.totalorder %s145, %s147
      %p151 = scmp.eq.s32.totalorder %s27, 0
      %p152 = por %p150, %p151
      %p153 = scmp.ne.s32.totalorder %s145, %s147
      %p154 = scmp.eq.s32.totalorder %s32, 1
      %p155 = por %p153, %p154
      %p156 = scmp.ne.s32.totalorder %s147, %s148
      %p157 = scmp.eq.s32.totalorder %s32, 0
      %p158 = por %p156, %p157
      %p159 = scmp.ne.s32.totalorder %s147, %s148
      %p160 = scmp.eq.s32.totalorder %s33, 1
      %p161 = por %p159, %p160
      %p163 = scmp.ne.s32.totalorder %s148, %s162
      %p164 = scmp.eq.s32.totalorder %s33, 0
      %p165 = por %p163, %p164
      %s166 = ssub.s32 %s27, %s34
      %p167 = scmp.eq.s32.totalorder %s166, 0
      %s169 = sadd.s32 %s168, 1
      %s170 = scalar_select %p167, %s168, %s169
      %p173 = pneg %p167
      %p174 = scmp.eq.s32.totalorder %s27, 1
      %p175 = por %p173, %p174
      %p176 = scmp.ne.s32.totalorder %s168, %s171
      %p177 = scmp.eq.s32.totalorder %s27, 0
      %p178 = por %p176, %p177
      %p179 = scmp.ne.s32.totalorder %s168, %s171
      %p180 = scmp.eq.s32.totalorder %s32, 1
      %p181 = por %p179, %p180
      %p182 = scmp.ne.s32.totalorder %s171, %s172
      %p183 = scmp.eq.s32.totalorder %s32, 0
      %p184 = por %p182, %p183
      %p185 = scmp.ne.s32.totalorder %s171, %s172
      %p186 = scmp.eq.s32.totalorder %s33, 1
      %p187 = por %p185, %p186
      %p189 = scmp.ne.s32.totalorder %s172, %s188
      %p190 = scmp.eq.s32.totalorder %s33, 0
      %p191 = por %p189, %p190
      %s192 = ssub.s32 %s27, %s34
      %p193 = scmp.eq.s32.totalorder %s192, 0
      %s195 = sadd.s32 %s194, 1
      %s196 = scalar_select %p193, %s194, %s195
      %p199 = pneg %p193
      %p200 = scmp.eq.s32.totalorder %s27, 1
      %p201 = por %p199, %p200
      %p202 = scmp.ne.s32.totalorder %s194, %s197
      %p203 = scmp.eq.s32.totalorder %s27, 0
      %p204 = por %p202, %p203
      %p205 = scmp.ne.s32.totalorder %s194, %s197
      %p206 = scmp.eq.s32.totalorder %s32, 1
      %p207 = por %p205, %p206
      %p208 = scmp.ne.s32.totalorder %s197, %s198
      %p209 = scmp.eq.s32.totalorder %s32, 0
      %p210 = por %p208, %p209
      %p211 = scmp.ne.s32.totalorder %s197, %s198
      %p212 = scmp.eq.s32.totalorder %s33, 1
      %p213 = por %p211, %p212
      %p215 = scmp.ne.s32.totalorder %s198, %s214
      %p216 = scmp.eq.s32.totalorder %s33, 0
      %p217 = por %p215, %p216
      %s218 = ssub.s32 %s27, %s34
      %p219 = scmp.eq.s32.totalorder %s218, 0
      %s221 = sadd.s32 %s220, 1
      %s222 = scalar_select %p219, %s220, %s221
      %p225 = pneg %p219
      %p226 = scmp.eq.s32.totalorder %s27, 1
      %p227 = por %p225, %p226
      %p228 = scmp.ne.s32.totalorder %s220, %s223
      %p229 = scmp.eq.s32.totalorder %s27, 0
      %p230 = por %p228, %p229
      %p231 = scmp.ne.s32.totalorder %s220, %s223
      %p232 = scmp.eq.s32.totalorder %s32, 1
      %p233 = por %p231, %p232
      %p234 = scmp.ne.s32.totalorder %s223, %s224
      %p235 = scmp.eq.s32.totalorder %s32, 0
      %p236 = por %p234, %p235
      %p237 = scmp.ne.s32.totalorder %s223, %s224
      %p238 = scmp.eq.s32.totalorder %s33, 1
      %p239 = por %p237, %p238
      %p241 = scmp.ne.s32.totalorder %s224, %s240
      %p242 = scmp.eq.s32.totalorder %s33, 0
      %p243 = por %p241, %p242
      %s244 = ssub.s32 %s27, %s34
      %p245 = scmp.eq.s32.totalorder %s244, 0
      %s247 = sadd.s32 %s246, 1
      %s248 = scalar_select %p245, %s246, %s247
      %p251 = pneg %p245
      %p252 = scmp.eq.s32.totalorder %s27, 1
      %p253 = por %p251, %p252
      %p254 = scmp.ne.s32.totalorder %s246, %s249
      %p255 = scmp.eq.s32.totalorder %s27, 0
      %p256 = por %p254, %p255
      %p257 = scmp.ne.s32.totalorder %s246, %s249
      %p258 = scmp.eq.s32.totalorder %s32, 1
      %p259 = por %p257, %p258
      %p260 = scmp.ne.s32.totalorder %s249, %s250
      %p261 = scmp.eq.s32.totalorder %s32, 0
      %p262 = por %p260, %p261
      %p263 = scmp.ne.s32.totalorder %s249, %s250
      %p264 = scmp.eq.s32.totalorder %s33, 1
      %p265 = por %p263, %p264
      %p267 = scmp.ne.s32.totalorder %s250, %s266
      %p268 = scmp.eq.s32.totalorder %s33, 0
      %p269 = por %p267, %p268
      %s270 = ssub.s32 %s27, %s34
      %p271 = scmp.eq.s32.totalorder %s270, 0
      %s273 = sadd.s32 %s272, 1
      %s274 = scalar_select %p271, %s272, %s273
      %p277 = pneg %p271
      %p278 = scmp.eq.s32.totalorder %s27, 1
      %p279 = por %p277, %p278
      %p280 = scmp.ne.s32.totalorder %s272, %s275
      %p281 = scmp.eq.s32.totalorder %s27, 0
      %p282 = por %p280, %p281
      %p283 = scmp.ne.s32.totalorder %s272, %s275
      %p284 = scmp.eq.s32.totalorder %s32, 1
      %p285 = por %p283, %p284
      %p286 = scmp.ne.s32.totalorder %s275, %s276
      %p287 = scmp.eq.s32.totalorder %s32, 0
      %p288 = por %p286, %p287
      %p289 = scmp.ne.s32.totalorder %s275, %s276
      %p290 = scmp.eq.s32.totalorder %s33, 1
      %p291 = por %p289, %p290
      %p293 = scmp.ne.s32.totalorder %s276, %s292
      %p294 = scmp.eq.s32.totalorder %s33, 0
      %p295 = por %p293, %p294
      %s296 = ssub.s32 %s27, %s34
      %p297 = scmp.eq.s32.totalorder %s296, 0
      %s299 = sadd.s32 %s298, 1
      %s300 = scalar_select %p297, %s298, %s299
      %p303 = pneg %p297
      %p304 = scmp.eq.s32.totalorder %s27, 1
      %p305 = por %p303, %p304
      %p306 = scmp.ne.s32.totalorder %s298, %s301
      %p307 = scmp.eq.s32.totalorder %s27, 0
      %p308 = por %p306, %p307
      %p309 = scmp.ne.s32.totalorder %s298, %s301
      %p310 = scmp.eq.s32.totalorder %s32, 1
      %p311 = por %p309, %p310
      %p312 = scmp.ne.s32.totalorder %s301, %s302
      %p313 = scmp.eq.s32.totalorder %s32, 0
      %p314 = por %p312, %p313
      %p315 = scmp.ne.s32.totalorder %s301, %s302
      %p316 = scmp.eq.s32.totalorder %s33, 1
      %p317 = por %p315, %p316
      %p319 = scmp.ne.s32.totalorder %s302, %s318
      %p320 = scmp.eq.s32.totalorder %s33, 0
      %p321 = por %p319, %p320
      %s322 = ssub.s32 %s27, %s34
      %p323 = scmp.eq.s32.totalorder %s322, 0
      %s325 = sadd.s32 %s324, 1
      %s326 = scalar_select %p323, %s324, %s325
      %p329 = pneg %p323
      %p330 = scmp.eq.s32.totalorder %s27, 1
      %p331 = por %p329, %p330
      %p332 = scmp.ne.s32.totalorder %s324, %s327
      %p333 = scmp.eq.s32.totalorder %s27, 0
      %p334 = por %p332, %p333
      %p335 = scmp.ne.s32.totalorder %s324, %s327
      %p336 = scmp.eq.s32.totalorder %s32, 1
      %p337 = por %p335, %p336
      %p338 = scmp.ne.s32.totalorder %s327, %s328
      %p339 = scmp.eq.s32.totalorder %s32, 0
      %p340 = por %p338, %p339
      %p341 = scmp.ne.s32.totalorder %s327, %s328
      %p342 = scmp.eq.s32.totalorder %s33, 1
      %p343 = por %p341, %p342
      %p345 = scmp.ne.s32.totalorder %s328, %s344
      %p346 = scmp.eq.s32.totalorder %s33, 0
      %p347 = por %p345, %p346
      %s348 = ssub.s32 %s27, %s34
      %p349 = scmp.eq.s32.totalorder %s348, 0
      %s351 = sadd.s32 %s350, 1
      %s352 = scalar_select %p349, %s350, %s351
      %p355 = pneg %p349
      %p356 = scmp.eq.s32.totalorder %s27, 1
      %p357 = por %p355, %p356
      %p358 = scmp.ne.s32.totalorder %s350, %s353
      %p359 = scmp.eq.s32.totalorder %s27, 0
      %p360 = por %p358, %p359
      %p361 = scmp.ne.s32.totalorder %s350, %s353
      %p362 = scmp.eq.s32.totalorder %s32, 1
      %p363 = por %p361, %p362
      %p364 = scmp.ne.s32.totalorder %s353, %s354
      %p365 = scmp.eq.s32.totalorder %s32, 0
      %p366 = por %p364, %p365
      %p367 = scmp.ne.s32.totalorder %s353, %s354
      %p368 = scmp.eq.s32.totalorder %s33, 1
      %p369 = por %p367, %p368
      %p371 = scmp.ne.s32.totalorder %s354, %s370
      %p372 = scmp.eq.s32.totalorder %s33, 0
      %p373 = por %p371, %p372
      %s374 = ssub.s32 %s27, %s34
      %p375 = scmp.eq.s32.totalorder %s374, 0
      %s377 = sadd.s32 %s376, 1
      %s378 = scalar_select %p375, %s376, %s377
      %p381 = pneg %p375
      %p382 = scmp.eq.s32.totalorder %s27, 1
      %p383 = por %p381, %p382
      %p384 = scmp.ne.s32.totalorder %s376, %s379
      %p385 = scmp.eq.s32.totalorder %s27, 0
      %p386 = por %p384, %p385
      %p387 = scmp.ne.s32.totalorder %s376, %s379
      %p388 = scmp.eq.s32.totalorder %s32, 1
      %p389 = por %p387, %p388
      %p390 = scmp.ne.s32.totalorder %s379, %s380
      %p391 = scmp.eq.s32.totalorder %s32, 0
      %p392 = por %p390, %p391
      %p393 = scmp.ne.s32.totalorder %s379, %s380
      %p394 = scmp.eq.s32.totalorder %s33, 1
      %p395 = por %p393, %p394
      %p397 = scmp.ne.s32.totalorder %s380, %s396
      %p398 = scmp.eq.s32.totalorder %s33, 0
      %p399 = por %p397, %p398
      %p400 = scmp.le.s32.totalorder 1, %s27
      %p401 = scmp.lt.s32.totalorder %s27, 3
      %p402 = pnand %p400, %p401
      %p403 = pneg %p402
      // Predicated region
      $region9: #{wstal_forward.2} parent=5 // pred_check
        _
      $region10: #{wstal_forward.2} parent=5 // pred_check_branch
        %405 = sbr.rel (%p402) target = $region12
      $region11: #{wstal_forward.2} parent=5 // pred_region
        %s406 = ssub.s32 %s27, 1
        // Predicated region
        $region13: #{wstal_forward.2} parent=11 // pred_check
          %p407 = pneg %p74
        $region14: #{wstal_forward.2} parent=11 // pred_check_branch
          %409 = sbr.rel (%p407) target = $region16
        $region15: #{wstal_forward.2} parent=11 // pred_region
          _
        $region16: #{wstal_forward.2} parent=11 // pred_fallthru
          _
        // Predicated region
        $region17: #{wstal_forward.2} parent=11 // pred_check
          %p410 = pneg %p95
        $region18: #{wstal_forward.2} parent=11 // pred_check_branch
          %412 = sbr.rel (%p410) target = $region20
        $region19: #{wstal_forward.2} parent=11 // pred_region
          _
        $region20: #{wstal_forward.2} parent=11 // pred_fallthru
          _
        // Predicated region
        $region21: #{wstal_forward.2} parent=11 // pred_check
          %p413 = pneg %p116
        $region22: #{wstal_forward.2} parent=11 // pred_check_branch
          %415 = sbr.rel (%p413) target = $region24
        $region23: #{wstal_forward.2} parent=11 // pred_region
          _
        $region24: #{wstal_forward.2} parent=11 // pred_fallthru
          _
        // Predicated region
        $region25: #{wstal_forward.2} parent=11 // pred_check
          %p416 = pneg %p137
        $region26: #{wstal_forward.2} parent=11 // pred_check_branch
          %418 = sbr.rel (%p416) target = $region28
        $region27: #{wstal_forward.2} parent=11 // pred_region
          _
        $region28: #{wstal_forward.2} parent=11 // pred_fallthru
          _
        // Predicated region
        $region29: #{wstal_forward.2} parent=11 // pred_check
          %p419 = pneg %p158
        $region30: #{wstal_forward.2} parent=11 // pred_check_branch
          %421 = sbr.rel (%p419) target = $region32
        $region31: #{wstal_forward.2} parent=11 // pred_region
          _
        $region32: #{wstal_forward.2} parent=11 // pred_fallthru
          _
      $region12: #{wstal_forward.2} parent=5 // pred_fallthru
        _
      %p422 = scmp.lt.s32.totalorder %s27, 2
      // Predicated region
      $region33: #{wstal_forward.2} parent=5 // pred_check
        %p423 = pneg %p422
      $region34: #{wstal_forward.2} parent=5 // pred_check_branch
        %425 = sbr.rel (%p423) target = $region36
      $region35: #{wstal_forward.2} parent=5 // pred_region
        // Predicated region
        $region37: #{wstal_forward.2} parent=35 // pred_check
          %p426 = pneg %p47
        $region38: #{wstal_forward.2} parent=35 // pred_check_branch
          %428 = sbr.rel (%p426) target = $region40
        $region39: #{wstal_forward.2} parent=35 // pred_region
          %p429 = scmp.lt.s32.totalorder %s27, 1
          %s430 = scalar_select %p429, %s27, 1
          %s431 = smul.addr %s430, 8
          %s432 = scalar_lea.vmem %s0, %s431
        $region40: #{wstal_forward.2} parent=35 // pred_fallthru
          _
      $region36: #{wstal_forward.2} parent=5 // pred_fallthru
        _
      %p433 = scmp.le.s32.totalorder 1, %s27
      %p434 = scmp.lt.s32.totalorder %s27, 3
      %p435 = pnand %p433, %p434
      %p436 = pneg %p435
      // Predicated region
      $region41: #{wstal_forward.2} parent=5 // pred_check
        _
      $region42: #{wstal_forward.2} parent=5 // pred_check_branch
        %438 = sbr.rel (%p435) target = $region44
      $region43: #{wstal_forward.2} parent=5 // pred_region
        %s439 = ssub.s32 %s27, 1
        %p440 = scmp.lt.s32.totalorder %s32, 1
        %s441 = scalar_select %p440, %s32, 1
        %s442 = smul.addr %s441, 8
        %s443 = scalar_lea.vmem %s0, %s442
        %p444 = pneg %p53
        %p445 = pneg %p50
        %p446 = pneg %p74
        %p447 = pneg %p71
        %p448 = pneg %p95
        %p449 = pneg %p92
        %p450 = pneg %p116
        %p451 = pneg %p113
        %p452 = pneg %p137
        %p453 = pneg %p134
        %p454 = pneg %p158
        %p455 = pneg %p155
        %p456 = pneg %p184
        %p457 = pneg %p181
        %s458 = sand.u32 %s171, 1
        %s459 = scalar_lea.sflag [#allocation3], %s458
        %s460 = sand.u32 %s171, 1
        %s461 = smul.addr %s460, 8
        %s462 = scalar_lea.vmem [#allocation2], %s461
        %p463 = pneg %p210
        %p464 = pneg %p207
        %s465 = sand.u32 %s32, 1
        %s466 = scalar_lea.sflag [#allocation5], %s465
        %s467 = sand.u32 %s197, 1
        %s468 = smul.addr %s467, 8
        %s469 = scalar_lea.vmem [#allocation4], %s468
        %p470 = pneg %p236
        %p471 = pneg %p233
        %p472 = scmp.lt.s32.totalorder %s32, 1
        %s473 = scalar_select %p472, %s32, 1
        %s474 = smul.addr %s473, 8
        %s475 = scalar_lea.vmem %s8, %s474
        %p476 = pneg %p262
        %p477 = pneg %p259
        %p478 = scmp.lt.s32.totalorder %s32, 1
        %s479 = scalar_select %p478, %s32, 1
        %s480 = smul.addr %s479, 8
        %s481 = scalar_lea.vmem %s9, %s480
        %p482 = pneg %p288
        %p483 = pneg %p285
        %p484 = scmp.lt.s32.totalorder %s32, 1
        %s485 = scalar_select %p484, %s32, 1
        %s486 = smul.addr %s485, 8
        %s487 = scalar_lea.vmem %s10, %s486
        %p488 = pneg %p314
        %p489 = pneg %p311
        %s490 = sand.u32 %s32, 1
        %s491 = scalar_lea.sflag [#allocation5], %s490
        %s492 = sand.u32 %s301, 1
        %s493 = scalar_lea.vmem [#allocation6], %s492
        %p494 = pneg %p340
        %p495 = pneg %p337
        %p496 = scmp.lt.s32.totalorder %s32, 1
        %s497 = scalar_select %p496, %s32, 1
        %s498 = smul.addr %s497, 8
        %s499 = scalar_lea.vmem %s12, %s498
        %p500 = pneg %p366
        %p501 = pneg %p363
        %p502 = scmp.lt.s32.totalorder %s32, 1
        %s503 = scalar_select %p502, %s32, 1
        %s504 = smul.addr %s503, 8
        %s505 = scalar_lea.vmem %s13, %s504
        %p506 = pneg %p392
        %p507 = pneg %p389
        %p508 = scmp.lt.s32.totalorder %s32, 1
        %s509 = scalar_select %p508, %s32, 1
        %s510 = smul.addr %s509, 8
        %s511 = scalar_lea.vmem %s14, %s510
        %p512 = scmp.lt.s32.totalorder %s32, 1
        %s513 = scalar_select %p512, %s32, 1
        %s514 = smul.addr %s513, 8
        %s515 = scalar_lea.vmem %s0, %s514
        %p516 = scmp.lt.s32.totalorder %s32, 1
        %s517 = scalar_select %p516, %s32, 1
        %s518 = smul.addr %s517, 8
        %s519 = scalar_lea.vmem %s8, %s518
        %p520 = scmp.lt.s32.totalorder %s32, 1
        %s521 = scalar_select %p520, %s32, 1
        %s522 = smul.addr %s521, 8
        %s523 = scalar_lea.vmem %s9, %s522
        %p524 = scmp.lt.s32.totalorder %s32, 1
        %s525 = scalar_select %p524, %s32, 1
        %s526 = smul.addr %s525, 8
        %s527 = scalar_lea.vmem %s10, %s526
        %p528 = scmp.lt.s32.totalorder %s32, 1
        %s529 = scalar_select %p528, %s32, 1
        %s530 = smul.addr %s529, 8
        %s531 = scalar_lea.vmem %s12, %s530
        %p532 = scmp.lt.s32.totalorder %s32, 1
        %s533 = scalar_select %p532, %s32, 1
        %s534 = smul.addr %s533, 8
        %s535 = scalar_lea.vmem %s13, %s534
        %p536 = scmp.lt.s32.totalorder %s32, 1
        %s537 = scalar_select %p536, %s32, 1
        %s538 = smul.addr %s537, 8
        %s539 = scalar_lea.vmem %s14, %s538
        %v540 = vld [vmem:[%s4] sm:$0x1f]
        %v541 = vld [vmem:[%s5] sm:$0x1]
        %v542 = vld [vmem:[%s515] sm:$0xff]
        %v543 = vld [vmem:[%s1] sm:$0xff]
        %v544 = vld [vmem:[%s1 + $0x8] sm:$0xff]
        %v545 = vld [vmem:[%s1 + $0x10] sm:$0xff]
        %v546 = vld [vmem:[%s1 + $0x18] sm:$0xff]
        %v547 = vld [vmem:[%s2] sm:$0x1]
        %v549 = vperm.slane %v547, 0
        %vm551 = vcmask 261120
        %v553 = vsel %vm551, %v542, 0
        %555 = vmatpush.msra.mxu0 0.0
        %556 = vmatpush.msra.mxu0 0.0
        %557 = vmatpush.msra.mxu0 0.0
        %558 = vmatpush.msra.mxu0 0.0
        %559 = vmatpush.msra.mxu0 0.0
        %560 = vmatpush.msra.mxu0 0.0
        %561 = vmatpush.msra.mxu0 0.0
        %562 = vmatpush.msra.mxu0 0.0
        %563 = vmatpush.msra.mxu0 0.0
        %564 = vmatpush.msra.mxu0 0.0
        %565 = vmatpush.msra.mxu0 0.0
        %566 = vmatpush.msra.mxu0 0.0
        %567 = vmatpush.msra.mxu0 %v546
        %568 = vmatpush.msra.mxu0 %v545
        %569 = vmatpush.msra.mxu0 %v544
        %570 = vmatpush.msra.mxu0 %v543
        %571 = vmatmul.f32.gmra.mxu0 %v553
        %v572 = vpop.f32.mrf.mxu0
        %v573 = vadd.f32 %v549, %v572
        %574 = vdwg.mxu0
        %v575 = vmax.f32 %v573, 0.0
        %576 = vst.msk [vmem:[%s462] sm:$0xff] %vm551, %v575
        %v577 = vmul.f32 %v575, %v575
        %v578 = vsel %vm551, %v577, 0.0
        %579 = vadd.xlane.f32.xlu0 %v578
        %v580 = vpop.xlane.xlu0 %579
        %v581 = vrsqrt.pop %v580
        %v582 = vmul.f32 %v581, %v580
        %v583 = vmul.f32 %v582, %v581
        %v584 = vmul.f32 0.5, %v583
        %v585 = vsub.f32 1.5, %v584
        %v586 = vmul.f32 %v581, %v585
        %v587 = vmul.f32 %v580, %v586
        %vm588 = vcmp.eq.f32.partialorder %v580, inf
        %v589 = vsel %vm588, %v580, %v587
        %vm590 = vcmp.eq.f32.partialorder %v580, 0.0
        %v591 = vand.u32 %v580, 2147483648
        %v592 = vsel %vm590, %v591, %v589
        %v593 = vadd.f32 %v592, 1e-09
        %v594 = vrcp.pop %v593
        %v595 = vmul.f32 %v593, %v594
        %v596 = vsub.f32 1.0, %v595
        %v597 = vmul.f32 %v594, %v596
        %v598 = vadd.f32 %v594, %v597
        %vm599 = vweird.f32 %v593
        %vm600 = vweird.f32 %v594
        %vm601 = vmor %vm599, %vm600
        %v602 = vsel %vm601, %v594, %v598
        %v603 = vand.u32 2147483647, %v593
        %vm604 = vcmp.eq.f32.partialorder %v603, 8.507059e+37
        %v605 = vand.u32 %v593, 2147483648
        %v606 = vor.u32 1.1754944e-38, %v605
        %v607 = vsel %vm604, %v606, %v602
        %v608 = vmul.f32 %v575, %v607
        %v609 = vld [vmem:[%s3] sm:$0xff]
        %v610 = vmul.f32 %v609, %v609
        %v611 = vsel %vm551, %v610, 0.0
        %612 = vadd.xlane.f32.xlu0 %v611
        %v613 = vpop.xlane.xlu0 %612
        %v614 = vrsqrt.pop %v613
        %v615 = vmul.f32 %v614, %v613
        %v616 = vmul.f32 %v615, %v614
        %v617 = vmul.f32 0.5, %v616
        %v618 = vsub.f32 1.5, %v617
        %v619 = vmul.f32 %v614, %v618
        %v620 = vmul.f32 %v613, %v619
        %vm621 = vcmp.eq.f32.partialorder %v613, inf
        %v622 = vsel %vm621, %v613, %v620
        %vm623 = vcmp.eq.f32.partialorder %v613, 0.0
        %v624 = vand.u32 %v613, 2147483648
        %v625 = vsel %vm623, %v624, %v622
        %v626 = vadd.f32 %v625, 1e-09
        %v627 = vrcp.pop %v626
        %v628 = vmul.f32 %v626, %v627
        %v629 = vsub.f32 1.0, %v628
        %v630 = vmul.f32 %v627, %v629
        %v631 = vadd.f32 %v627, %v630
        %vm632 = vweird.f32 %v626
        %vm633 = vweird.f32 %v627
        %vm634 = vmor %vm632, %vm633
        %v635 = vsel %vm634, %v627, %v631
        %v636 = vand.u32 2147483647, %v626
        %vm637 = vcmp.eq.f32.partialorder %v636, 8.507059e+37
        %v638 = vand.u32 %v626, 2147483648
        %v639 = vor.u32 1.1754944e-38, %v638
        %v640 = vsel %vm637, %v639, %v635
        %v641 = vmul.f32 %v609, %v640
        %v643 = vsel %vm551, %v641, 0
        %v646 = vsel %vm551, %v608, 0
        %648 = vmatpush.xpose.msra.mxu0 0.0
        %649 = vmatpush.xpose.msra.mxu0 0.0
        %650 = vmatpush.xpose.msra.mxu0 0.0
        %651 = vmatpush.xpose.msra.mxu0 0.0
        %652 = vmatpush.xpose.msra.mxu0 0.0
        %653 = vmatpush.xpose.msra.mxu0 0.0
        %654 = vmatpush.xpose.msra.mxu0 0.0
        %655 = vmatpush.xpose.msra.mxu0 0.0
        %656 = vmatpush.xpose.msra.mxu0 0.0
        %657 = vmatpush.xpose.msra.mxu0 0.0
        %658 = vmatpush.xpose.msra.mxu0 0.0
        %659 = vmatpush.xpose.msra.mxu0 0.0
        %660 = vmatpush.xpose.msra.mxu0 0.0
        %661 = vmatpush.xpose.msra.mxu0 0.0
        %662 = vmatpush.xpose.msra.mxu0 0.0
        %663 = vmatpush.xpose.msra.mxu0 %v646
        %664 = vmatmul.f32.gmra.mxu0 %v643
        %v665 = vpop.f32.mrf.mxu0
        %v666 = vadd.f32 0.0, %v665
        %667 = vdwg.mxu0
        %v668 = vmul.f32 %v666, 5.0
        %vm669 = vcmask 64512
        %v670 = vsel %vm669, %v668, -inf
        %v671 = vrot.slane %v670, 4
        %v672 = vmax.f32 %v670, %v671
        %v673 = vrot.slane %v672, 2
        %v674 = vmax.f32 %v672, %v673
        %v675 = vrot.slane %v674, 1
        %v676 = vmax.f32 %v674, %v675
        %v677 = vsub.f32 %v668, %v676
        %v678 = vmul.f32 %v677, 1.442695
        %v679 = vpow.pop %v678
        %v680 = vsel %vm669, %v679, 0.0
        %v681 = vrot.slane %v680, 4
        %v682 = vadd.f32 %v680, %v681
        %v683 = vrot.slane %v682, 2
        %v684 = vadd.f32 %v682, %v683
        %v685 = vrot.slane %v684, 1
        %v686 = vadd.f32 %v684, %v685
        %v687 = vrcp.pop %v686
        %v688 = vmul.f32 %v686, %v687
        %v689 = vsub.f32 1.0, %v688
        %v690 = vmul.f32 %v687, %v689
        %v691 = vadd.f32 %v687, %v690
        %vm692 = vweird.f32 %v686
        %vm693 = vweird.f32 %v687
        %vm694 = vmor %vm692, %vm693
        %v695 = vsel %vm694, %v687, %v691
        %v696 = vand.u32 2147483647, %v686
        %vm697 = vcmp.eq.f32.partialorder %v696, 8.507059e+37
        %v698 = vand.u32 %v686, 2147483648
        %v699 = vor.u32 1.1754944e-38, %v698
        %v700 = vsel %vm697, %v699, %v695
        %v701 = vmul.f32 %v679, %v700
        %v702 = vsel %vm669, %v701, 0.0
        %703 = vadd.xlane.f32.xlu0 %v702
        %v704 = vpop.xlane.xlu0 %703
        %v705 = vadd.f32 %v704, 1e-09
        %v706 = vrcp.pop %v705
        %v707 = vmul.f32 %v705, %v706
        %v708 = vsub.f32 1.0, %v707
        %v709 = vmul.f32 %v706, %v708
        %v710 = vadd.f32 %v706, %v709
        %vm711 = vweird.f32 %v705
        %vm712 = vweird.f32 %v706
        %vm713 = vmor %vm711, %vm712
        %v714 = vsel %vm713, %v706, %v710
        %v715 = vand.u32 2147483647, %v705
        %vm716 = vcmp.eq.f32.partialorder %v715, 8.507059e+37
        %v717 = vand.u32 %v705, 2147483648
        %v718 = vor.u32 1.1754944e-38, %v717
        %v719 = vsel %vm716, %v718, %v714
        %v720 = vmul.f32 %v701, %v719
        %v722 = vsel %vm669, %v720, 0
        %724 = vmatpush.msra.mxu0 0.0
        %725 = vmatpush.msra.mxu0 0.0
        %726 = vmatpush.msra.mxu0 0.0
        %727 = vmatpush.msra.mxu0 0.0
        %728 = vmatpush.msra.mxu0 0.0
        %729 = vmatpush.msra.mxu0 0.0
        %730 = vmatpush.msra.mxu0 0.0
        %731 = vmatpush.msra.mxu0 0.0
        %732 = vmatpush.msra.mxu0 0.0
        %733 = vmatpush.msra.mxu0 0.0
        %734 = vmatpush.msra.mxu0 0.0
        %735 = vmatpush.msra.mxu0 0.0
        %736 = vmatpush.msra.mxu0 0.0
        %737 = vmatpush.msra.mxu0 0.0
        %738 = vmatpush.msra.mxu0 0.0
        %739 = vmatpush.msra.mxu0 %v575
        %740 = vmatmul.f32.gmra.mxu0 %v722
        %v741 = vpop.f32.mrf.mxu0
        %v742 = vadd.f32 0.0, %v741
        %743 = vdwg.mxu0
        %v744 = vmul.f32 %v742, %v742
        %v745 = vsel %vm551, %v744, 0.0
        %746 = vadd.xlane.f32.xlu0 %v745
        %v747 = vpop.xlane.xlu0 %746
        %v748 = vrsqrt.pop %v747
        %v749 = vmul.f32 %v748, %v747
        %v750 = vmul.f32 %v749, %v748
        %v751 = vmul.f32 0.5, %v750
        %v752 = vsub.f32 1.5, %v751
        %v753 = vmul.f32 %v748, %v752
        %v754 = vmul.f32 %v747, %v753
        %vm755 = vcmp.eq.f32.partialorder %v747, inf
        %v756 = vsel %vm755, %v747, %v754
        %vm757 = vcmp.eq.f32.partialorder %v747, 0.0
        %v758 = vand.u32 %v747, 2147483648
        %v759 = vsel %vm757, %v758, %v756
        %v760 = vadd.f32 %v759, 1e-09
        %v761 = vrcp.pop %v760
        %v762 = vmul.f32 %v760, %v761
        %v763 = vsub.f32 1.0, %v762
        %v764 = vmul.f32 %v761, %v763
        %v765 = vadd.f32 %v761, %v764
        %vm766 = vweird.f32 %v760
        %vm767 = vweird.f32 %v761
        %vm768 = vmor %vm766, %vm767
        %v769 = vsel %vm768, %v761, %v765
        %v770 = vand.u32 2147483647, %v760
        %vm771 = vcmp.eq.f32.partialorder %v770, 8.507059e+37
        %v772 = vand.u32 %v760, 2147483648
        %v773 = vor.u32 1.1754944e-38, %v772
        %v774 = vsel %vm771, %v773, %v769
        %v775 = vmul.f32 %v742, %v774
        %v777 = vsel %vm551, %v775, 0
        %779 = vmatpush.xpose.msra.mxu0 0.0
        %780 = vmatpush.xpose.msra.mxu0 0.0
        %781 = vmatpush.xpose.msra.mxu0 0.0
        %782 = vmatpush.xpose.msra.mxu0 0.0
        %783 = vmatpush.xpose.msra.mxu0 0.0
        %784 = vmatpush.xpose.msra.mxu0 0.0
        %785 = vmatpush.xpose.msra.mxu0 0.0
        %786 = vmatpush.xpose.msra.mxu0 0.0
        %787 = vmatpush.xpose.msra.mxu0 0.0
        %788 = vmatpush.xpose.msra.mxu0 0.0
        %789 = vmatpush.xpose.msra.mxu0 0.0
        %790 = vmatpush.xpose.msra.mxu0 0.0
        %791 = vmatpush.xpose.msra.mxu0 0.0
        %792 = vmatpush.xpose.msra.mxu0 0.0
        %793 = vmatpush.xpose.msra.mxu0 0.0
        %794 = vmatpush.xpose.msra.mxu0 %v646
        %795 = vmatmul.f32.gmra.mxu0 %v777
        %v796 = vpop.f32.mrf.mxu0
        %v797 = vadd.f32 0.0, %v796
        %798 = vdwg.mxu0
        %v799 = vmul.f32 %v797, 5.0
        %v800 = vsel %vm669, %v799, -inf
        %v801 = vrot.slane %v800, 4
        %v802 = vmax.f32 %v800, %v801
        %v803 = vrot.slane %v802, 2
        %v804 = vmax.f32 %v802, %v803
        %v805 = vrot.slane %v804, 1
        %v806 = vmax.f32 %v804, %v805
        %v807 = vsub.f32 %v799, %v806
        %v808 = vmul.f32 %v807, 1.442695
        %v809 = vpow.pop %v808
        %v810 = vsel %vm669, %v809, 0.0
        %v811 = vrot.slane %v810, 4
        %v812 = vadd.f32 %v810, %v811
        %v813 = vrot.slane %v812, 2
        %v814 = vadd.f32 %v812, %v813
        %v815 = vrot.slane %v814, 1
        %v816 = vadd.f32 %v814, %v815
        %v817 = vrcp.pop %v816
        %v818 = vmul.f32 %v816, %v817
        %v819 = vsub.f32 1.0, %v818
        %v820 = vmul.f32 %v817, %v819
        %v821 = vadd.f32 %v817, %v820
        %vm822 = vweird.f32 %v816
        %vm823 = vweird.f32 %v817
        %vm824 = vmor %vm822, %vm823
        %v825 = vsel %vm824, %v817, %v821
        %v826 = vand.u32 2147483647, %v816
        %vm827 = vcmp.eq.f32.partialorder %v826, 8.507059e+37
        %v828 = vand.u32 %v816, 2147483648
        %v829 = vor.u32 1.1754944e-38, %v828
        %v830 = vsel %vm827, %v829, %v825
        %v831 = vmul.f32 %v809, %v830
        %v832 = vsel %vm669, %v831, 0.0
        %833 = vadd.xlane.f32.xlu0 %v832
        %v834 = vpop.xlane.xlu0 %833
        %v835 = vadd.f32 %v834, 1e-09
        %v836 = vrcp.pop %v835
        %v837 = vmul.f32 %v835, %v836
        %v838 = vsub.f32 1.0, %v837
        %v839 = vmul.f32 %v836, %v838
        %v840 = vadd.f32 %v836, %v839
        %vm841 = vweird.f32 %v835
        %vm842 = vweird.f32 %v836
        %vm843 = vmor %vm841, %vm842
        %v844 = vsel %vm843, %v836, %v840
        %v845 = vand.u32 2147483647, %v835
        %vm846 = vcmp.eq.f32.partialorder %v845, 8.507059e+37
        %v847 = vand.u32 %v835, 2147483648
        %v848 = vor.u32 1.1754944e-38, %v847
        %v849 = vsel %vm846, %v848, %v844
        %v850 = vmul.f32 %v831, %v849
        %v852 = vsel %vm669, %v850, 0
        %854 = vmatpush.msra.mxu0 0.0
        %855 = vmatpush.msra.mxu0 0.0
        %856 = vmatpush.msra.mxu0 0.0
        %857 = vmatpush.msra.mxu0 0.0
        %858 = vmatpush.msra.mxu0 0.0
        %859 = vmatpush.msra.mxu0 0.0
        %860 = vmatpush.msra.mxu0 0.0
        %861 = vmatpush.msra.mxu0 0.0
        %862 = vmatpush.msra.mxu0 0.0
        %863 = vmatpush.msra.mxu0 0.0
        %864 = vmatpush.msra.mxu0 0.0
        %865 = vmatpush.msra.mxu0 0.0
        %866 = vmatpush.msra.mxu0 0.0
        %867 = vmatpush.msra.mxu0 0.0
        %868 = vmatpush.msra.mxu0 0.0
        %869 = vmatpush.msra.mxu0 %v575
        %870 = vmatmul.f32.gmra.mxu0 %v852
        %v871 = vpop.f32.mrf.mxu0
        %v872 = vadd.f32 0.0, %v871
        %873 = vdwg.mxu0
        %874 = vst.msk [vmem:[%s469] sm:$0xff] %vm551, %v872
        %v875 = vmul.f32 %v872, %v872
        %v876 = vsel %vm551, %v875, 0.0
        %877 = vadd.xlane.f32.xlu0 %v876
        %v878 = vpop.xlane.xlu0 %877
        %v879 = vrsqrt.pop %v878
        %v880 = vmul.f32 %v879, %v878
        %v881 = vmul.f32 %v880, %v879
        %v882 = vmul.f32 0.5, %v881
        %v883 = vsub.f32 1.5, %v882
        %v884 = vmul.f32 %v879, %v883
        %v885 = vmul.f32 %v878, %v884
        %vm886 = vcmp.eq.f32.partialorder %v878, inf
        %v887 = vsel %vm886, %v878, %v885
        %vm888 = vcmp.eq.f32.partialorder %v878, 0.0
        %v889 = vand.u32 %v878, 2147483648
        %v890 = vsel %vm888, %v889, %v887
        %v891 = vadd.f32 %v890, 1e-09
        %v892 = vrcp.pop %v891
        %v893 = vmul.f32 %v891, %v892
        %v894 = vsub.f32 1.0, %v893
        %v895 = vmul.f32 %v892, %v894
        %v896 = vadd.f32 %v892, %v895
        %vm897 = vweird.f32 %v891
        %vm898 = vweird.f32 %v892
        %vm899 = vmor %vm897, %vm898
        %v900 = vsel %vm899, %v892, %v896
        %v901 = vand.u32 2147483647, %v891
        %vm902 = vcmp.eq.f32.partialorder %v901, 8.507059e+37
        %v903 = vand.u32 %v891, 2147483648
        %v904 = vor.u32 1.1754944e-38, %v903
        %v905 = vsel %vm902, %v904, %v900
        %v906 = vmul.f32 %v872, %v905
        %v908 = vsel %vm551, %v906, 0
        %910 = vmatpush.xpose.msra.mxu0 0.0
        %911 = vmatpush.xpose.msra.mxu0 0.0
        %912 = vmatpush.xpose.msra.mxu0 0.0
        %913 = vmatpush.xpose.msra.mxu0 0.0
        %914 = vmatpush.xpose.msra.mxu0 0.0
        %915 = vmatpush.xpose.msra.mxu0 0.0
        %916 = vmatpush.xpose.msra.mxu0 0.0
        %917 = vmatpush.xpose.msra.mxu0 0.0
        %918 = vmatpush.xpose.msra.mxu0 0.0
        %919 = vmatpush.xpose.msra.mxu0 0.0
        %920 = vmatpush.xpose.msra.mxu0 0.0
        %921 = vmatpush.xpose.msra.mxu0 0.0
        %922 = vmatpush.xpose.msra.mxu0 0.0
        %923 = vmatpush.xpose.msra.mxu0 0.0
        %924 = vmatpush.xpose.msra.mxu0 0.0
        %925 = vmatpush.xpose.msra.mxu0 %v646
        %926 = vmatmul.f32.gmra.mxu0 %v908
        %v927 = vpop.f32.mrf.mxu0
        %v928 = vadd.f32 0.0, %v927
        %929 = vdwg.mxu0
        %v930 = vmul.f32 %v928, 5.0
        %v931 = vsel %vm669, %v930, -inf
        %v932 = vrot.slane %v931, 4
        %v933 = vmax.f32 %v931, %v932
        %v934 = vrot.slane %v933, 2
        %v935 = vmax.f32 %v933, %v934
        %v936 = vrot.slane %v935, 1
        %v937 = vmax.f32 %v935, %v936
        %v938 = vsub.f32 %v930, %v937
        %v939 = vmul.f32 %v938, 1.442695
        %v940 = vpow.pop %v939
        %v941 = vsel %vm669, %v940, 0.0
        %v942 = vrot.slane %v941, 4
        %v943 = vadd.f32 %v941, %v942
        %v944 = vrot.slane %v943, 2
        %v945 = vadd.f32 %v943, %v944
        %v946 = vrot.slane %v945, 1
        %v947 = vadd.f32 %v945, %v946
        %v948 = vrcp.pop %v947
        %v949 = vmul.f32 %v947, %v948
        %v950 = vsub.f32 1.0, %v949
        %v951 = vmul.f32 %v948, %v950
        %v952 = vadd.f32 %v948, %v951
        %vm953 = vweird.f32 %v947
        %vm954 = vweird.f32 %v948
        %vm955 = vmor %vm953, %vm954
        %v956 = vsel %vm955, %v948, %v952
        %v957 = vand.u32 2147483647, %v947
        %vm958 = vcmp.eq.f32.partialorder %v957, 8.507059e+37
        %v959 = vand.u32 %v947, 2147483648
        %v960 = vor.u32 1.1754944e-38, %v959
        %v961 = vsel %vm958, %v960, %v956
        %v962 = vmul.f32 %v940, %v961
        %v963 = vsel %vm669, %v962, 0.0
        %964 = vadd.xlane.f32.xlu0 %v963
        %v965 = vpop.xlane.xlu0 %964
        %v966 = vadd.f32 %v965, 1e-09
        %v967 = vrcp.pop %v966
        %v968 = vmul.f32 %v966, %v967
        %v969 = vsub.f32 1.0, %v968
        %v970 = vmul.f32 %v967, %v969
        %v971 = vadd.f32 %v967, %v970
        %vm972 = vweird.f32 %v966
        %vm973 = vweird.f32 %v967
        %vm974 = vmor %vm972, %vm973
        %v975 = vsel %vm974, %v967, %v971
        %v976 = vand.u32 2147483647, %v966
        %vm977 = vcmp.eq.f32.partialorder %v976, 8.507059e+37
        %v978 = vand.u32 %v966, 2147483648
        %v979 = vor.u32 1.1754944e-38, %v978
        %v980 = vsel %vm977, %v979, %v975
        %v981 = vmul.f32 %v962, %v980
        %982 = vxpose.xlu0.b32.start [1/16] %v962, 128
        %983 = vxpose.xlu0.b32.cont [2/16] 0.0, 128
        %984 = vxpose.xlu0.b32.cont [3/16] 0.0, 128
        %985 = vxpose.xlu0.b32.cont [4/16] 0.0, 128
        %986 = vxpose.xlu0.b32.cont [5/16] 0.0, 128
        %987 = vxpose.xlu0.b32.cont [6/16] 0.0, 128
        %988 = vxpose.xlu0.b32.cont [7/16] 0.0, 128
        %989 = vxpose.xlu0.b32.cont [8/16] 0.0, 128
        %990 = vxpose.xlu0.b32.cont [9/16] 0.0, 128
        %991 = vxpose.xlu0.b32.cont [10/16] 0.0, 128
        %992 = vxpose.xlu0.b32.cont [11/16] 0.0, 128
        %993 = vxpose.xlu0.b32.cont [12/16] 0.0, 128
        %994 = vxpose.xlu0.b32.cont [13/16] 0.0, 128
        %995 = vxpose.xlu0.b32.cont [14/16] 0.0, 128
        %996 = vxpose.xlu0.b32.cont [15/16] 0.0, 128
        %997 = vxpose.xlu0.b32.end [16/16] 0.0, 128
        %v998 = vpop.trf.xlu0
        %v999 = vpop.trf.xlu0
        %v1000 = vpop.trf.xlu0
        %v1001 = vpop.trf.xlu0
        %v1002 = vpop.trf.xlu0
        %v1003 = vpop.trf.xlu0
        %v1004 = vpop.trf.xlu0
        %v1005 = vpop.trf.xlu0
        %v1006 = vpop.trf.xlu0
        %v1007 = vpop.trf.xlu0
        %v1008 = vpop.trf.xlu0
        %v1009 = vpop.trf.xlu0
        %v1010 = vpop.trf.xlu0
        %v1011 = vpop.trf.xlu0
        %v1012 = vpop.trf.xlu0
        %v1013 = vpop.trf.xlu0
        %v1015 = vsel %vm669, %v998, 0
        %1017 = vmatpush.msra.mxu0 0.0
        %1018 = vmatpush.msra.mxu0 0.0
        %1019 = vmatpush.msra.mxu0 0.0
        %1020 = vmatpush.msra.mxu0 0.0
        %1021 = vmatpush.msra.mxu0 0.0
        %1022 = vmatpush.msra.mxu0 0.0
        %1023 = vmatpush.msra.mxu0 0.0
        %1024 = vmatpush.msra.mxu0 0.0
        %1025 = vmatpush.msra.mxu0 0.0
        %1026 = vmatpush.msra.mxu0 0.0
        %1027 = vmatpush.msra.mxu0 0.0
        %1028 = vmatpush.msra.mxu0 0.0
        %1029 = vmatpush.msra.mxu0 0.0
        %1030 = vmatpush.msra.mxu0 0.0
        %1031 = vmatpush.msra.mxu0 0.0
        %1032 = vmatpush.msra.mxu0 %v981
        %1033 = vmatmul.f32.gmra.mxu0 %v1015
        %v1034 = vpop.f32.mrf.mxu0
        %v1035 = vadd.f32 0.0, %v1034
        %1036 = vdwg.mxu0
        %v1037 = vlaneseq
        %v1038 = vshrl.u32 %v1037, 7
        %v1039 = vlaneseq
        %v1040 = vand.u32 %v1039, 127
        %vm1041 = vcmp.eq.s32.totalorder %v1038, %v1040
        %v1042 = vsel %vm1041, 1.0, 0.0
        %v1043 = vmul.f32 %v1035, 0.25
        %v1044 = vsub.f32 %v1042, %v1043
        %1045 = vst.msk [vmem:[%s523] sm:$0xff] %vm669, %v1044
        %1046 = vmatpush.msra.mxu0 0.0
        %1047 = vmatpush.msra.mxu0 0.0
        %1048 = vmatpush.msra.mxu0 0.0
        %1049 = vmatpush.msra.mxu0 0.0
        %1050 = vmatpush.msra.mxu0 0.0
        %1051 = vmatpush.msra.mxu0 0.0
        %1052 = vmatpush.msra.mxu0 0.0
        %1053 = vmatpush.msra.mxu0 0.0
        %1054 = vmatpush.msra.mxu0 0.0
        %1055 = vmatpush.msra.mxu0 0.0
        %1056 = vmatpush.msra.mxu0 0.0
        %1057 = vmatpush.msra.mxu0 0.0
        %1058 = vmatpush.msra.mxu0 0.0
        %1059 = vmatpush.msra.mxu0 0.0
        %1060 = vmatpush.msra.mxu0 0.0
        %1061 = vmatpush.msra.mxu0 %v872
        %1062 = vmatmul.f32.gmra.mxu0 %v1015
        %v1063 = vpop.f32.mrf.mxu0
        %v1064 = vadd.f32 0.0, %v1063
        %1065 = vdwg.mxu0
        %v1066 = vmul.f32 %v1064, 0.5
        %v1067 = vadd.f32 %v1066, %v575
        %v1068 = vmul.f32 %v1067, 0.5
        %1069 = vst.msk [vmem:[%s527] sm:$0xff] %vm551, %v1068
        %v1071 = vsel %vm551, %v540, 0
        %1073 = vmatpush.xpose.msra.mxu0 0.0
        %1074 = vmatpush.xpose.msra.mxu0 0.0
        %1075 = vmatpush.xpose.msra.mxu0 0.0
        %1076 = vmatpush.xpose.msra.mxu0 0.0
        %1077 = vmatpush.xpose.msra.mxu0 0.0
        %1078 = vmatpush.xpose.msra.mxu0 0.0
        %1079 = vmatpush.xpose.msra.mxu0 0.0
        %1080 = vmatpush.xpose.msra.mxu0 0.0
        %1081 = vmatpush.xpose.msra.mxu0 0.0
        %1082 = vmatpush.xpose.msra.mxu0 0.0
        %1083 = vmatpush.xpose.msra.mxu0 0.0
        %1084 = vmatpush.xpose.msra.mxu0 0.0
        %1085 = vmatpush.xpose.msra.mxu0 0.0
        %1086 = vmatpush.xpose.msra.mxu0 0.0
        %1087 = vmatpush.xpose.msra.mxu0 0.0
        %1088 = vmatpush.xpose.msra.mxu0 %v1071
        %1089 = vmatmul.f32.gmra.mxu0 %v908
        %v1090 = vpop.f32.mrf.mxu0
        %v1091 = vadd.f32 0.0, %v1090
        %1092 = vdwg.mxu0
        %v1093 = vmul.f32 %v1091, 20.0
        %vm1094 = vcmask 39936
        %v1095 = vsel %vm1094, %v1093, -inf
        %1096 = vmax.xlane.f32.xlu0 %v1095
        %v1097 = vpop.xlane.xlu0 %1096
        %v1098 = vsub.f32 %v1093, %v1097
        %v1099 = vmul.f32 %v1098, 1.442695
        %v1100 = vpow.pop %v1099
        %v1101 = vsel %vm1094, %v1100, 0.0
        %1102 = vadd.xlane.f32.xlu0 %v1101
        %v1103 = vpop.xlane.xlu0 %1102
        %v1104 = vrcp.pop %v1103
        %v1105 = vmul.f32 %v1103, %v1104
        %v1106 = vsub.f32 1.0, %v1105
        %v1107 = vmul.f32 %v1104, %v1106
        %v1108 = vadd.f32 %v1104, %v1107
        %vm1109 = vweird.f32 %v1103
        %vm1110 = vweird.f32 %v1104
        %vm1111 = vmor %vm1109, %vm1110
        %v1112 = vsel %vm1111, %v1104, %v1108
        %v1113 = vand.u32 2147483647, %v1103
        %vm1114 = vcmp.eq.f32.partialorder %v1113, 8.507059e+37
        %v1115 = vand.u32 %v1103, 2147483648
        %v1116 = vor.u32 1.1754944e-38, %v1115
        %v1117 = vsel %vm1114, %v1116, %v1112
        %v1118 = vmul.f32 %v1100, %v1117
        %1119 = vst.msk [vmem:[%s519] sm:$0xff] %vm1094, %v1118
        %1120 = vmatpush.xpose.msra.mxu0 0.0
        %1121 = vmatpush.xpose.msra.mxu0 0.0
        %1122 = vmatpush.xpose.msra.mxu0 0.0
        %1123 = vmatpush.xpose.msra.mxu0 0.0
        %1124 = vmatpush.xpose.msra.mxu0 0.0
        %1125 = vmatpush.xpose.msra.mxu0 0.0
        %1126 = vmatpush.xpose.msra.mxu0 0.0
        %1127 = vmatpush.xpose.msra.mxu0 0.0
        %1128 = vmatpush.xpose.msra.mxu0 0.0
        %1129 = vmatpush.xpose.msra.mxu0 0.0
        %1130 = vmatpush.xpose.msra.mxu0 0.0
        %1131 = vmatpush.xpose.msra.mxu0 0.0
        %1132 = vmatpush.xpose.msra.mxu0 0.0
        %1133 = vmatpush.xpose.msra.mxu0 0.0
        %1134 = vmatpush.xpose.msra.mxu0 0.0
        %1135 = vmatpush.xpose.msra.mxu0 %v1071
        %1136 = vmatmul.f32.gmra.mxu0 %v646
        %v1137 = vpop.f32.mrf.mxu0
        %v1138 = vadd.f32 0.0, %v1137
        %1139 = vdwg.mxu0
        %v1140 = vmul.f32 %v1138, 20.0
        %v1142 = vperm.slane %v541, 0
        %v1144 = vmul.f32 %v608, %v1142
        %v1145 = vsel %vm551, %v1144, 0.0
        %1146 = vadd.xlane.f32.xlu0 %v1145
        %v1147 = vpop.xlane.xlu0 %1146
        %v1148 = vmul.f32 %v1147, 20.0
        %v1149 = vxor.u32 %v1148, 2147483648
        %v1150 = vmul.f32 %v1149, 1.442695
        %v1151 = vpow.pop %v1150
        %v1152 = vadd.f32 %v1151, 1.0
        %v1153 = vrcp.pop %v1152
        %v1154 = vmul.f32 %v1152, %v1153
        %v1155 = vsub.f32 1.0, %v1154
        %v1156 = vmul.f32 %v1153, %v1155
        %v1157 = vadd.f32 %v1153, %v1156
        %vm1158 = vweird.f32 %v1152
        %vm1159 = vweird.f32 %v1153
        %vm1160 = vmor %vm1158, %vm1159
        %v1161 = vsel %vm1160, %v1153, %v1157
        %v1162 = vand.u32 2147483647, %v1152
        %vm1163 = vcmp.eq.f32.partialorder %v1162, 8.507059e+37
        %v1164 = vand.u32 %v1152, 2147483648
        %v1165 = vor.u32 1.1754944e-38, %v1164
        %v1166 = vsel %vm1163, %v1165, %v1161
        %v1167 = vmul.f32 1.0, %v1166
        %v1168 = vxor.u32 %v1140, 2147483648
        %v1169 = vmul.f32 %v1168, 1.442695
        %v1170 = vpow.pop %v1169
        %v1171 = vadd.f32 %v1170, 1.0
        %v1172 = vrcp.pop %v1171
        %v1173 = vmul.f32 %v1171, %v1172
        %v1174 = vsub.f32 1.0, %v1173
        %v1175 = vmul.f32 %v1172, %v1174
        %v1176 = vadd.f32 %v1172, %v1175
        %vm1177 = vweird.f32 %v1171
        %vm1178 = vweird.f32 %v1172
        %vm1179 = vmor %vm1177, %vm1178
        %v1180 = vsel %vm1179, %v1172, %v1176
        %v1181 = vand.u32 2147483647, %v1171
        %vm1182 = vcmp.eq.f32.partialorder %v1181, 8.507059e+37
        %v1183 = vand.u32 %v1171, 2147483648
        %v1184 = vor.u32 1.1754944e-38, %v1183
        %v1185 = vsel %vm1182, %v1184, %v1180
        %v1186 = vmul.f32 1.0, %v1185
        %v1187 = vsel %vm1094, %v1186, 0.0
        %v1188 = vrot.slane %v1187, 4
        %v1189 = vadd.f32 %v1187, %v1188
        %v1190 = vrot.slane %v1189, 2
        %v1191 = vadd.f32 %v1189, %v1190
        %v1192 = vrot.slane %v1191, 1
        %v1193 = vadd.f32 %v1191, %v1192
        %v1194 = vadd.f32 %v1193, 1e-05
        %v1195 = vrcp.pop %v1194
        %v1196 = vmul.f32 %v1194, %v1195
        %v1197 = vsub.f32 1.0, %v1196
        %v1198 = vmul.f32 %v1195, %v1197
        %v1199 = vadd.f32 %v1195, %v1198
        %vm1200 = vweird.f32 %v1194
        %vm1201 = vweird.f32 %v1195
        %vm1202 = vmor %vm1200, %vm1201
        %v1203 = vsel %vm1202, %v1195, %v1199
        %v1204 = vand.u32 2147483647, %v1194
        %vm1205 = vcmp.eq.f32.partialorder %v1204, 8.507059e+37
        %v1206 = vand.u32 %v1194, 2147483648
        %v1207 = vor.u32 1.1754944e-38, %v1206
        %v1208 = vsel %vm1205, %v1207, %v1203
        %v1209 = vmul.f32 %v1186, %v1208
        %v1210 = vrot.slane %v1167, 4
        %v1211 = vadd.f32 %v1167, %v1210
        %v1212 = vrot.slane %v1211, 2
        %v1213 = vadd.f32 %v1211, %v1212
        %v1214 = vrot.slane %v1213, 1
        %v1215 = vadd.f32 %v1213, %v1214
        %v1216 = vadd.f32 %v1215, 1e-05
        %v1217 = vrcp.pop %v1216
        %v1218 = vmul.f32 %v1216, %v1217
        %v1219 = vsub.f32 1.0, %v1218
        %v1220 = vmul.f32 %v1217, %v1219
        %v1221 = vadd.f32 %v1217, %v1220
        %vm1222 = vweird.f32 %v1216
        %vm1223 = vweird.f32 %v1217
        %vm1224 = vmor %vm1222, %vm1223
        %v1225 = vsel %vm1224, %v1217, %v1221
        %v1226 = vand.u32 2147483647, %v1216
        %vm1227 = vcmp.eq.f32.partialorder %v1226, 8.507059e+37
        %v1228 = vand.u32 %v1216, 2147483648
        %v1229 = vor.u32 1.1754944e-38, %v1228
        %v1230 = vsel %vm1227, %v1229, %v1225
        %v1231 = vmul.f32 %v1167, %v1230
        %v1232 = vmul.f32 %v575, %v1231
        %v1233 = vsel %vm551, %v1232, 0.0
        %v1234 = vrot.slane %v1233, 4
        %v1235 = vadd.f32 %v1233, %v1234
        %v1236 = vrot.slane %v1235, 2
        %v1237 = vadd.f32 %v1235, %v1236
        %v1238 = vrot.slane %v1237, 1
        %v1239 = vadd.f32 %v1237, %v1238
        %1240 = vxpose.xlu0.b32.start [1/16] %v1209, 128
        %1241 = vxpose.xlu0.b32.cont [2/16] 0.0, 128
        %1242 = vxpose.xlu0.b32.cont [3/16] 0.0, 128
        %1243 = vxpose.xlu0.b32.cont [4/16] 0.0, 128
        %1244 = vxpose.xlu0.b32.cont [5/16] 0.0, 128
        %1245 = vxpose.xlu0.b32.cont [6/16] 0.0, 128
        %1246 = vxpose.xlu0.b32.cont [7/16] 0.0, 128
        %1247 = vxpose.xlu0.b32.cont [8/16] 0.0, 128
        %1248 = vxpose.xlu0.b32.cont [9/16] 0.0, 128
        %1249 = vxpose.xlu0.b32.cont [10/16] 0.0, 128
        %1250 = vxpose.xlu0.b32.cont [11/16] 0.0, 128
        %1251 = vxpose.xlu0.b32.cont [12/16] 0.0, 128
        %1252 = vxpose.xlu0.b32.cont [13/16] 0.0, 128
        %1253 = vxpose.xlu0.b32.cont [14/16] 0.0, 128
        %1254 = vxpose.xlu0.b32.cont [15/16] 0.0, 128
        %1255 = vxpose.xlu0.b32.end [16/16] 0.0, 128
        %v1256 = vpop.trf.xlu0
        %v1257 = vpop.trf.xlu0
        %v1258 = vpop.trf.xlu0
        %v1259 = vpop.trf.xlu0
        %v1260 = vpop.trf.xlu0
        %v1261 = vpop.trf.xlu0
        %v1262 = vpop.trf.xlu0
        %v1263 = vpop.trf.xlu0
        %v1264 = vpop.trf.xlu0
        %v1265 = vpop.trf.xlu0
        %v1266 = vpop.trf.xlu0
        %v1267 = vpop.trf.xlu0
        %v1268 = vpop.trf.xlu0
        %v1269 = vpop.trf.xlu0
        %v1270 = vpop.trf.xlu0
        %v1271 = vpop.trf.xlu0
        %v1273 = vsel %vm669, %v1256, 0
        %1275 = vmatpush.msra.mxu0 0.0
        %1276 = vmatpush.msra.mxu0 0.0
        %1277 = vmatpush.msra.mxu0 0.0
        %1278 = vmatpush.msra.mxu0 0.0
        %1279 = vmatpush.msra.mxu0 0.0
        %1280 = vmatpush.msra.mxu0 0.0
        %1281 = vmatpush.msra.mxu0 0.0
        %1282 = vmatpush.msra.mxu0 0.0
        %1283 = vmatpush.msra.mxu0 0.0
        %1284 = vmatpush.msra.mxu0 0.0
        %1285 = vmatpush.msra.mxu0 0.0
        %1286 = vmatpush.msra.mxu0 0.0
        %1287 = vmatpush.msra.mxu0 0.0
        %1288 = vmatpush.msra.mxu0 0.0
        %1289 = vmatpush.msra.mxu0 0.0
        %1290 = vmatpush.msra.mxu0 %v575
        %1291 = vmatmul.f32.gmra.mxu0 %v1273
        %v1292 = vpop.f32.mrf.mxu0
        %v1293 = vadd.f32 0.0, %v1292
        %1294 = vdwg.mxu0
        %v1295 = vmul.f32 %v1239, %v1239
        %v1296 = vsel %vm551, %v1295, 0.0
        %1297 = vadd.xlane.f32.xlu0 %v1296
        %v1298 = vpop.xlane.xlu0 %1297
        %v1299 = vrsqrt.pop %v1298
        %v1300 = vmul.f32 %v1299, %v1298
        %v1301 = vmul.f32 %v1300, %v1299
        %v1302 = vmul.f32 0.5, %v1301
        %v1303 = vsub.f32 1.5, %v1302
        %v1304 = vmul.f32 %v1299, %v1303
        %v1305 = vmul.f32 %v1298, %v1304
        %vm1306 = vcmp.eq.f32.partialorder %v1298, inf
        %v1307 = vsel %vm1306, %v1298, %v1305
        %vm1308 = vcmp.eq.f32.partialorder %v1298, 0.0
        %v1309 = vand.u32 %v1298, 2147483648
        %v1310 = vsel %vm1308, %v1309, %v1307
        %v1311 = vadd.f32 %v1310, 1e-09
        %v1312 = vrcp.pop %v1311
        %v1313 = vmul.f32 %v1311, %v1312
        %v1314 = vsub.f32 1.0, %v1313
        %v1315 = vmul.f32 %v1312, %v1314
        %v1316 = vadd.f32 %v1312, %v1315
        %vm1317 = vweird.f32 %v1311
        %vm1318 = vweird.f32 %v1312
        %vm1319 = vmor %vm1317, %vm1318
        %v1320 = vsel %vm1319, %v1312, %v1316
        %v1321 = vand.u32 2147483647, %v1311
        %vm1322 = vcmp.eq.f32.partialorder %v1321, 8.507059e+37
        %v1323 = vand.u32 %v1311, 2147483648
        %v1324 = vor.u32 1.1754944e-38, %v1323
        %v1325 = vsel %vm1322, %v1324, %v1320
        %v1326 = vmul.f32 %v1239, %v1325
        %v1327 = vmul.f32 %v1293, %v1293
        %vm1328 = vcmask 258048
        %v1329 = vsel %vm1328, %v1327, 0.0
        %1330 = vadd.xlane.f32.xlu0 %v1329
        %v1331 = vpop.xlane.xlu0 %1330
        %v1332 = vrsqrt.pop %v1331
        %v1333 = vmul.f32 %v1332, %v1331
        %v1334 = vmul.f32 %v1333, %v1332
        %v1335 = vmul.f32 0.5, %v1334
        %v1336 = vsub.f32 1.5, %v1335
        %v1337 = vmul.f32 %v1332, %v1336
        %v1338 = vmul.f32 %v1331, %v1337
        %vm1339 = vcmp.eq.f32.partialorder %v1331, inf
        %v1340 = vsel %vm1339, %v1331, %v1338
        %vm1341 = vcmp.eq.f32.partialorder %v1331, 0.0
        %v1342 = vand.u32 %v1331, 2147483648
        %v1343 = vsel %vm1341, %v1342, %v1340
        %v1344 = vadd.f32 %v1343, 1e-09
        %v1345 = vrcp.pop %v1344
        %v1346 = vmul.f32 %v1344, %v1345
        %v1347 = vsub.f32 1.0, %v1346
        %v1348 = vmul.f32 %v1345, %v1347
        %v1349 = vadd.f32 %v1345, %v1348
        %vm1350 = vweird.f32 %v1344
        %vm1351 = vweird.f32 %v1345
        %vm1352 = vmor %vm1350, %vm1351
        %v1353 = vsel %vm1352, %v1345, %v1349
        %v1354 = vand.u32 2147483647, %v1344
        %vm1355 = vcmp.eq.f32.partialorder %v1354, 8.507059e+37
        %v1356 = vand.u32 %v1344, 2147483648
        %v1357 = vor.u32 1.1754944e-38, %v1356
        %v1358 = vsel %vm1355, %v1357, %v1353
        %v1359 = vmul.f32 %v1293, %v1358
        %v1361 = vsel %vm551, %v1326, 0
        %1363 = vmatpush.xpose.msra.mxu0 0.0
        %1364 = vmatpush.xpose.msra.mxu0 0.0
        %1365 = vmatpush.xpose.msra.mxu0 0.0
        %1366 = vmatpush.xpose.msra.mxu0 0.0
        %1367 = vmatpush.xpose.msra.mxu0 0.0
        %1368 = vmatpush.xpose.msra.mxu0 0.0
        %1369 = vmatpush.xpose.msra.mxu0 0.0
        %1370 = vmatpush.xpose.msra.mxu0 0.0
        %1371 = vmatpush.xpose.msra.mxu0 0.0
        %1372 = vmatpush.xpose.msra.mxu0 0.0
        %1373 = vmatpush.xpose.msra.mxu0 0.0
        %1374 = vmatpush.xpose.msra.mxu0 0.0
        %1375 = vmatpush.xpose.msra.mxu0 0.0
        %1376 = vmatpush.xpose.msra.mxu0 0.0
        %1377 = vmatpush.xpose.msra.mxu0 0.0
        %1378 = vmatpush.xpose.msra.mxu0 %v1071
        %1379 = vmatmul.f32.gmra.mxu0 %v1361
        %v1380 = vpop.f32.mrf.mxu0
        %v1381 = vadd.f32 0.0, %v1380
        %1382 = vdwg.mxu0
        %v1383 = vmul.f32 %v1381, 20.0
        %v1384 = vmul.f32 %v1359, %v540
        %v1385 = vsel %vm1328, %v1384, 0.0
        %1386 = vadd.xlane.f32.xlu0 %v1385
        %v1387 = vpop.xlane.xlu0 %1386
        %v1388 = vmul.f32 %v1387, 20.0
        %vm1389 = vcmask 32768
        %v1390 = vsel %vm1389, %v1383, -inf
        %1391 = vmax.xlane.f32.xlu0 %v1390
        %v1392 = vpop.xlane.xlu0 %1391
        %v1393 = vsub.f32 %v1383, %v1392
        %v1394 = vmul.f32 %v1393, 1.442695
        %v1395 = vpow.pop %v1394
        %v1396 = vsel %vm1389, %v1395, 0.0
        %1397 = vadd.xlane.f32.xlu0 %v1396
        %v1398 = vpop.xlane.xlu0 %1397
        %v1399 = vrcp.pop %v1398
        %v1400 = vmul.f32 %v1398, %v1399
        %v1401 = vsub.f32 1.0, %v1400
        %v1402 = vmul.f32 %v1399, %v1401
        %v1403 = vadd.f32 %v1399, %v1402
        %vm1404 = vweird.f32 %v1398
        %vm1405 = vweird.f32 %v1399
        %vm1406 = vmor %vm1404, %vm1405
        %v1407 = vsel %vm1406, %v1399, %v1403
        %v1408 = vand.u32 2147483647, %v1398
        %vm1409 = vcmp.eq.f32.partialorder %v1408, 8.507059e+37
        %v1410 = vand.u32 %v1398, 2147483648
        %v1411 = vor.u32 1.1754944e-38, %v1410
        %v1412 = vsel %vm1409, %v1411, %v1407
        %v1413 = vmul.f32 %v1395, %v1412
        %vm1414 = vcmask 1044480
        %v1415 = vsel %vm1414, %v1388, -inf
        %v1416 = vrot.slane %v1415, 4
        %v1417 = vmax.f32 %v1415, %v1416
        %v1418 = vrot.slane %v1417, 2
        %v1419 = vmax.f32 %v1417, %v1418
        %v1420 = vrot.slane %v1419, 1
        %v1421 = vmax.f32 %v1419, %v1420
        %v1422 = vsub.f32 %v1388, %v1421
        %v1423 = vmul.f32 %v1422, 1.442695
        %v1424 = vpow.pop %v1423
        %v1425 = vsel %vm1414, %v1424, 0.0
        %v1426 = vrot.slane %v1425, 4
        %v1427 = vadd.f32 %v1425, %v1426
        %v1428 = vrot.slane %v1427, 2
        %v1429 = vadd.f32 %v1427, %v1428
        %v1430 = vrot.slane %v1429, 1
        %v1431 = vadd.f32 %v1429, %v1430
        %v1432 = vrcp.pop %v1431
        %v1433 = vmul.f32 %v1431, %v1432
        %v1434 = vsub.f32 1.0, %v1433
        %v1435 = vmul.f32 %v1432, %v1434
        %v1436 = vadd.f32 %v1432, %v1435
        %vm1437 = vweird.f32 %v1431
        %vm1438 = vweird.f32 %v1432
        %vm1439 = vmor %vm1437, %vm1438
        %v1440 = vsel %vm1439, %v1432, %v1436
        %v1441 = vand.u32 2147483647, %v1431
        %vm1442 = vcmp.eq.f32.partialorder %v1441, 8.507059e+37
        %v1443 = vand.u32 %v1431, 2147483648
        %v1444 = vor.u32 1.1754944e-38, %v1443
        %v1445 = vsel %vm1442, %v1444, %v1440
        %v1446 = vmul.f32 %v1424, %v1445
        %1447 = vst.msk [vmem:[%s493] sm:$0x1] %vm1389, %v1413
        %vm1448 = vcmask 4096
        %1449 = vst.msk [vmem:[%s531] sm:$0x1f] %vm1448, %v1446
        %vm1450 = vcmask 7168
        %1451 = vst.msk [vmem:[%s535] sm:$0xff] %vm1450, %v1167
        %1452 = vst.msk [vmem:[%s539] sm:$0xff] %vm1094, %v1140
        %s1453 = sand.u32 %s171, 1
        %s1454 = scalar_lea.sflag [#allocation3], %s1453
        %s1455 = sand.u32 %s171, 1
        %s1456 = smul.addr %s1455, 8
        %s1457 = scalar_lea.vmem [#allocation2], %s1456
        %s1458 = sand.u32 %s32, 1
        %s1459 = scalar_lea.sflag [#allocation5], %s1458
        %s1460 = sand.u32 %s197, 1
        %s1461 = smul.addr %s1460, 8
        %s1462 = scalar_lea.vmem [#allocation4], %s1461
        %p1463 = scmp.lt.s32.totalorder %s32, 1
        %s1464 = scalar_select %p1463, %s32, 1
        %s1465 = smul.addr %s1464, 8
        %s1466 = scalar_lea.vmem %s8, %s1465
        %p1467 = scmp.lt.s32.totalorder %s32, 1
        %s1468 = scalar_select %p1467, %s32, 1
        %s1469 = smul.addr %s1468, 8
        %s1470 = scalar_lea.vmem %s9, %s1469
        %p1471 = scmp.lt.s32.totalorder %s32, 1
        %s1472 = scalar_select %p1471, %s32, 1
        %s1473 = smul.addr %s1472, 8
        %s1474 = scalar_lea.vmem %s10, %s1473
        %s1475 = sand.u32 %s32, 1
        %s1476 = scalar_lea.sflag [#allocation5], %s1475
        %s1477 = sand.u32 %s301, 1
        %s1478 = scalar_lea.vmem [#allocation6], %s1477
        %p1479 = scmp.lt.s32.totalorder %s32, 1
        %s1480 = scalar_select %p1479, %s32, 1
        %s1481 = smul.addr %s1480, 8
        %s1482 = scalar_lea.vmem %s12, %s1481
        %p1483 = scmp.lt.s32.totalorder %s32, 1
        %s1484 = scalar_select %p1483, %s32, 1
        %s1485 = smul.addr %s1484, 8
        %s1486 = scalar_lea.vmem %s13, %s1485
        %p1487 = scmp.lt.s32.totalorder %s32, 1
        %s1488 = scalar_select %p1487, %s32, 1
        %s1489 = smul.addr %s1488, 8
        %s1490 = scalar_lea.vmem %s14, %s1489
        // Predicated region
        $region45: #{wstal_forward.2} parent=43 // pred_check
          %p1491 = pneg %p181
        $region46: #{wstal_forward.2} parent=43 // pred_check_branch
          %1493 = sbr.rel (%p1491) target = $region48
        $region47: #{wstal_forward.2} parent=43 // pred_region
          %1495 = vsyncadd %s1454, 0
          %s1496 = smul.addr %s32, 8
          %s1497 = scalar_lea.hbm %s6, %s1496
          %s1499 = sshll.u32 %s1457, 4
          %s1500 = int_to_ptr.vmem [resolvable:$true] %s1499
          %s1501 = sshll.u32 %s1497, 4
          %s1502 = int_to_ptr.hbm [resolvable:$true] %s1501
          %1504 = dma.vmem_to_hbm [thread:$0]  %s1500, 128, %s1502, %s1454
        $region48: #{wstal_forward.2} parent=43 // pred_fallthru
          _
        // Predicated region
        $region49: #{wstal_forward.2} parent=43 // pred_check
          %p1505 = pneg %p207
        $region50: #{wstal_forward.2} parent=43 // pred_check_branch
          %1507 = sbr.rel (%p1505) target = $region52
        $region51: #{wstal_forward.2} parent=43 // pred_region
          %1509 = vsyncadd %s1459, 0
          %s1510 = smul.addr %s32, 8
          %s1511 = scalar_lea.hbm %s7, %s1510
          %s1513 = sshll.u32 %s1462, 4
          %s1514 = int_to_ptr.vmem [resolvable:$true] %s1513
          %s1515 = sshll.u32 %s1511, 4
          %s1516 = int_to_ptr.hbm [resolvable:$true] %s1515
          %1518 = dma.vmem_to_hbm [thread:$0]  %s1514, 128, %s1516, %s1459
        $region52: #{wstal_forward.2} parent=43 // pred_fallthru
          _
        // Predicated region
        $region53: #{wstal_forward.2} parent=43 // pred_check
          %p1519 = pneg %p233
        $region54: #{wstal_forward.2} parent=43 // pred_check_branch
          %1521 = sbr.rel (%p1519) target = $region56
        $region55: #{wstal_forward.2} parent=43 // pred_region
          _
        $region56: #{wstal_forward.2} parent=43 // pred_fallthru
          _
        // Predicated region
        $region57: #{wstal_forward.2} parent=43 // pred_check
          %p1522 = pneg %p259
        $region58: #{wstal_forward.2} parent=43 // pred_check_branch
          %1524 = sbr.rel (%p1522) target = $region60
        $region59: #{wstal_forward.2} parent=43 // pred_region
          _
        $region60: #{wstal_forward.2} parent=43 // pred_fallthru
          _
        // Predicated region
        $region61: #{wstal_forward.2} parent=43 // pred_check
          %p1525 = pneg %p285
        $region62: #{wstal_forward.2} parent=43 // pred_check_branch
          %1527 = sbr.rel (%p1525) target = $region64
        $region63: #{wstal_forward.2} parent=43 // pred_region
          _
        $region64: #{wstal_forward.2} parent=43 // pred_fallthru
          _
        // Predicated region
        $region65: #{wstal_forward.2} parent=43 // pred_check
          %p1528 = pneg %p311
        $region66: #{wstal_forward.2} parent=43 // pred_check_branch
          %1530 = sbr.rel (%p1528) target = $region68
        $region67: #{wstal_forward.2} parent=43 // pred_region
          %1532 = vsyncadd %s1476, 0
          %s1533 = scalar_lea.hbm %s11, %s32
          %s1535 = sshll.u32 %s1478, 4
          %s1536 = int_to_ptr.vmem [resolvable:$true] %s1535
          %s1537 = sshll.u32 %s1533, 4
          %s1538 = int_to_ptr.hbm [resolvable:$true] %s1537
          %1540 = dma.vmem_to_hbm [thread:$0]  %s1536, 16, %s1538, %s1476
        $region68: #{wstal_forward.2} parent=43 // pred_fallthru
          _
        // Predicated region
        $region69: #{wstal_forward.2} parent=43 // pred_check
          %p1541 = pneg %p337
        $region70: #{wstal_forward.2} parent=43 // pred_check_branch
          %1543 = sbr.rel (%p1541) target = $region72
        $region71: #{wstal_forward.2} parent=43 // pred_region
          _
        $region72: #{wstal_forward.2} parent=43 // pred_fallthru
          _
        // Predicated region
        $region73: #{wstal_forward.2} parent=43 // pred_check
          %p1544 = pneg %p363
        $region74: #{wstal_forward.2} parent=43 // pred_check_branch
          %1546 = sbr.rel (%p1544) target = $region76
        $region75: #{wstal_forward.2} parent=43 // pred_region
          _
        $region76: #{wstal_forward.2} parent=43 // pred_fallthru
          _
        // Predicated region
        $region77: #{wstal_forward.2} parent=43 // pred_check
          %p1547 = pneg %p389
        $region78: #{wstal_forward.2} parent=43 // pred_check_branch
          %1549 = sbr.rel (%p1547) target = $region80
        $region79: #{wstal_forward.2} parent=43 // pred_region
          _
        $region80: #{wstal_forward.2} parent=43 // pred_fallthru
          _
      $region44: #{wstal_forward.2} parent=5 // pred_fallthru
        _
      %p1550 = scmp.le.s32.totalorder 2, %s27
      // Predicated region
      $region81: #{wstal_forward.2} parent=5 // pred_check
        %p1551 = pneg %p1550
      $region82: #{wstal_forward.2} parent=5 // pred_check_branch
        %1553 = sbr.rel (%p1551) target = $region84
      $region83: #{wstal_forward.2} parent=5 // pred_region
        %s1554 = ssub.s32 %s27, 2
        // Predicated region
        $region85: #{wstal_forward.2} parent=83 // pred_check
          %p1555 = pneg %p187
        $region86: #{wstal_forward.2} parent=83 // pred_check_branch
          %1557 = sbr.rel (%p1555) target = $region88
        $region87: #{wstal_forward.2} parent=83 // pred_region
          %s1558 = sand.u32 %s172, 1
          %s1559 = scalar_lea.sflag [#allocation3], %s1558
          %s1560 = sand.u32 %s172, 1
          %s1561 = smul.addr %s1560, 8
          %s1562 = scalar_lea.vmem [#allocation2], %s1561
          %1564 = dma.done %s1559, 128
        $region88: #{wstal_forward.2} parent=83 // pred_fallthru
          _
        // Predicated region
        $region89: #{wstal_forward.2} parent=83 // pred_check
          %p1565 = pneg %p213
        $region90: #{wstal_forward.2} parent=83 // pred_check_branch
          %1567 = sbr.rel (%p1565) target = $region92
        $region91: #{wstal_forward.2} parent=83 // pred_region
          %s1568 = sand.u32 %s33, 1
          %s1569 = scalar_lea.sflag [#allocation5], %s1568
          %s1570 = sand.u32 %s198, 1
          %s1571 = smul.addr %s1570, 8
          %s1572 = scalar_lea.vmem [#allocation4], %s1571
          %1574 = dma.done %s1569, 128
        $region92: #{wstal_forward.2} parent=83 // pred_fallthru
          _
        // Predicated region
        $region93: #{wstal_forward.2} parent=83 // pred_check
          %p1575 = pneg %p239
        $region94: #{wstal_forward.2} parent=83 // pred_check_branch
          %1577 = sbr.rel (%p1575) target = $region96
        $region95: #{wstal_forward.2} parent=83 // pred_region
          %p1578 = scmp.lt.s32.totalorder %s33, 1
          %s1579 = scalar_select %p1578, %s33, 1
          %s1580 = smul.addr %s1579, 8
          %s1581 = scalar_lea.vmem %s8, %s1580
        $region96: #{wstal_forward.2} parent=83 // pred_fallthru
          _
        // Predicated region
        $region97: #{wstal_forward.2} parent=83 // pred_check
          %p1582 = pneg %p265
        $region98: #{wstal_forward.2} parent=83 // pred_check_branch
          %1584 = sbr.rel (%p1582) target = $region100
        $region99: #{wstal_forward.2} parent=83 // pred_region
          %p1585 = scmp.lt.s32.totalorder %s33, 1
          %s1586 = scalar_select %p1585, %s33, 1
          %s1587 = smul.addr %s1586, 8
          %s1588 = scalar_lea.vmem %s9, %s1587
        $region100: #{wstal_forward.2} parent=83 // pred_fallthru
          _
        // Predicated region
        $region101: #{wstal_forward.2} parent=83 // pred_check
          %p1589 = pneg %p291
        $region102: #{wstal_forward.2} parent=83 // pred_check_branch
          %1591 = sbr.rel (%p1589) target = $region104
        $region103: #{wstal_forward.2} parent=83 // pred_region
          %p1592 = scmp.lt.s32.totalorder %s33, 1
          %s1593 = scalar_select %p1592, %s33, 1
          %s1594 = smul.addr %s1593, 8
          %s1595 = scalar_lea.vmem %s10, %s1594
        $region104: #{wstal_forward.2} parent=83 // pred_fallthru
          _
        // Predicated region
        $region105: #{wstal_forward.2} parent=83 // pred_check
          %p1596 = pneg %p317
        $region106: #{wstal_forward.2} parent=83 // pred_check_branch
          %1598 = sbr.rel (%p1596) target = $region108
        $region107: #{wstal_forward.2} parent=83 // pred_region
          %s1599 = sand.u32 %s33, 1
          %s1600 = scalar_lea.sflag [#allocation5], %s1599
          %s1601 = sand.u32 %s302, 1
          %s1602 = scalar_lea.vmem [#allocation6], %s1601
          %1604 = dma.done %s1600, 16
        $region108: #{wstal_forward.2} parent=83 // pred_fallthru
          _
        // Predicated region
        $region109: #{wstal_forward.2} parent=83 // pred_check
          %p1605 = pneg %p343
        $region110: #{wstal_forward.2} parent=83 // pred_check_branch
          %1607 = sbr.rel (%p1605) target = $region112
        $region111: #{wstal_forward.2} parent=83 // pred_region
          %p1608 = scmp.lt.s32.totalorder %s33, 1
          %s1609 = scalar_select %p1608, %s33, 1
          %s1610 = smul.addr %s1609, 8
          %s1611 = scalar_lea.vmem %s12, %s1610
        $region112: #{wstal_forward.2} parent=83 // pred_fallthru
          _
        // Predicated region
        $region113: #{wstal_forward.2} parent=83 // pred_check
          %p1612 = pneg %p369
        $region114: #{wstal_forward.2} parent=83 // pred_check_branch
          %1614 = sbr.rel (%p1612) target = $region116
        $region115: #{wstal_forward.2} parent=83 // pred_region
          %p1615 = scmp.lt.s32.totalorder %s33, 1
          %s1616 = scalar_select %p1615, %s33, 1
          %s1617 = smul.addr %s1616, 8
          %s1618 = scalar_lea.vmem %s13, %s1617
        $region116: #{wstal_forward.2} parent=83 // pred_fallthru
          _
        // Predicated region
        $region117: #{wstal_forward.2} parent=83 // pred_check
          %p1619 = pneg %p395
        $region118: #{wstal_forward.2} parent=83 // pred_check_branch
          %1621 = sbr.rel (%p1619) target = $region120
        $region119: #{wstal_forward.2} parent=83 // pred_region
          %p1622 = scmp.lt.s32.totalorder %s33, 1
          %s1623 = scalar_select %p1622, %s33, 1
          %s1624 = smul.addr %s1623, 8
          %s1625 = scalar_lea.vmem %s14, %s1624
        $region120: #{wstal_forward.2} parent=83 // pred_fallthru
          _
      $region84: #{wstal_forward.2} parent=5 // pred_fallthru
        _
    $region6: #{wstal_forward.2} parent=1 // loop_footer
      %s31 = sadd.s32 1, %s27
    $region7: #{wstal_forward.2} parent=1 // loop_footer_branch
      %26 = sbr.rel target = $region3
    $region8: #{wstal_forward.2} parent=1 // loop_exit
      _
    %1626 = vsyncpa [#allocation3], 1
    %s1627 = scalar_lea.sflag [#allocation3], 1
    %1628 = vsyncpa %s1627, 1
    %1629 = vsyncpa [#allocation5], 1
    %s1630 = scalar_lea.sflag [#allocation5], 1
    %1631 = vsyncpa %s1630, 1

</llo_original>
